<compile_context>
chip_gen: v5e
topology: v5e:2x2
jax: 0.10.0
libtpu: 0.0.40
codegen_flags: <defaults>
</compile_context>

<pallas_src>
import functools

import jax
import jax.numpy as jnp
from jax.experimental import pallas as pl
from jax.experimental.pallas import tpu as pltpu

IMAGE_DIM = 784
HIDDEN_DIM = 128


def _leaky_relu(x, slope=0.2):
    return jnp.where(x > 0, x, slope * x)


def _disc_kernel(x_ref,
                 w1_ref, b1_ref,
                 w2_ref, b2_ref,
                 w3_ref, b3_ref,
                 w4t_ref, b4_ref,
                 o_ref):
    """Fused 4-layer MLP for one (batch_tile, 784) tile; weights stay in VMEM."""
    # Cast to bf16 in-kernel (on the VPU) right before the MXU; avoids a
    # separate host-side cast pass over x.
    x = x_ref[...].astype(jnp.bfloat16)

    h = jnp.dot(x, w1_ref[...], preferred_element_type=jnp.float32) + b1_ref[...]
    h = _leaky_relu(h)

    h = jnp.dot(h.astype(jnp.bfloat16), w2_ref[...],
                preferred_element_type=jnp.float32) + b2_ref[...]
    h = _leaky_relu(h)

    h = jnp.dot(h.astype(jnp.bfloat16), w3_ref[...],
                preferred_element_type=jnp.float32) + b3_ref[...]
    h = _leaky_relu(h)

    # Final 128 -> 1 projection on the VPU (mul) + XLU (lane reduce) instead of
    # an MXU pass that would use only 1 of 128/256 output columns.
    w4_row = w4t_ref[...].astype(jnp.float32)                  # (1, 128)
    out = jnp.sum(h * w4_row, axis=-1, keepdims=True) + b4_ref[...]
    o_ref[...] = out.astype(o_ref.dtype)


def _pick_batch_tile(B):
    """Largest tile (<=1024, mult. of 8) that still gives >=2 grid steps."""
    for bt in (1024, 512, 256, 128, 64, 32, 16, 8):
        if B >= 2 * bt:
            return bt
    return 8


@functools.partial(jax.jit, static_argnames=("batch_tile",))
def _forward(x, params, batch_tile):
    (w1, b1), (w2, b2), (w3, b3), (w4, b4) = params
    B, D = x.shape
    assert D == w1.shape[0]

    w1b = w1.astype(jnp.bfloat16)
    w2b = w2.astype(jnp.bfloat16)
    w3b = w3.astype(jnp.bfloat16)
    w4t = w4.astype(jnp.bfloat16).reshape(1, -1)  # (1, 128) row for VPU epilogue

    num_tiles = pl.cdiv(B, batch_tile)            # ragged edge block is masked
    grid = (num_tiles,)

    def resident_spec(shape):
        # Weights/biases are grid-invariant (constant index map); default
        # double buffering is fine (~1 MB of a 64-128 MiB budget).
        return pl.BlockSpec(shape, lambda i: (0, 0))

    in_specs = [
        # (batch_tile, 784): 784 == full array dim, so the (8,128) rule is met.
        pl.BlockSpec((batch_tile, D), lambda i: (i, 0)),
        resident_spec(w1b.shape), resident_spec(b1.shape),
        resident_spec(w2b.shape), resident_spec(b2.shape),
        resident_spec(w3b.shape), resident_spec(b3.shape),
        resident_spec(w4t.shape), resident_spec(b4.shape),
    ]
    out_specs = pl.BlockSpec((batch_tile, 1), lambda i: (i, 0))

    d1, d2, d3 = w1.shape[1], w2.shape[1], w3.shape[1]
    flops = 2 * B * (D * d1 + d1 * d2 + d2 * d3 + d3)
    bytes_accessed = (
        B * D * 4                                           # x (f32 in)
        + (D * d1 + d1 * d2 + d2 * d3 + d3) * 2             # bf16 weights
        + (d1 + d2 + d3 + 1) * 4                            # f32 biases
        + B * 4                                             # f32 out
    )

    out = pl.pallas_call(
        _disc_kernel,
        out_shape=jax.ShapeDtypeStruct((B, 1), jnp.float32),
        grid_spec=pltpu.PrefetchScalarGridSpec(
            num_scalar_prefetch=0,
            grid=grid,
            in_specs=in_specs,
            out_specs=out_specs,
        ),
        compiler_params=pltpu.CompilerParams(
            # Batch tiles are independent -> shard the grid across TensorCores.
            dimension_semantics=("parallel",),
            # ~15 MB live at batch_tile=1024 (x tile 3.2 MB double-buffered,
            # bf16 weights ~1.1 MB, f32 intermediates); 32 MiB gives headroom
            # on v5e/v6e (128 MiB) and v7x (64 MiB).
            vmem_limit_bytes=32 * 1024 * 1024,
        ),
        cost_estimate=pl.CostEstimate(
            flops=flops, bytes_accessed=bytes_accessed, transcendentals=0),
    )(x, w1b, b1, w2b, b2, w3b, b3, w4t, b4)
    return out


def discriminator_forward(x, params, batch_tile=None):
    """x: (B, IMAGE_DIM) float32 -> (B, 1) float32."""
    if batch_tile is None:
        batch_tile = _pick_batch_tile(x.shape[0])
    return _forward(x, params, batch_tile)


def init_params(key, image_dim=IMAGE_DIM, hidden_dim=HIDDEN_DIM):
    """PyTorch-Linear-style U(-1/sqrt(fan_in), +) init; weights bf16, biases f32."""
    dims = [image_dim, hidden_dim * 4, hidden_dim * 2, hidden_dim, 1]
    params = []
    for i in range(4):
        key, kw, kb = jax.random.split(key, 3)
        fan_in, fan_out = dims[i], dims[i + 1]
        bound = 1.0 / (fan_in ** 0.5)
        # Stored as (in, out): transpose of PyTorch's (out, in) weight.
        w = jax.random.uniform(kw, (fan_in, fan_out), jnp.float32, -bound, bound)
        b = jax.random.uniform(kb, (1, fan_out), jnp.float32, -bound, bound)
        params.append((w.astype(jnp.bfloat16), b))
    return params


def reference_forward(x, params):
    """Pure-JAX reference mirroring the kernel math (bf16 operands, f32 accum)."""
    (w1, b1), (w2, b2), (w3, b3), (w4, b4) = params
    h = x.astype(jnp.bfloat16)
    h = _leaky_relu(jnp.dot(h, w1, preferred_element_type=jnp.float32) + b1)
    h = _leaky_relu(jnp.dot(h.astype(jnp.bfloat16), w2,
                            preferred_element_type=jnp.float32) + b2)
    h = _leaky_relu(jnp.dot(h.astype(jnp.bfloat16), w3,
                            preferred_element_type=jnp.float32) + b3)
    w4_row = w4.astype(jnp.float32).reshape(1, -1)
    return jnp.sum(h * w4_row, axis=-1, keepdims=True) + b4


if __name__ == "__main__":
    key = jax.random.PRNGKey(0)
    key, kx = jax.random.split(key)

    params = init_params(key)

    # B=512 -> batch_tile=256, grid of 2 tiles (both v7x TensorCores get work).
    B = 512
    x = jax.random.normal(kx, (B, IMAGE_DIM), jnp.float32)

    out = jax.block_until_ready(discriminator_forward(x, params))
    ref = reference_forward(x, params)
    assert out.shape == (B, 1), out.shape
    assert jnp.allclose(out, ref, atol=5e-3, rtol=5e-3), (
        f"max err {jnp.max(jnp.abs(out - ref))}")

    # Ragged batch (not a multiple of batch_tile) exercises the masked edge
    # block path (no host-side padding anymore).
    xr = x[:100]
    out_r = jax.block_until_ready(discriminator_forward(xr, params))
    ref_r = reference_forward(xr, params)
    assert out_r.shape == (100, 1), out_r.shape
    assert jnp.allclose(out_r, ref_r, atol=5e-3, rtol=5e-3), (
        f"max err {jnp.max(jnp.abs(out_r - ref_r))}")

    print("KERNEL_OK")
</pallas_src>

<mosaic_0001>
module attributes {stable_mosaic.version = 11 : i64} {
  func.func @_disc_kernel(%arg0: i32, %arg1: memref<256x784xf32, #tpu.memory_space<vmem>>, %arg2: memref<784x512xbf16, #tpu.memory_space<vmem>>, %arg3: memref<1x512xf32, #tpu.memory_space<vmem>>, %arg4: memref<512x256xbf16, #tpu.memory_space<vmem>>, %arg5: memref<1x256xf32, #tpu.memory_space<vmem>>, %arg6: memref<256x128xbf16, #tpu.memory_space<vmem>>, %arg7: memref<1x128xf32, #tpu.memory_space<vmem>>, %arg8: memref<1x128xbf16, #tpu.memory_space<vmem>>, %arg9: memref<1x1xf32, #tpu.memory_space<vmem>>, %arg10: memref<256x1xf32, #tpu.memory_space<vmem>>) attributes {dimension_semantics = [#tpu.dimension_semantics<parallel>], iteration_bounds = array<i64: 2>, scalar_prefetch = 0 : i64, scratch_operands = 0 : i64, tpu.core_type = #tpu.core_type<tc>, window_params = [{transform_indices = @transform_0, window_bounds = array<i64: 256, 784>}, {pipeline_mode = #tpu.pipeline_mode<synchronous>, transform_indices = @transform_1, window_bounds = array<i64: 784, 512>}, {pipeline_mode = #tpu.pipeline_mode<synchronous>, transform_indices = @transform_2, window_bounds = array<i64: 1, 512>}, {pipeline_mode = #tpu.pipeline_mode<synchronous>, transform_indices = @transform_3, window_bounds = array<i64: 512, 256>}, {pipeline_mode = #tpu.pipeline_mode<synchronous>, transform_indices = @transform_4, window_bounds = array<i64: 1, 256>}, {pipeline_mode = #tpu.pipeline_mode<synchronous>, transform_indices = @transform_5, window_bounds = array<i64: 256, 128>}, {pipeline_mode = #tpu.pipeline_mode<synchronous>, transform_indices = @transform_6, window_bounds = array<i64: 1, 128>}, {pipeline_mode = #tpu.pipeline_mode<synchronous>, transform_indices = @transform_7, window_bounds = array<i64: 1, 128>}, {pipeline_mode = #tpu.pipeline_mode<synchronous>, transform_indices = @transform_8, window_bounds = array<i64: 1, 1>}, {transform_indices = @transform_9, window_bounds = array<i64: 256, 1>}]} {
    %c0 = arith.constant 0 : index
    %c0_0 = arith.constant 0 : index
    %0 = vector.load %arg1[%c0, %c0_0] : memref<256x784xf32, #tpu.memory_space<vmem>>, vector<256x784xf32>
    %1 = arith.truncf %0 : vector<256x784xf32> to vector<256x784xbf16>
    %c0_1 = arith.constant 0 : index
    %c0_2 = arith.constant 0 : index
    %2 = vector.load %arg2[%c0_1, %c0_2] : memref<784x512xbf16, #tpu.memory_space<vmem>>, vector<784x512xbf16>
    %cst = arith.constant dense<0.000000e+00> : vector<256x512xf32>
    %3 = tpu.matmul %1, %2, %cst {dimension_numbers = #tpu.dot_dimension_numbers<[1], [0], [0], [1], [0, 0, 1, 1], [], []>} : vector<256x784xbf16>, vector<784x512xbf16>, vector<256x512xf32> -> vector<256x512xf32>
    %c0_3 = arith.constant 0 : index
    %c0_4 = arith.constant 0 : index
    %4 = vector.load %arg3[%c0_3, %c0_4] : memref<1x512xf32, #tpu.memory_space<vmem>>, vector<1x512xf32>
    %5 = vector.broadcast %4 : vector<1x512xf32> to vector<256x512xf32>
    %6 = arith.addf %3, %5 : vector<256x512xf32>
    %cst_5 = arith.constant 0.000000e+00 : f32
    %7 = vector.broadcast %cst_5 : f32 to vector<256x512xf32>
    %8 = arith.cmpf ogt, %6, %7 : vector<256x512xf32>
    %cst_6 = arith.constant 2.000000e-01 : f32
    %9 = vector.broadcast %cst_6 : f32 to vector<256x512xf32>
    %10 = arith.mulf %9, %6 : vector<256x512xf32>
    %11 = arith.select %8, %6, %10 : vector<256x512xi1>, vector<256x512xf32>
    %12 = arith.truncf %11 : vector<256x512xf32> to vector<256x512xbf16>
    %c0_7 = arith.constant 0 : index
    %c0_8 = arith.constant 0 : index
    %13 = vector.load %arg4[%c0_7, %c0_8] : memref<512x256xbf16, #tpu.memory_space<vmem>>, vector<512x256xbf16>
    %cst_9 = arith.constant dense<0.000000e+00> : vector<256x256xf32>
    %14 = tpu.matmul %12, %13, %cst_9 {dimension_numbers = #tpu.dot_dimension_numbers<[1], [0], [0], [1], [0, 0, 1, 1], [], []>} : vector<256x512xbf16>, vector<512x256xbf16>, vector<256x256xf32> -> vector<256x256xf32>
    %c0_10 = arith.constant 0 : index
    %c0_11 = arith.constant 0 : index
    %15 = vector.load %arg5[%c0_10, %c0_11] : memref<1x256xf32, #tpu.memory_space<vmem>>, vector<1x256xf32>
    %16 = vector.broadcast %15 : vector<1x256xf32> to vector<256x256xf32>
    %17 = arith.addf %14, %16 : vector<256x256xf32>
    %cst_12 = arith.constant 0.000000e+00 : f32
    %18 = vector.broadcast %cst_12 : f32 to vector<256x256xf32>
    %19 = arith.cmpf ogt, %17, %18 : vector<256x256xf32>
    %cst_13 = arith.constant 2.000000e-01 : f32
    %20 = vector.broadcast %cst_13 : f32 to vector<256x256xf32>
    %21 = arith.mulf %20, %17 : vector<256x256xf32>
    %22 = arith.select %19, %17, %21 : vector<256x256xi1>, vector<256x256xf32>
    %23 = arith.truncf %22 : vector<256x256xf32> to vector<256x256xbf16>
    %c0_14 = arith.constant 0 : index
    %c0_15 = arith.constant 0 : index
    %24 = vector.load %arg6[%c0_14, %c0_15] : memref<256x128xbf16, #tpu.memory_space<vmem>>, vector<256x128xbf16>
    %cst_16 = arith.constant dense<0.000000e+00> : vector<256x128xf32>
    %25 = tpu.matmul %23, %24, %cst_16 {dimension_numbers = #tpu.dot_dimension_numbers<[1], [0], [0], [1], [0, 0, 1, 1], [], []>} : vector<256x256xbf16>, vector<256x128xbf16>, vector<256x128xf32> -> vector<256x128xf32>
    %c0_17 = arith.constant 0 : index
    %c0_18 = arith.constant 0 : index
    %26 = vector.load %arg7[%c0_17, %c0_18] : memref<1x128xf32, #tpu.memory_space<vmem>>, vector<1x128xf32>
    %27 = vector.broadcast %26 : vector<1x128xf32> to vector<256x128xf32>
    %28 = arith.addf %25, %27 : vector<256x128xf32>
    %cst_19 = arith.constant 0.000000e+00 : f32
    %29 = vector.broadcast %cst_19 : f32 to vector<256x128xf32>
    %30 = arith.cmpf ogt, %28, %29 : vector<256x128xf32>
    %cst_20 = arith.constant 2.000000e-01 : f32
    %31 = vector.broadcast %cst_20 : f32 to vector<256x128xf32>
    %32 = arith.mulf %31, %28 : vector<256x128xf32>
    %33 = arith.select %30, %28, %32 : vector<256x128xi1>, vector<256x128xf32>
    %c0_21 = arith.constant 0 : index
    %c0_22 = arith.constant 0 : index
    %34 = vector.load %arg8[%c0_21, %c0_22] : memref<1x128xbf16, #tpu.memory_space<vmem>>, vector<1x128xbf16>
    %35 = arith.extf %34 : vector<1x128xbf16> to vector<1x128xf32>
    %36 = vector.broadcast %35 : vector<1x128xf32> to vector<256x128xf32>
    %37 = arith.mulf %33, %36 : vector<256x128xf32>
    %cst_23 = arith.constant dense<0.000000e+00> : vector<256xf32>
    %38 = vector.multi_reduction <add>, %37, %cst_23 [1] : vector<256x128xf32> to vector<256xf32>
    %39 = vector.shape_cast %38 : vector<256xf32> to vector<256x1xf32>
    %c0_24 = arith.constant 0 : index
    %c0_25 = arith.constant 0 : index
    %40 = vector.load %arg9[%c0_24, %c0_25] : memref<1x1xf32, #tpu.memory_space<vmem>>, vector<1x1xf32>
    %41 = vector.broadcast %40 : vector<1x1xf32> to vector<256x1xf32>
    %42 = arith.addf %39, %41 : vector<256x1xf32>
    %c0_26 = arith.constant 0 : index
    %c0_27 = arith.constant 0 : index
    %43 = vector.load %arg10[%c0_26, %c0_27] : memref<256x1xf32, #tpu.memory_space<vmem>>, vector<256x1xf32>
    tpu.vector_store %arg10[%c0_26, %c0_27], %42 {strides = array<i32>} : memref<256x1xf32, #tpu.memory_space<vmem>>, vector<256x1xf32>,
    return
  }
  func.func @transform_0(%arg0: i32) -> (i32, i32) {
    %c0_i32 = arith.constant 0 : i32
    %c0_i32_0 = arith.constant 0 : i32
    return %arg0, %c0_i32 : i32, i32
  }
  func.func @transform_1(%arg0: i32) -> (i32, i32) {
    %c0_i32 = arith.constant 0 : i32
    %c0_i32_0 = arith.constant 0 : i32
    %c0_i32_1 = arith.constant 0 : i32
    return %c0_i32, %c0_i32_0 : i32, i32
  }
  func.func @transform_2(%arg0: i32) -> (i32, i32) {
    %c0_i32 = arith.constant 0 : i32
    %c0_i32_0 = arith.constant 0 : i32
    %c0_i32_1 = arith.constant 0 : i32
    return %c0_i32, %c0_i32_0 : i32, i32
  }
  func.func @transform_3(%arg0: i32) -> (i32, i32) {
    %c0_i32 = arith.constant 0 : i32
    %c0_i32_0 = arith.constant 0 : i32
    %c0_i32_1 = arith.constant 0 : i32
    return %c0_i32, %c0_i32_0 : i32, i32
  }
  func.func @transform_4(%arg0: i32) -> (i32, i32) {
    %c0_i32 = arith.constant 0 : i32
    %c0_i32_0 = arith.constant 0 : i32
    %c0_i32_1 = arith.constant 0 : i32
    return %c0_i32, %c0_i32_0 : i32, i32
  }
  func.func @transform_5(%arg0: i32) -> (i32, i32) {
    %c0_i32 = arith.constant 0 : i32
    %c0_i32_0 = arith.constant 0 : i32
    %c0_i32_1 = arith.constant 0 : i32
    return %c0_i32, %c0_i32_0 : i32, i32
  }
  func.func @transform_6(%arg0: i32) -> (i32, i32) {
    %c0_i32 = arith.constant 0 : i32
    %c0_i32_0 = arith.constant 0 : i32
    %c0_i32_1 = arith.constant 0 : i32
    return %c0_i32, %c0_i32_0 : i32, i32
  }
  func.func @transform_7(%arg0: i32) -> (i32, i32) {
    %c0_i32 = arith.constant 0 : i32
    %c0_i32_0 = arith.constant 0 : i32
    %c0_i32_1 = arith.constant 0 : i32
    return %c0_i32, %c0_i32_0 : i32, i32
  }
  func.func @transform_8(%arg0: i32) -> (i32, i32) {
    %c0_i32 = arith.constant 0 : i32
    %c0_i32_0 = arith.constant 0 : i32
    %c0_i32_1 = arith.constant 0 : i32
    return %c0_i32, %c0_i32_0 : i32, i32
  }
  func.func @transform_9(%arg0: i32) -> (i32, i32) {
    %c0_i32 = arith.constant 0 : i32
    %c0_i32_0 = arith.constant 0 : i32
    return %arg0, %c0_i32 : i32, i32
  }
}

</mosaic_0001>

<llo_original>
// kernel: _forward.1
$region0: #{_forward.1}
  #allocation0 [shape = 'u32[]', space=smem, size = 0x4, offset = 0x4, fixed_abs, tag = 'smem constant byte address 0x4 - core index']
  #allocation1 [shape = 'u32[72,128]{1,0:T(1,128)}', space=vmem, size = 0x9000, scoped, tag = 'internal scratch']
  #allocation2 [shape = 'f32[1,1]{1,0:T(1,128)S(1)}', space=vmem, size = 0x200, scoped, tag = 'scoped memory for _forward.1']
  %s0 = inlined_call_operand.vmem [shape: f32[512,784], index: 0, kind: input, shape index: {}]
  %s1 = inlined_call_operand.vmem [shape: bf16[784,512], index: 1, kind: input, shape index: {}]
  %s2 = inlined_call_operand.vmem [shape: f32[1,512], index: 2, kind: input, shape index: {}]
  %s3 = inlined_call_operand.vmem [shape: bf16[512,256], index: 3, kind: input, shape index: {}]
  %s4 = inlined_call_operand.vmem [shape: f32[1,256], index: 4, kind: input, shape index: {}]
  %s5 = inlined_call_operand.vmem [shape: bf16[256,128], index: 5, kind: input, shape index: {}]
  %s6 = inlined_call_operand.vmem [shape: f32[1,128], index: 6, kind: input, shape index: {}]
  %s7 = inlined_call_operand.vmem [shape: bf16[1,128], index: 7, kind: input, shape index: {}]
  %s8 = inlined_call_operand.<no memory space> [shape: f32[1,1], index: 8, kind: input, shape index: {}]
  %s9 = inlined_call_operand.vmem [shape: f32[512,1], index: 9, kind: output, shape index: {}]
  %s10 = sld [smem:[#allocation0]]
  $region69: #{_forward.1} parent=0
    _
  %s12 = ssub.s32 1, %s10
  %s13 = scalar_select 0, %s12, %s10
  %v14 = vstv %s8
  %15 = vst [vmem:[#allocation2] sm:$0x1] %v14
  loop: start=0, step=1, limit=4
  $region2: #{_forward.1} parent=0 // loop_pre_header
    _
  $region3: #{_forward.1} parent=0 // loop_header
    %s17 = sphi 0, %s21
    %p18 = scmp.ge.s32.totalorder %s17, 4
    %s27 = sphi 0, %s29
    %s30 = sphi 0, %s27
    %s31 = sphi 0, %s30
    %s47 = sphi 0, %s31
    %s51 = sphi 0, %s51
    %s53 = sphi 0, %s51
    %s54 = sphi 0, %s53
    %s68 = sphi 0, %s54
    %s72 = sphi 0, %s72
    %s74 = sphi 0, %s72
    %s75 = sphi 0, %s74
    %s89 = sphi 0, %s75
    %s93 = sphi 0, %s93
    %s95 = sphi 0, %s93
    %s96 = sphi 0, %s95
    %s110 = sphi 0, %s96
    %s114 = sphi 0, %s114
    %s116 = sphi 0, %s114
    %s117 = sphi 0, %s116
    %s131 = sphi 0, %s117
    %s135 = sphi 0, %s135
    %s137 = sphi 0, %s135
    %s138 = sphi 0, %s137
    %s152 = sphi 0, %s138
    %s156 = sphi 0, %s156
    %s158 = sphi 0, %s156
    %s159 = sphi 0, %s158
    %s173 = sphi 0, %s159
    %s177 = sphi 0, %s177
    %s179 = sphi 0, %s177
    %s180 = sphi 0, %s179
    %s194 = sphi 0, %s180
    %s198 = sphi 0, %s198
    %s200 = sphi 0, %s198
    %s201 = sphi 0, %s200
    %s215 = sphi 0, %s201
    %s221 = sphi 0, %s223
    %s224 = sphi 0, %s221
    %s225 = sphi 0, %s224
    %s241 = sphi 0, %s225
  $region4: #{_forward.1} parent=0 // loop_header_branch
    %20 = sbr.rel (%p18) target = $region8
  $region5: #{_forward.1} parent=0 // loop_body
    %s22 = ssub.s32 %s17, 1
    %s23 = ssub.s32 %s17, 2
    %s24 = sadd.s32 %s17, 1
    %s25 = ssub.s32 %s17, %s24
    %p26 = scmp.eq.s32.totalorder %s25, 0
    %s28 = sadd.s32 %s27, 1
    %s29 = scalar_select %p26, %s27, %s28
    %p32 = pneg %p26
    %p33 = scmp.eq.s32.totalorder %s17, 1
    %p34 = por %p32, %p33
    %p35 = scmp.ne.s32.totalorder %s27, %s30
    %p36 = scmp.eq.s32.totalorder %s17, 0
    %p37 = por %p35, %p36
    %p38 = scmp.ne.s32.totalorder %s27, %s30
    %p39 = scmp.eq.s32.totalorder %s22, 1
    %p40 = por %p38, %p39
    %p41 = scmp.ne.s32.totalorder %s30, %s31
    %p42 = scmp.eq.s32.totalorder %s22, 0
    %p43 = por %p41, %p42
    %p44 = scmp.ne.s32.totalorder %s30, %s31
    %p45 = scmp.eq.s32.totalorder %s23, 1
    %p46 = por %p44, %p45
    %p48 = scmp.ne.s32.totalorder %s31, %s47
    %p49 = scmp.eq.s32.totalorder %s23, 0
    %p50 = por %p48, %p49
    %s52 = sadd.s32 %s51, 1
    %p55 = scmp.eq.s32.totalorder %s17, 1
    %p56 = scmp.ne.s32.totalorder %s51, %s53
    %p57 = scmp.eq.s32.totalorder %s17, 0
    %p58 = por %p56, %p57
    %p59 = scmp.ne.s32.totalorder %s51, %s53
    %p60 = scmp.eq.s32.totalorder %s22, 1
    %p61 = por %p59, %p60
    %p62 = scmp.ne.s32.totalorder %s53, %s54
    %p63 = scmp.eq.s32.totalorder %s22, 0
    %p64 = por %p62, %p63
    %p65 = scmp.ne.s32.totalorder %s53, %s54
    %p66 = scmp.eq.s32.totalorder %s23, 1
    %p67 = por %p65, %p66
    %p69 = scmp.ne.s32.totalorder %s54, %s68
    %p70 = scmp.eq.s32.totalorder %s23, 0
    %p71 = por %p69, %p70
    %s73 = sadd.s32 %s72, 1
    %p76 = scmp.eq.s32.totalorder %s17, 1
    %p77 = scmp.ne.s32.totalorder %s72, %s74
    %p78 = scmp.eq.s32.totalorder %s17, 0
    %p79 = por %p77, %p78
    %p80 = scmp.ne.s32.totalorder %s72, %s74
    %p81 = scmp.eq.s32.totalorder %s22, 1
    %p82 = por %p80, %p81
    %p83 = scmp.ne.s32.totalorder %s74, %s75
    %p84 = scmp.eq.s32.totalorder %s22, 0
    %p85 = por %p83, %p84
    %p86 = scmp.ne.s32.totalorder %s74, %s75
    %p87 = scmp.eq.s32.totalorder %s23, 1
    %p88 = por %p86, %p87
    %p90 = scmp.ne.s32.totalorder %s75, %s89
    %p91 = scmp.eq.s32.totalorder %s23, 0
    %p92 = por %p90, %p91
    %s94 = sadd.s32 %s93, 1
    %p97 = scmp.eq.s32.totalorder %s17, 1
    %p98 = scmp.ne.s32.totalorder %s93, %s95
    %p99 = scmp.eq.s32.totalorder %s17, 0
    %p100 = por %p98, %p99
    %p101 = scmp.ne.s32.totalorder %s93, %s95
    %p102 = scmp.eq.s32.totalorder %s22, 1
    %p103 = por %p101, %p102
    %p104 = scmp.ne.s32.totalorder %s95, %s96
    %p105 = scmp.eq.s32.totalorder %s22, 0
    %p106 = por %p104, %p105
    %p107 = scmp.ne.s32.totalorder %s95, %s96
    %p108 = scmp.eq.s32.totalorder %s23, 1
    %p109 = por %p107, %p108
    %p111 = scmp.ne.s32.totalorder %s96, %s110
    %p112 = scmp.eq.s32.totalorder %s23, 0
    %p113 = por %p111, %p112
    %s115 = sadd.s32 %s114, 1
    %p118 = scmp.eq.s32.totalorder %s17, 1
    %p119 = scmp.ne.s32.totalorder %s114, %s116
    %p120 = scmp.eq.s32.totalorder %s17, 0
    %p121 = por %p119, %p120
    %p122 = scmp.ne.s32.totalorder %s114, %s116
    %p123 = scmp.eq.s32.totalorder %s22, 1
    %p124 = por %p122, %p123
    %p125 = scmp.ne.s32.totalorder %s116, %s117
    %p126 = scmp.eq.s32.totalorder %s22, 0
    %p127 = por %p125, %p126
    %p128 = scmp.ne.s32.totalorder %s116, %s117
    %p129 = scmp.eq.s32.totalorder %s23, 1
    %p130 = por %p128, %p129
    %p132 = scmp.ne.s32.totalorder %s117, %s131
    %p133 = scmp.eq.s32.totalorder %s23, 0
    %p134 = por %p132, %p133
    %s136 = sadd.s32 %s135, 1
    %p139 = scmp.eq.s32.totalorder %s17, 1
    %p140 = scmp.ne.s32.totalorder %s135, %s137
    %p141 = scmp.eq.s32.totalorder %s17, 0
    %p142 = por %p140, %p141
    %p143 = scmp.ne.s32.totalorder %s135, %s137
    %p144 = scmp.eq.s32.totalorder %s22, 1
    %p145 = por %p143, %p144
    %p146 = scmp.ne.s32.totalorder %s137, %s138
    %p147 = scmp.eq.s32.totalorder %s22, 0
    %p148 = por %p146, %p147
    %p149 = scmp.ne.s32.totalorder %s137, %s138
    %p150 = scmp.eq.s32.totalorder %s23, 1
    %p151 = por %p149, %p150
    %p153 = scmp.ne.s32.totalorder %s138, %s152
    %p154 = scmp.eq.s32.totalorder %s23, 0
    %p155 = por %p153, %p154
    %s157 = sadd.s32 %s156, 1
    %p160 = scmp.eq.s32.totalorder %s17, 1
    %p161 = scmp.ne.s32.totalorder %s156, %s158
    %p162 = scmp.eq.s32.totalorder %s17, 0
    %p163 = por %p161, %p162
    %p164 = scmp.ne.s32.totalorder %s156, %s158
    %p165 = scmp.eq.s32.totalorder %s22, 1
    %p166 = por %p164, %p165
    %p167 = scmp.ne.s32.totalorder %s158, %s159
    %p168 = scmp.eq.s32.totalorder %s22, 0
    %p169 = por %p167, %p168
    %p170 = scmp.ne.s32.totalorder %s158, %s159
    %p171 = scmp.eq.s32.totalorder %s23, 1
    %p172 = por %p170, %p171
    %p174 = scmp.ne.s32.totalorder %s159, %s173
    %p175 = scmp.eq.s32.totalorder %s23, 0
    %p176 = por %p174, %p175
    %s178 = sadd.s32 %s177, 1
    %p181 = scmp.eq.s32.totalorder %s17, 1
    %p182 = scmp.ne.s32.totalorder %s177, %s179
    %p183 = scmp.eq.s32.totalorder %s17, 0
    %p184 = por %p182, %p183
    %p185 = scmp.ne.s32.totalorder %s177, %s179
    %p186 = scmp.eq.s32.totalorder %s22, 1
    %p187 = por %p185, %p186
    %p188 = scmp.ne.s32.totalorder %s179, %s180
    %p189 = scmp.eq.s32.totalorder %s22, 0
    %p190 = por %p188, %p189
    %p191 = scmp.ne.s32.totalorder %s179, %s180
    %p192 = scmp.eq.s32.totalorder %s23, 1
    %p193 = por %p191, %p192
    %p195 = scmp.ne.s32.totalorder %s180, %s194
    %p196 = scmp.eq.s32.totalorder %s23, 0
    %p197 = por %p195, %p196
    %s199 = sadd.s32 %s198, 1
    %p202 = scmp.eq.s32.totalorder %s17, 1
    %p203 = scmp.ne.s32.totalorder %s198, %s200
    %p204 = scmp.eq.s32.totalorder %s17, 0
    %p205 = por %p203, %p204
    %p206 = scmp.ne.s32.totalorder %s198, %s200
    %p207 = scmp.eq.s32.totalorder %s22, 1
    %p208 = por %p206, %p207
    %p209 = scmp.ne.s32.totalorder %s200, %s201
    %p210 = scmp.eq.s32.totalorder %s22, 0
    %p211 = por %p209, %p210
    %p212 = scmp.ne.s32.totalorder %s200, %s201
    %p213 = scmp.eq.s32.totalorder %s23, 1
    %p214 = por %p212, %p213
    %p216 = scmp.ne.s32.totalorder %s201, %s215
    %p217 = scmp.eq.s32.totalorder %s23, 0
    %p218 = por %p216, %p217
    %s219 = ssub.s32 %s17, %s24
    %p220 = scmp.eq.s32.totalorder %s219, 0
    %s222 = sadd.s32 %s221, 1
    %s223 = scalar_select %p220, %s221, %s222
    %p226 = pneg %p220
    %p227 = scmp.eq.s32.totalorder %s17, 1
    %p228 = por %p226, %p227
    %p229 = scmp.ne.s32.totalorder %s221, %s224
    %p230 = scmp.eq.s32.totalorder %s17, 0
    %p231 = por %p229, %p230
    %p232 = scmp.ne.s32.totalorder %s221, %s224
    %p233 = scmp.eq.s32.totalorder %s22, 1
    %p234 = por %p232, %p233
    %p235 = scmp.ne.s32.totalorder %s224, %s225
    %p236 = scmp.eq.s32.totalorder %s22, 0
    %p237 = por %p235, %p236
    %p238 = scmp.ne.s32.totalorder %s224, %s225
    %p239 = scmp.eq.s32.totalorder %s23, 1
    %p240 = por %p238, %p239
    %p242 = scmp.ne.s32.totalorder %s225, %s241
    %p243 = scmp.eq.s32.totalorder %s23, 0
    %p244 = por %p242, %p243
    %p245 = scmp.le.s32.totalorder 1, %s17
    %p246 = scmp.lt.s32.totalorder %s17, 3
    %p247 = pnand %p245, %p246
    %p248 = pneg %p247
    // Predicated region
    $region9: #{_forward.1} parent=5 // pred_check
      _
    $region10: #{_forward.1} parent=5 // pred_check_branch
      %250 = sbr.rel (%p247) target = $region12
    $region11: #{_forward.1} parent=5 // pred_region
      %s251 = ssub.s32 %s17, 1
      // Predicated region
      $region13: #{_forward.1} parent=11 // pred_check
        %p252 = pneg %p64
      $region14: #{_forward.1} parent=11 // pred_check_branch
        %254 = sbr.rel (%p252) target = $region16
      $region15: #{_forward.1} parent=11 // pred_region
        _
      $region16: #{_forward.1} parent=11 // pred_fallthru
        _
      // Predicated region
      $region17: #{_forward.1} parent=11 // pred_check
        %p255 = pneg %p85
      $region18: #{_forward.1} parent=11 // pred_check_branch
        %257 = sbr.rel (%p255) target = $region20
      $region19: #{_forward.1} parent=11 // pred_region
        _
      $region20: #{_forward.1} parent=11 // pred_fallthru
        _
      // Predicated region
      $region21: #{_forward.1} parent=11 // pred_check
        %p258 = pneg %p106
      $region22: #{_forward.1} parent=11 // pred_check_branch
        %260 = sbr.rel (%p258) target = $region24
      $region23: #{_forward.1} parent=11 // pred_region
        _
      $region24: #{_forward.1} parent=11 // pred_fallthru
        _
      // Predicated region
      $region25: #{_forward.1} parent=11 // pred_check
        %p261 = pneg %p127
      $region26: #{_forward.1} parent=11 // pred_check_branch
        %263 = sbr.rel (%p261) target = $region28
      $region27: #{_forward.1} parent=11 // pred_region
        _
      $region28: #{_forward.1} parent=11 // pred_fallthru
        _
      // Predicated region
      $region29: #{_forward.1} parent=11 // pred_check
        %p264 = pneg %p148
      $region30: #{_forward.1} parent=11 // pred_check_branch
        %266 = sbr.rel (%p264) target = $region32
      $region31: #{_forward.1} parent=11 // pred_region
        _
      $region32: #{_forward.1} parent=11 // pred_fallthru
        _
      // Predicated region
      $region33: #{_forward.1} parent=11 // pred_check
        %p267 = pneg %p169
      $region34: #{_forward.1} parent=11 // pred_check_branch
        %269 = sbr.rel (%p267) target = $region36
      $region35: #{_forward.1} parent=11 // pred_region
        _
      $region36: #{_forward.1} parent=11 // pred_fallthru
        _
      // Predicated region
      $region37: #{_forward.1} parent=11 // pred_check
        %p270 = pneg %p190
      $region38: #{_forward.1} parent=11 // pred_check_branch
        %272 = sbr.rel (%p270) target = $region40
      $region39: #{_forward.1} parent=11 // pred_region
        _
      $region40: #{_forward.1} parent=11 // pred_fallthru
        _
      // Predicated region
      $region41: #{_forward.1} parent=11 // pred_check
        %p273 = pneg %p211
      $region42: #{_forward.1} parent=11 // pred_check_branch
        %275 = sbr.rel (%p273) target = $region44
      $region43: #{_forward.1} parent=11 // pred_region
        _
      $region44: #{_forward.1} parent=11 // pred_fallthru
        _
    $region12: #{_forward.1} parent=5 // pred_fallthru
      _
    %p276 = scmp.lt.s32.totalorder %s17, 2
    // Predicated region
    $region45: #{_forward.1} parent=5 // pred_check
      %p277 = pneg %p276
    $region46: #{_forward.1} parent=5 // pred_check_branch
      %279 = sbr.rel (%p277) target = $region48
    $region47: #{_forward.1} parent=5 // pred_region
      // Predicated region
      $region49: #{_forward.1} parent=47 // pred_check
        %p280 = pneg %p37
      $region50: #{_forward.1} parent=47 // pred_check_branch
        %282 = sbr.rel (%p280) target = $region52
      $region51: #{_forward.1} parent=47 // pred_region
        %s283 = smul.u32 32, %s17
        %p284 = scmp.lt.s32.totalorder %s283, 63
        %s285 = scalar_select %p284, %s283, 63
        %s286 = smul.addr %s285, 7
        %s287 = smul.addr %s286, 8
        %s288 = scalar_lea.vmem %s0, %s287
        %s289 = smul.u32 32, %s17
      $region52: #{_forward.1} parent=47 // pred_fallthru
        _
    $region48: #{_forward.1} parent=5 // pred_fallthru
      _
    %p290 = scmp.le.s32.totalorder 1, %s17
    %p291 = scmp.lt.s32.totalorder %s17, 3
    %p292 = pnand %p290, %p291
    %p293 = pneg %p292
    // Predicated region
    $region53: #{_forward.1} parent=5 // pred_check
      _
    $region54: #{_forward.1} parent=5 // pred_check_branch
      %295 = sbr.rel (%p292) target = $region56
    $region55: #{_forward.1} parent=5 // pred_region
      %s296 = ssub.s32 %s17, 1
      %s297 = smul.u32 32, %s22
      %p298 = scmp.lt.s32.totalorder %s297, 63
      %s299 = scalar_select %p298, %s297, 63
      %s300 = smul.addr %s299, 7
      %s301 = smul.addr %s300, 8
      %s302 = scalar_lea.vmem %s0, %s301
      %p303 = pneg %p43
      %p304 = pneg %p40
      %p305 = pneg %p64
      %p306 = pneg %p61
      %p307 = pneg %p85
      %p308 = pneg %p82
      %p309 = pneg %p106
      %p310 = pneg %p103
      %p311 = pneg %p127
      %p312 = pneg %p124
      %p313 = pneg %p148
      %p314 = pneg %p145
      %p315 = pneg %p169
      %p316 = pneg %p166
      %p317 = pneg %p190
      %p318 = pneg %p187
      %p319 = pneg %p211
      %p320 = pneg %p208
      %p321 = pneg %p237
      %p322 = pneg %p234
      %s323 = smul.u32 32, %s22
      %p324 = scmp.lt.s32.totalorder %s323, 63
      %s325 = scalar_select %p324, %s323, 63
      %s326 = smul.addr %s325, 8
      %s327 = scalar_lea.vmem %s9, %s326
      %s328 = smul.u32 32, %s22
      %p329 = scmp.lt.s32.totalorder %s328, 63
      %s330 = scalar_select %p329, %s328, 63
      %s331 = smul.addr %s330, 7
      %s332 = smul.addr %s331, 8
      %s333 = scalar_lea.vmem %s0, %s332
      %s334 = smul.u32 32, %s22
      %s335 = smul.u32 32, %s22
      %p336 = scmp.lt.s32.totalorder %s335, 63
      %s337 = scalar_select %p336, %s335, 63
      %s338 = smul.addr %s337, 8
      %s339 = scalar_lea.vmem %s9, %s338
      %s340 = smul.u32 32, %s22
      %v342 = vld [vmem:[%s333] sm:$0xff]
      %v343 = vld [vmem:[%s333 + $0x8] sm:$0xff]
      %v344 = vld [vmem:[%s333 + $0x10] sm:$0xff]
      %v345 = vld [vmem:[%s333 + $0x18] sm:$0xff]
      %v346 = vld [vmem:[%s333 + $0x20] sm:$0xff]
      %v347 = vld [vmem:[%s333 + $0x28] sm:$0xff]
      %v348 = vld [vmem:[%s333 + $0x30] sm:$0xff]
      %v349 = vld [vmem:[%s333 + $0x38] sm:$0xff]
      %v350 = vld [vmem:[%s333 + $0x40] sm:$0xff]
      %v351 = vld [vmem:[%s333 + $0x48] sm:$0xff]
      %v352 = vld [vmem:[%s333 + $0x50] sm:$0xff]
      %v353 = vld [vmem:[%s333 + $0x58] sm:$0xff]
      %v354 = vld [vmem:[%s333 + $0x60] sm:$0xff]
      %v355 = vld [vmem:[%s333 + $0x68] sm:$0xff]
      %v356 = vld [vmem:[%s333 + $0x70] sm:$0xff]
      %v357 = vld [vmem:[%s333 + $0x78] sm:$0xff]
      %v358 = vld [vmem:[%s333 + $0x80] sm:$0xff]
      %v359 = vld [vmem:[%s333 + $0x88] sm:$0xff]
      %v360 = vld [vmem:[%s333 + $0x90] sm:$0xff]
      %v361 = vld [vmem:[%s333 + $0x98] sm:$0xff]
      %v362 = vld [vmem:[%s333 + $0xa0] sm:$0xff]
      %v363 = vld [vmem:[%s333 + $0xa8] sm:$0xff]
      %v364 = vld [vmem:[%s333 + $0xb0] sm:$0xff]
      %v365 = vld [vmem:[%s333 + $0xb8] sm:$0xff]
      %v366 = vld [vmem:[%s333 + $0xc0] sm:$0xff]
      %v367 = vld [vmem:[%s333 + $0xc8] sm:$0xff]
      %v368 = vld [vmem:[%s333 + $0xd0] sm:$0xff]
      %v369 = vld [vmem:[%s333 + $0xd8] sm:$0xff]
      %v370 = vld [vmem:[%s333 + $0xe0] sm:$0xff]
      %v371 = vld [vmem:[%s333 + $0xe8] sm:$0xff]
      %v372 = vld [vmem:[%s333 + $0xf0] sm:$0xff]
      %v373 = vld [vmem:[%s333 + $0xf8] sm:$0xff]
      %v374 = vld [vmem:[%s333 + $0x100] sm:$0xff]
      %v375 = vld [vmem:[%s333 + $0x108] sm:$0xff]
      %v376 = vld [vmem:[%s333 + $0x110] sm:$0xff]
      %v377 = vld [vmem:[%s333 + $0x118] sm:$0xff]
      %v378 = vld [vmem:[%s333 + $0x120] sm:$0xff]
      %v379 = vld [vmem:[%s333 + $0x128] sm:$0xff]
      %v380 = vld [vmem:[%s333 + $0x130] sm:$0xff]
      %v381 = vld [vmem:[%s333 + $0x138] sm:$0xff]
      %v382 = vld [vmem:[%s333 + $0x140] sm:$0xff]
      %v383 = vld [vmem:[%s333 + $0x148] sm:$0xff]
      %v384 = vld [vmem:[%s333 + $0x150] sm:$0xff]
      %v385 = vld [vmem:[%s333 + $0x158] sm:$0xff]
      %v386 = vld [vmem:[%s333 + $0x160] sm:$0xff]
      %v387 = vld [vmem:[%s333 + $0x168] sm:$0xff]
      %v388 = vld [vmem:[%s333 + $0x170] sm:$0xff]
      %v389 = vld [vmem:[%s333 + $0x178] sm:$0xff]
      %v390 = vld [vmem:[%s333 + $0x180] sm:$0xff]
      %v391 = vld [vmem:[%s333 + $0x188] sm:$0xff]
      %v392 = vld [vmem:[%s333 + $0x190] sm:$0xff]
      %v393 = vld [vmem:[%s333 + $0x198] sm:$0xff]
      %v394 = vld [vmem:[%s333 + $0x1a0] sm:$0xff]
      %v395 = vld [vmem:[%s333 + $0x1a8] sm:$0xff]
      %v396 = vld [vmem:[%s333 + $0x1b0] sm:$0xff]
      %v397 = vld [vmem:[%s333 + $0x1b8] sm:$0xff]
      %v398 = vld [vmem:[%s333 + $0x1c0] sm:$0xff]
      %v399 = vld [vmem:[%s333 + $0x1c8] sm:$0xff]
      %v400 = vld [vmem:[%s333 + $0x1d0] sm:$0xff]
      %v401 = vld [vmem:[%s333 + $0x1d8] sm:$0xff]
      %v402 = vld [vmem:[%s333 + $0x1e0] sm:$0xff]
      %v403 = vld [vmem:[%s333 + $0x1e8] sm:$0xff]
      %v404 = vld [vmem:[%s333 + $0x1f0] sm:$0xff]
      %v405 = vld [vmem:[%s333 + $0x1f8] sm:$0xff]
      %v406 = vld [vmem:[%s333 + $0x200] sm:$0xff]
      %v407 = vld [vmem:[%s333 + $0x208] sm:$0xff]
      %v408 = vld [vmem:[%s333 + $0x210] sm:$0xff]
      %v409 = vld [vmem:[%s333 + $0x218] sm:$0xff]
      %v410 = vld [vmem:[%s333 + $0x220] sm:$0xff]
      %v411 = vld [vmem:[%s333 + $0x228] sm:$0xff]
      %v412 = vld [vmem:[%s333 + $0x230] sm:$0xff]
      %v413 = vld [vmem:[%s333 + $0x238] sm:$0xff]
      %v414 = vld [vmem:[%s333 + $0x240] sm:$0xff]
      %v415 = vld [vmem:[%s333 + $0x248] sm:$0xff]
      %v416 = vld [vmem:[%s333 + $0x250] sm:$0xff]
      %v417 = vld [vmem:[%s333 + $0x258] sm:$0xff]
      %v418 = vld [vmem:[%s333 + $0x260] sm:$0xff]
      %v419 = vld [vmem:[%s333 + $0x268] sm:$0xff]
      %v420 = vld [vmem:[%s333 + $0x270] sm:$0xff]
      %v421 = vld [vmem:[%s333 + $0x278] sm:$0xff]
      %v422 = vld [vmem:[%s333 + $0x280] sm:$0xff]
      %v423 = vld [vmem:[%s333 + $0x288] sm:$0xff]
      %v424 = vld [vmem:[%s333 + $0x290] sm:$0xff]
      %v425 = vld [vmem:[%s333 + $0x298] sm:$0xff]
      %v426 = vld [vmem:[%s333 + $0x2a0] sm:$0xff]
      %v427 = vld [vmem:[%s333 + $0x2a8] sm:$0xff]
      %v428 = vld [vmem:[%s333 + $0x2b0] sm:$0xff]
      %v429 = vld [vmem:[%s333 + $0x2b8] sm:$0xff]
      %v430 = vld [vmem:[%s333 + $0x2c0] sm:$0xff]
      %v431 = vld [vmem:[%s333 + $0x2c8] sm:$0xff]
      %v432 = vld [vmem:[%s333 + $0x2d0] sm:$0xff]
      %v433 = vld [vmem:[%s333 + $0x2d8] sm:$0xff]
      %v434 = vld [vmem:[%s333 + $0x2e0] sm:$0xff]
      %v435 = vld [vmem:[%s333 + $0x2e8] sm:$0xff]
      %v436 = vld [vmem:[%s333 + $0x2f0] sm:$0xff]
      %v437 = vld [vmem:[%s333 + $0x2f8] sm:$0xff]
      %v438 = vld [vmem:[%s333 + $0x300] sm:$0xff]
      %v439 = vld [vmem:[%s333 + $0x308] sm:$0xff]
      %v440 = vld [vmem:[%s333 + $0x310] sm:$0xff]
      %v441 = vld [vmem:[%s333 + $0x318] sm:$0xff]
      %v442 = vld [vmem:[%s333 + $0x320] sm:$0xff]
      %v443 = vld [vmem:[%s333 + $0x328] sm:$0xff]
      %v444 = vld [vmem:[%s333 + $0x330] sm:$0xff]
      %v445 = vld [vmem:[%s333 + $0x338] sm:$0xff]
      %v446 = vld [vmem:[%s333 + $0x340] sm:$0xff]
      %v447 = vld [vmem:[%s333 + $0x348] sm:$0xff]
      %v448 = vld [vmem:[%s333 + $0x350] sm:$0xff]
      %v449 = vld [vmem:[%s333 + $0x358] sm:$0xff]
      %v450 = vld [vmem:[%s333 + $0x360] sm:$0xff]
      %v451 = vld [vmem:[%s333 + $0x368] sm:$0xff]
      %v452 = vld [vmem:[%s333 + $0x370] sm:$0xff]
      %v453 = vld [vmem:[%s333 + $0x378] sm:$0xff]
      %v454 = vld [vmem:[%s333 + $0x380] sm:$0xff]
      %v455 = vld [vmem:[%s333 + $0x388] sm:$0xff]
      %v456 = vld [vmem:[%s333 + $0x390] sm:$0xff]
      %v457 = vld [vmem:[%s333 + $0x398] sm:$0xff]
      %v458 = vld [vmem:[%s333 + $0x3a0] sm:$0xff]
      %v459 = vld [vmem:[%s333 + $0x3a8] sm:$0xff]
      %v460 = vld [vmem:[%s333 + $0x3b0] sm:$0xff]
      %v461 = vld [vmem:[%s333 + $0x3b8] sm:$0xff]
      %v462 = vld [vmem:[%s333 + $0x3c0] sm:$0xff]
      %v463 = vld [vmem:[%s333 + $0x3c8] sm:$0xff]
      %v464 = vld [vmem:[%s333 + $0x3d0] sm:$0xff]
      %v465 = vld [vmem:[%s333 + $0x3d8] sm:$0xff]
      %v466 = vld [vmem:[%s333 + $0x3e0] sm:$0xff]
      %v467 = vld [vmem:[%s333 + $0x3e8] sm:$0xff]
      %v468 = vld [vmem:[%s333 + $0x3f0] sm:$0xff]
      %v469 = vld [vmem:[%s333 + $0x3f8] sm:$0xff]
      %v470 = vld [vmem:[%s333 + $0x400] sm:$0xff]
      %v471 = vld [vmem:[%s333 + $0x408] sm:$0xff]
      %v472 = vld [vmem:[%s333 + $0x410] sm:$0xff]
      %v473 = vld [vmem:[%s333 + $0x418] sm:$0xff]
      %v474 = vld [vmem:[%s333 + $0x420] sm:$0xff]
      %v475 = vld [vmem:[%s333 + $0x428] sm:$0xff]
      %v476 = vld [vmem:[%s333 + $0x430] sm:$0xff]
      %v477 = vld [vmem:[%s333 + $0x438] sm:$0xff]
      %v478 = vld [vmem:[%s333 + $0x440] sm:$0xff]
      %v479 = vld [vmem:[%s333 + $0x448] sm:$0xff]
      %v480 = vld [vmem:[%s333 + $0x450] sm:$0xff]
      %v481 = vld [vmem:[%s333 + $0x458] sm:$0xff]
      %v482 = vld [vmem:[%s333 + $0x460] sm:$0xff]
      %v483 = vld [vmem:[%s333 + $0x468] sm:$0xff]
      %v484 = vld [vmem:[%s333 + $0x470] sm:$0xff]
      %v485 = vld [vmem:[%s333 + $0x478] sm:$0xff]
      %v486 = vld [vmem:[%s333 + $0x480] sm:$0xff]
      %v487 = vld [vmem:[%s333 + $0x488] sm:$0xff]
      %v488 = vld [vmem:[%s333 + $0x490] sm:$0xff]
      %v489 = vld [vmem:[%s333 + $0x498] sm:$0xff]
      %v490 = vld [vmem:[%s333 + $0x4a0] sm:$0xff]
      %v491 = vld [vmem:[%s333 + $0x4a8] sm:$0xff]
      %v492 = vld [vmem:[%s333 + $0x4b0] sm:$0xff]
      %v493 = vld [vmem:[%s333 + $0x4b8] sm:$0xff]
      %v494 = vld [vmem:[%s333 + $0x4c0] sm:$0xff]
      %v495 = vld [vmem:[%s333 + $0x4c8] sm:$0xff]
      %v496 = vld [vmem:[%s333 + $0x4d0] sm:$0xff]
      %v497 = vld [vmem:[%s333 + $0x4d8] sm:$0xff]
      %v498 = vld [vmem:[%s333 + $0x4e0] sm:$0xff]
      %v499 = vld [vmem:[%s333 + $0x4e8] sm:$0xff]
      %v500 = vld [vmem:[%s333 + $0x4f0] sm:$0xff]
      %v501 = vld [vmem:[%s333 + $0x4f8] sm:$0xff]
      %v502 = vld [vmem:[%s333 + $0x500] sm:$0xff]
      %v503 = vld [vmem:[%s333 + $0x508] sm:$0xff]
      %v504 = vld [vmem:[%s333 + $0x510] sm:$0xff]
      %v505 = vld [vmem:[%s333 + $0x518] sm:$0xff]
      %v506 = vld [vmem:[%s333 + $0x520] sm:$0xff]
      %v507 = vld [vmem:[%s333 + $0x528] sm:$0xff]
      %v508 = vld [vmem:[%s333 + $0x530] sm:$0xff]
      %v509 = vld [vmem:[%s333 + $0x538] sm:$0xff]
      %v510 = vld [vmem:[%s333 + $0x540] sm:$0xff]
      %v511 = vld [vmem:[%s333 + $0x548] sm:$0xff]
      %v512 = vld [vmem:[%s333 + $0x550] sm:$0xff]
      %v513 = vld [vmem:[%s333 + $0x558] sm:$0xff]
      %v514 = vld [vmem:[%s333 + $0x560] sm:$0xff]
      %v515 = vld [vmem:[%s333 + $0x568] sm:$0xff]
      %v516 = vld [vmem:[%s333 + $0x570] sm:$0xff]
      %v517 = vld [vmem:[%s333 + $0x578] sm:$0xff]
      %v518 = vld [vmem:[%s333 + $0x580] sm:$0xff]
      %v519 = vld [vmem:[%s333 + $0x588] sm:$0xff]
      %v520 = vld [vmem:[%s333 + $0x590] sm:$0xff]
      %v521 = vld [vmem:[%s333 + $0x598] sm:$0xff]
      %v522 = vld [vmem:[%s333 + $0x5a0] sm:$0xff]
      %v523 = vld [vmem:[%s333 + $0x5a8] sm:$0xff]
      %v524 = vld [vmem:[%s333 + $0x5b0] sm:$0xff]
      %v525 = vld [vmem:[%s333 + $0x5b8] sm:$0xff]
      %v526 = vld [vmem:[%s333 + $0x5c0] sm:$0xff]
      %v527 = vld [vmem:[%s333 + $0x5c8] sm:$0xff]
      %v528 = vld [vmem:[%s333 + $0x5d0] sm:$0xff]
      %v529 = vld [vmem:[%s333 + $0x5d8] sm:$0xff]
      %v530 = vld [vmem:[%s333 + $0x5e0] sm:$0xff]
      %v531 = vld [vmem:[%s333 + $0x5e8] sm:$0xff]
      %v532 = vld [vmem:[%s333 + $0x5f0] sm:$0xff]
      %v533 = vld [vmem:[%s333 + $0x5f8] sm:$0xff]
      %v534 = vld [vmem:[%s333 + $0x600] sm:$0xff]
      %v535 = vld [vmem:[%s333 + $0x608] sm:$0xff]
      %v536 = vld [vmem:[%s333 + $0x610] sm:$0xff]
      %v537 = vld [vmem:[%s333 + $0x618] sm:$0xff]
      %v538 = vld [vmem:[%s333 + $0x620] sm:$0xff]
      %v539 = vld [vmem:[%s333 + $0x628] sm:$0xff]
      %v540 = vld [vmem:[%s333 + $0x630] sm:$0xff]
      %v541 = vld [vmem:[%s333 + $0x638] sm:$0xff]
      %v542 = vld [vmem:[%s333 + $0x640] sm:$0xff]
      %v543 = vld [vmem:[%s333 + $0x648] sm:$0xff]
      %v544 = vld [vmem:[%s333 + $0x650] sm:$0xff]
      %v545 = vld [vmem:[%s333 + $0x658] sm:$0xff]
      %v546 = vld [vmem:[%s333 + $0x660] sm:$0xff]
      %v547 = vld [vmem:[%s333 + $0x668] sm:$0xff]
      %v548 = vld [vmem:[%s333 + $0x670] sm:$0xff]
      %v549 = vld [vmem:[%s333 + $0x678] sm:$0xff]
      %v550 = vld [vmem:[%s333 + $0x680] sm:$0xff]
      %v551 = vld [vmem:[%s333 + $0x688] sm:$0xff]
      %v552 = vld [vmem:[%s333 + $0x690] sm:$0xff]
      %v553 = vld [vmem:[%s333 + $0x698] sm:$0xff]
      %v554 = vld [vmem:[%s333 + $0x6a0] sm:$0xff]
      %v555 = vld [vmem:[%s333 + $0x6a8] sm:$0xff]
      %v556 = vld [vmem:[%s333 + $0x6b0] sm:$0xff]
      %v557 = vld [vmem:[%s333 + $0x6b8] sm:$0xff]
      %v558 = vld [vmem:[%s333 + $0x6c0] sm:$0xff]
      %v559 = vld [vmem:[%s333 + $0x6c8] sm:$0xff]
      %v560 = vld [vmem:[%s333 + $0x6d0] sm:$0xff]
      %v561 = vld [vmem:[%s333 + $0x6d8] sm:$0xff]
      %v562 = vld [vmem:[%s333 + $0x6e0] sm:$0xff]
      %v563 = vld [vmem:[%s333 + $0x6e8] sm:$0xff]
      %v564 = vld [vmem:[%s333 + $0x6f0] sm:$0xff]
      %v565 = vld [vmem:[%s333 + $0x6f8] sm:$0xff]
      %v566 = vpack.c.bf16 %v349, %v342
      %v567 = vpack.c.bf16 %v350, %v343
      %v568 = vpack.c.bf16 %v351, %v344
      %v569 = vpack.c.bf16 %v352, %v345
      %v570 = vpack.c.bf16 %v353, %v346
      %v571 = vpack.c.bf16 %v354, %v347
      %v572 = vpack.c.bf16 %v355, %v348
      %v573 = vpack.c.bf16 %v363, %v356
      %v574 = vpack.c.bf16 %v364, %v357
      %v575 = vpack.c.bf16 %v365, %v358
      %v576 = vpack.c.bf16 %v366, %v359
      %v577 = vpack.c.bf16 %v367, %v360
      %v578 = vpack.c.bf16 %v368, %v361
      %v579 = vpack.c.bf16 %v369, %v362
      %v580 = vpack.c.bf16 %v377, %v370
      %v581 = vpack.c.bf16 %v378, %v371
      %v582 = vpack.c.bf16 %v379, %v372
      %v583 = vpack.c.bf16 %v380, %v373
      %v584 = vpack.c.bf16 %v381, %v374
      %v585 = vpack.c.bf16 %v382, %v375
      %v586 = vpack.c.bf16 %v383, %v376
      %v587 = vpack.c.bf16 %v391, %v384
      %v588 = vpack.c.bf16 %v392, %v385
      %v589 = vpack.c.bf16 %v393, %v386
      %v590 = vpack.c.bf16 %v394, %v387
      %v591 = vpack.c.bf16 %v395, %v388
      %v592 = vpack.c.bf16 %v396, %v389
      %v593 = vpack.c.bf16 %v397, %v390
      %v594 = vpack.c.bf16 %v405, %v398
      %v595 = vpack.c.bf16 %v406, %v399
      %v596 = vpack.c.bf16 %v407, %v400
      %v597 = vpack.c.bf16 %v408, %v401
      %v598 = vpack.c.bf16 %v409, %v402
      %v599 = vpack.c.bf16 %v410, %v403
      %v600 = vpack.c.bf16 %v411, %v404
      %v601 = vpack.c.bf16 %v419, %v412
      %v602 = vpack.c.bf16 %v420, %v413
      %v603 = vpack.c.bf16 %v421, %v414
      %v604 = vpack.c.bf16 %v422, %v415
      %v605 = vpack.c.bf16 %v423, %v416
      %v606 = vpack.c.bf16 %v424, %v417
      %v607 = vpack.c.bf16 %v425, %v418
      %v608 = vpack.c.bf16 %v433, %v426
      %v609 = vpack.c.bf16 %v434, %v427
      %v610 = vpack.c.bf16 %v435, %v428
      %v611 = vpack.c.bf16 %v436, %v429
      %v612 = vpack.c.bf16 %v437, %v430
      %v613 = vpack.c.bf16 %v438, %v431
      %v614 = vpack.c.bf16 %v439, %v432
      %v615 = vpack.c.bf16 %v447, %v440
      %v616 = vpack.c.bf16 %v448, %v441
      %v617 = vpack.c.bf16 %v449, %v442
      %v618 = vpack.c.bf16 %v450, %v443
      %v619 = vpack.c.bf16 %v451, %v444
      %v620 = vpack.c.bf16 %v452, %v445
      %v621 = vpack.c.bf16 %v453, %v446
      %v622 = vpack.c.bf16 %v461, %v454
      %v623 = vpack.c.bf16 %v462, %v455
      %v624 = vpack.c.bf16 %v463, %v456
      %v625 = vpack.c.bf16 %v464, %v457
      %v626 = vpack.c.bf16 %v465, %v458
      %v627 = vpack.c.bf16 %v466, %v459
      %v628 = vpack.c.bf16 %v467, %v460
      %v629 = vpack.c.bf16 %v475, %v468
      %v630 = vpack.c.bf16 %v476, %v469
      %v631 = vpack.c.bf16 %v477, %v470
      %v632 = vpack.c.bf16 %v478, %v471
      %v633 = vpack.c.bf16 %v479, %v472
      %v634 = vpack.c.bf16 %v480, %v473
      %v635 = vpack.c.bf16 %v481, %v474
      %v636 = vpack.c.bf16 %v489, %v482
      %v637 = vpack.c.bf16 %v490, %v483
      %v638 = vpack.c.bf16 %v491, %v484
      %v639 = vpack.c.bf16 %v492, %v485
      %v640 = vpack.c.bf16 %v493, %v486
      %v641 = vpack.c.bf16 %v494, %v487
      %v642 = vpack.c.bf16 %v495, %v488
      %v643 = vpack.c.bf16 %v503, %v496
      %v644 = vpack.c.bf16 %v504, %v497
      %v645 = vpack.c.bf16 %v505, %v498
      %v646 = vpack.c.bf16 %v506, %v499
      %v647 = vpack.c.bf16 %v507, %v500
      %v648 = vpack.c.bf16 %v508, %v501
      %v649 = vpack.c.bf16 %v509, %v502
      %v650 = vpack.c.bf16 %v517, %v510
      %v651 = vpack.c.bf16 %v518, %v511
      %v652 = vpack.c.bf16 %v519, %v512
      %v653 = vpack.c.bf16 %v520, %v513
      %v654 = vpack.c.bf16 %v521, %v514
      %v655 = vpack.c.bf16 %v522, %v515
      %v656 = vpack.c.bf16 %v523, %v516
      %v657 = vpack.c.bf16 %v531, %v524
      %v658 = vpack.c.bf16 %v532, %v525
      %v659 = vpack.c.bf16 %v533, %v526
      %v660 = vpack.c.bf16 %v534, %v527
      %v661 = vpack.c.bf16 %v535, %v528
      %v662 = vpack.c.bf16 %v536, %v529
      %v663 = vpack.c.bf16 %v537, %v530
      %v664 = vpack.c.bf16 %v545, %v538
      %v665 = vpack.c.bf16 %v546, %v539
      %v666 = vpack.c.bf16 %v547, %v540
      %v667 = vpack.c.bf16 %v548, %v541
      %v668 = vpack.c.bf16 %v549, %v542
      %v669 = vpack.c.bf16 %v550, %v543
      %v670 = vpack.c.bf16 %v551, %v544
      %v671 = vpack.c.bf16 %v559, %v552
      %v672 = vpack.c.bf16 %v560, %v553
      %v673 = vpack.c.bf16 %v561, %v554
      %v674 = vpack.c.bf16 %v562, %v555
      %v675 = vpack.c.bf16 %v563, %v556
      %v676 = vpack.c.bf16 %v564, %v557
      %v677 = vpack.c.bf16 %v565, %v558
      %v678 = vld [vmem:[%s1] sm:$0xff]
      %v679 = vld [vmem:[%s1 + $0x8] sm:$0xff]
      %v680 = vld [vmem:[%s1 + $0x10] sm:$0xff]
      %v681 = vld [vmem:[%s1 + $0x18] sm:$0xff]
      %v682 = vld [vmem:[%s1 + $0x20] sm:$0xff]
      %v683 = vld [vmem:[%s1 + $0x28] sm:$0xff]
      %v684 = vld [vmem:[%s1 + $0x30] sm:$0xff]
      %v685 = vld [vmem:[%s1 + $0x38] sm:$0xff]
      %v686 = vld [vmem:[%s1 + $0x40] sm:$0xff]
      %v687 = vld [vmem:[%s1 + $0x48] sm:$0xff]
      %v688 = vld [vmem:[%s1 + $0x50] sm:$0xff]
      %v689 = vld [vmem:[%s1 + $0x58] sm:$0xff]
      %v690 = vld [vmem:[%s1 + $0x60] sm:$0xff]
      %v691 = vld [vmem:[%s1 + $0x68] sm:$0xff]
      %v692 = vld [vmem:[%s1 + $0x70] sm:$0xff]
      %v693 = vld [vmem:[%s1 + $0x78] sm:$0xff]
      %v694 = vld [vmem:[%s1 + $0x80] sm:$0xff]
      %v695 = vld [vmem:[%s1 + $0x88] sm:$0xff]
      %v696 = vld [vmem:[%s1 + $0x90] sm:$0xff]
      %v697 = vld [vmem:[%s1 + $0x98] sm:$0xff]
      %v698 = vld [vmem:[%s1 + $0xa0] sm:$0xff]
      %v699 = vld [vmem:[%s1 + $0xa8] sm:$0xff]
      %v700 = vld [vmem:[%s1 + $0xb0] sm:$0xff]
      %v701 = vld [vmem:[%s1 + $0xb8] sm:$0xff]
      %v702 = vld [vmem:[%s1 + $0xc0] sm:$0xff]
      %v703 = vld [vmem:[%s1 + $0xc8] sm:$0xff]
      %v704 = vld [vmem:[%s1 + $0xd0] sm:$0xff]
      %v705 = vld [vmem:[%s1 + $0xd8] sm:$0xff]
      %v706 = vld [vmem:[%s1 + $0xe0] sm:$0xff]
      %v707 = vld [vmem:[%s1 + $0xe8] sm:$0xff]
      %v708 = vld [vmem:[%s1 + $0xf0] sm:$0xff]
      %v709 = vld [vmem:[%s1 + $0xf8] sm:$0xff]
      %v710 = vld [vmem:[%s1 + $0x100] sm:$0xff]
      %v711 = vld [vmem:[%s1 + $0x108] sm:$0xff]
      %v712 = vld [vmem:[%s1 + $0x110] sm:$0xff]
      %v713 = vld [vmem:[%s1 + $0x118] sm:$0xff]
      %v714 = vld [vmem:[%s1 + $0x120] sm:$0xff]
      %v715 = vld [vmem:[%s1 + $0x128] sm:$0xff]
      %v716 = vld [vmem:[%s1 + $0x130] sm:$0xff]
      %v717 = vld [vmem:[%s1 + $0x138] sm:$0xff]
      %v718 = vld [vmem:[%s1 + $0x140] sm:$0xff]
      %v719 = vld [vmem:[%s1 + $0x148] sm:$0xff]
      %v720 = vld [vmem:[%s1 + $0x150] sm:$0xff]
      %v721 = vld [vmem:[%s1 + $0x158] sm:$0xff]
      %v722 = vld [vmem:[%s1 + $0x160] sm:$0xff]
      %v723 = vld [vmem:[%s1 + $0x168] sm:$0xff]
      %v724 = vld [vmem:[%s1 + $0x170] sm:$0xff]
      %v725 = vld [vmem:[%s1 + $0x178] sm:$0xff]
      %v726 = vld [vmem:[%s1 + $0x180] sm:$0xff]
      %v727 = vld [vmem:[%s1 + $0x188] sm:$0xff]
      %v728 = vld [vmem:[%s1 + $0x190] sm:$0xff]
      %v729 = vld [vmem:[%s1 + $0x198] sm:$0xff]
      %v730 = vld [vmem:[%s1 + $0x1a0] sm:$0xff]
      %v731 = vld [vmem:[%s1 + $0x1a8] sm:$0xff]
      %v732 = vld [vmem:[%s1 + $0x1b0] sm:$0xff]
      %v733 = vld [vmem:[%s1 + $0x1b8] sm:$0xff]
      %v734 = vld [vmem:[%s1 + $0x1c0] sm:$0xff]
      %v735 = vld [vmem:[%s1 + $0x1c8] sm:$0xff]
      %v736 = vld [vmem:[%s1 + $0x1d0] sm:$0xff]
      %v737 = vld [vmem:[%s1 + $0x1d8] sm:$0xff]
      %v738 = vld [vmem:[%s1 + $0x1e0] sm:$0xff]
      %v739 = vld [vmem:[%s1 + $0x1e8] sm:$0xff]
      %v740 = vld [vmem:[%s1 + $0x1f0] sm:$0xff]
      %v741 = vld [vmem:[%s1 + $0x1f8] sm:$0xff]
      %v742 = vld [vmem:[%s1 + $0x200] sm:$0xff]
      %v743 = vld [vmem:[%s1 + $0x208] sm:$0xff]
      %v744 = vld [vmem:[%s1 + $0x210] sm:$0xff]
      %v745 = vld [vmem:[%s1 + $0x218] sm:$0xff]
      %v746 = vld [vmem:[%s1 + $0x220] sm:$0xff]
      %v747 = vld [vmem:[%s1 + $0x228] sm:$0xff]
      %v748 = vld [vmem:[%s1 + $0x230] sm:$0xff]
      %v749 = vld [vmem:[%s1 + $0x238] sm:$0xff]
      %v750 = vld [vmem:[%s1 + $0x240] sm:$0xff]
      %v751 = vld [vmem:[%s1 + $0x248] sm:$0xff]
      %v752 = vld [vmem:[%s1 + $0x250] sm:$0xff]
      %v753 = vld [vmem:[%s1 + $0x258] sm:$0xff]
      %v754 = vld [vmem:[%s1 + $0x260] sm:$0xff]
      %v755 = vld [vmem:[%s1 + $0x268] sm:$0xff]
      %v756 = vld [vmem:[%s1 + $0x270] sm:$0xff]
      %v757 = vld [vmem:[%s1 + $0x278] sm:$0xff]
      %v758 = vld [vmem:[%s1 + $0x280] sm:$0xff]
      %v759 = vld [vmem:[%s1 + $0x288] sm:$0xff]
      %v760 = vld [vmem:[%s1 + $0x290] sm:$0xff]
      %v761 = vld [vmem:[%s1 + $0x298] sm:$0xff]
      %v762 = vld [vmem:[%s1 + $0x2a0] sm:$0xff]
      %v763 = vld [vmem:[%s1 + $0x2a8] sm:$0xff]
      %v764 = vld [vmem:[%s1 + $0x2b0] sm:$0xff]
      %v765 = vld [vmem:[%s1 + $0x2b8] sm:$0xff]
      %v766 = vld [vmem:[%s1 + $0x2c0] sm:$0xff]
      %v767 = vld [vmem:[%s1 + $0x2c8] sm:$0xff]
      %v768 = vld [vmem:[%s1 + $0x2d0] sm:$0xff]
      %v769 = vld [vmem:[%s1 + $0x2d8] sm:$0xff]
      %v770 = vld [vmem:[%s1 + $0x2e0] sm:$0xff]
      %v771 = vld [vmem:[%s1 + $0x2e8] sm:$0xff]
      %v772 = vld [vmem:[%s1 + $0x2f0] sm:$0xff]
      %v773 = vld [vmem:[%s1 + $0x2f8] sm:$0xff]
      %v774 = vld [vmem:[%s1 + $0x300] sm:$0xff]
      %v775 = vld [vmem:[%s1 + $0x308] sm:$0xff]
      %v776 = vld [vmem:[%s1 + $0x310] sm:$0xff]
      %v777 = vld [vmem:[%s1 + $0x318] sm:$0xff]
      %v778 = vld [vmem:[%s1 + $0x320] sm:$0xff]
      %v779 = vld [vmem:[%s1 + $0x328] sm:$0xff]
      %v780 = vld [vmem:[%s1 + $0x330] sm:$0xff]
      %v781 = vld [vmem:[%s1 + $0x338] sm:$0xff]
      %v782 = vld [vmem:[%s1 + $0x340] sm:$0xff]
      %v783 = vld [vmem:[%s1 + $0x348] sm:$0xff]
      %v784 = vld [vmem:[%s1 + $0x350] sm:$0xff]
      %v785 = vld [vmem:[%s1 + $0x358] sm:$0xff]
      %v786 = vld [vmem:[%s1 + $0x360] sm:$0xff]
      %v787 = vld [vmem:[%s1 + $0x368] sm:$0xff]
      %v788 = vld [vmem:[%s1 + $0x370] sm:$0xff]
      %v789 = vld [vmem:[%s1 + $0x378] sm:$0xff]
      %v790 = vld [vmem:[%s1 + $0x380] sm:$0xff]
      %v791 = vld [vmem:[%s1 + $0x388] sm:$0xff]
      %v792 = vld [vmem:[%s1 + $0x390] sm:$0xff]
      %v793 = vld [vmem:[%s1 + $0x398] sm:$0xff]
      %v794 = vld [vmem:[%s1 + $0x3a0] sm:$0xff]
      %v795 = vld [vmem:[%s1 + $0x3a8] sm:$0xff]
      %v796 = vld [vmem:[%s1 + $0x3b0] sm:$0xff]
      %v797 = vld [vmem:[%s1 + $0x3b8] sm:$0xff]
      %v798 = vld [vmem:[%s1 + $0x3c0] sm:$0xff]
      %v799 = vld [vmem:[%s1 + $0x3c8] sm:$0xff]
      %v800 = vld [vmem:[%s1 + $0x3d0] sm:$0xff]
      %v801 = vld [vmem:[%s1 + $0x3d8] sm:$0xff]
      %v802 = vld [vmem:[%s1 + $0x3e0] sm:$0xff]
      %v803 = vld [vmem:[%s1 + $0x3e8] sm:$0xff]
      %v804 = vld [vmem:[%s1 + $0x3f0] sm:$0xff]
      %v805 = vld [vmem:[%s1 + $0x3f8] sm:$0xff]
      %v806 = vld [vmem:[%s1 + $0x400] sm:$0xff]
      %v807 = vld [vmem:[%s1 + $0x408] sm:$0xff]
      %v808 = vld [vmem:[%s1 + $0x410] sm:$0xff]
      %v809 = vld [vmem:[%s1 + $0x418] sm:$0xff]
      %v810 = vld [vmem:[%s1 + $0x420] sm:$0xff]
      %v811 = vld [vmem:[%s1 + $0x428] sm:$0xff]
      %v812 = vld [vmem:[%s1 + $0x430] sm:$0xff]
      %v813 = vld [vmem:[%s1 + $0x438] sm:$0xff]
      %v814 = vld [vmem:[%s1 + $0x440] sm:$0xff]
      %v815 = vld [vmem:[%s1 + $0x448] sm:$0xff]
      %v816 = vld [vmem:[%s1 + $0x450] sm:$0xff]
      %v817 = vld [vmem:[%s1 + $0x458] sm:$0xff]
      %v818 = vld [vmem:[%s1 + $0x460] sm:$0xff]
      %v819 = vld [vmem:[%s1 + $0x468] sm:$0xff]
      %v820 = vld [vmem:[%s1 + $0x470] sm:$0xff]
      %v821 = vld [vmem:[%s1 + $0x478] sm:$0xff]
      %v822 = vld [vmem:[%s1 + $0x480] sm:$0xff]
      %v823 = vld [vmem:[%s1 + $0x488] sm:$0xff]
      %v824 = vld [vmem:[%s1 + $0x490] sm:$0xff]
      %v825 = vld [vmem:[%s1 + $0x498] sm:$0xff]
      %v826 = vld [vmem:[%s1 + $0x4a0] sm:$0xff]
      %v827 = vld [vmem:[%s1 + $0x4a8] sm:$0xff]
      %v828 = vld [vmem:[%s1 + $0x4b0] sm:$0xff]
      %v829 = vld [vmem:[%s1 + $0x4b8] sm:$0xff]
      %v830 = vld [vmem:[%s1 + $0x4c0] sm:$0xff]
      %v831 = vld [vmem:[%s1 + $0x4c8] sm:$0xff]
      %v832 = vld [vmem:[%s1 + $0x4d0] sm:$0xff]
      %v833 = vld [vmem:[%s1 + $0x4d8] sm:$0xff]
      %v834 = vld [vmem:[%s1 + $0x4e0] sm:$0xff]
      %v835 = vld [vmem:[%s1 + $0x4e8] sm:$0xff]
      %v836 = vld [vmem:[%s1 + $0x4f0] sm:$0xff]
      %v837 = vld [vmem:[%s1 + $0x4f8] sm:$0xff]
      %v838 = vld [vmem:[%s1 + $0x500] sm:$0xff]
      %v839 = vld [vmem:[%s1 + $0x508] sm:$0xff]
      %v840 = vld [vmem:[%s1 + $0x510] sm:$0xff]
      %v841 = vld [vmem:[%s1 + $0x518] sm:$0xff]
      %v842 = vld [vmem:[%s1 + $0x520] sm:$0xff]
      %v843 = vld [vmem:[%s1 + $0x528] sm:$0xff]
      %v844 = vld [vmem:[%s1 + $0x530] sm:$0xff]
      %v845 = vld [vmem:[%s1 + $0x538] sm:$0xff]
      %v846 = vld [vmem:[%s1 + $0x540] sm:$0xff]
      %v847 = vld [vmem:[%s1 + $0x548] sm:$0xff]
      %v848 = vld [vmem:[%s1 + $0x550] sm:$0xff]
      %v849 = vld [vmem:[%s1 + $0x558] sm:$0xff]
      %v850 = vld [vmem:[%s1 + $0x560] sm:$0xff]
      %v851 = vld [vmem:[%s1 + $0x568] sm:$0xff]
      %v852 = vld [vmem:[%s1 + $0x570] sm:$0xff]
      %v853 = vld [vmem:[%s1 + $0x578] sm:$0xff]
      %v854 = vld [vmem:[%s1 + $0x580] sm:$0xff]
      %v855 = vld [vmem:[%s1 + $0x588] sm:$0xff]
      %v856 = vld [vmem:[%s1 + $0x590] sm:$0xff]
      %v857 = vld [vmem:[%s1 + $0x598] sm:$0xff]
      %v858 = vld [vmem:[%s1 + $0x5a0] sm:$0xff]
      %v859 = vld [vmem:[%s1 + $0x5a8] sm:$0xff]
      %v860 = vld [vmem:[%s1 + $0x5b0] sm:$0xff]
      %v861 = vld [vmem:[%s1 + $0x5b8] sm:$0xff]
      %v862 = vld [vmem:[%s1 + $0x5c0] sm:$0xff]
      %v863 = vld [vmem:[%s1 + $0x5c8] sm:$0xff]
      %v864 = vld [vmem:[%s1 + $0x5d0] sm:$0xff]
      %v865 = vld [vmem:[%s1 + $0x5d8] sm:$0xff]
      %v866 = vld [vmem:[%s1 + $0x5e0] sm:$0xff]
      %v867 = vld [vmem:[%s1 + $0x5e8] sm:$0xff]
      %v868 = vld [vmem:[%s1 + $0x5f0] sm:$0xff]
      %v869 = vld [vmem:[%s1 + $0x5f8] sm:$0xff]
      %v870 = vld [vmem:[%s1 + $0x600] sm:$0xff]
      %v871 = vld [vmem:[%s1 + $0x608] sm:$0xff]
      %v872 = vld [vmem:[%s1 + $0x610] sm:$0xff]
      %v873 = vld [vmem:[%s1 + $0x618] sm:$0xff]
      %v874 = vld [vmem:[%s2] sm:$0xf]
      %v876 = vperm.slane %v874, 0
      %v877 = vperm.slane %v874, 1
      %v878 = vperm.slane %v874, 2
      %v879 = vperm.slane %v874, 3
      %v1080 = vunpack.c.l.b16 %v678
      %v1081 = vunpack.c.h.b16 %v678
      %v1082 = vunpack.c.l.b16 %v679
      %v1083 = vunpack.c.h.b16 %v679
      %v1084 = vunpack.c.l.b16 %v680
      %v1085 = vunpack.c.h.b16 %v680
      %v1086 = vunpack.c.l.b16 %v681
      %v1087 = vunpack.c.h.b16 %v681
      %v1088 = vunpack.c.l.b16 %v682
      %v1089 = vunpack.c.h.b16 %v682
      %v1090 = vunpack.c.l.b16 %v683
      %v1091 = vunpack.c.h.b16 %v683
      %v1092 = vunpack.c.l.b16 %v684
      %v1093 = vunpack.c.h.b16 %v684
      %v1094 = vunpack.c.l.b16 %v685
      %v1095 = vunpack.c.h.b16 %v685
      %v1096 = vunpack.c.l.b16 %v686
      %v1097 = vunpack.c.h.b16 %v686
      %v1098 = vunpack.c.l.b16 %v687
      %v1099 = vunpack.c.h.b16 %v687
      %v1100 = vunpack.c.l.b16 %v688
      %v1101 = vunpack.c.h.b16 %v688
      %v1102 = vunpack.c.l.b16 %v689
      %v1103 = vunpack.c.h.b16 %v689
      %v1104 = vunpack.c.l.b16 %v690
      %v1105 = vunpack.c.h.b16 %v690
      %v1106 = vunpack.c.l.b16 %v691
      %v1107 = vunpack.c.h.b16 %v691
      %v1108 = vunpack.c.l.b16 %v692
      %v1109 = vunpack.c.h.b16 %v692
      %v1110 = vunpack.c.l.b16 %v693
      %v1111 = vunpack.c.h.b16 %v693
      %v1112 = vunpack.c.l.b16 %v694
      %v1113 = vunpack.c.h.b16 %v694
      %v1114 = vunpack.c.l.b16 %v695
      %v1115 = vunpack.c.h.b16 %v695
      %v1116 = vunpack.c.l.b16 %v696
      %v1117 = vunpack.c.h.b16 %v696
      %v1118 = vunpack.c.l.b16 %v697
      %v1119 = vunpack.c.h.b16 %v697
      %v1120 = vunpack.c.l.b16 %v698
      %v1121 = vunpack.c.h.b16 %v698
      %v1122 = vunpack.c.l.b16 %v699
      %v1123 = vunpack.c.h.b16 %v699
      %v1124 = vunpack.c.l.b16 %v700
      %v1125 = vunpack.c.h.b16 %v700
      %v1126 = vunpack.c.l.b16 %v701
      %v1127 = vunpack.c.h.b16 %v701
      %v1128 = vunpack.c.l.b16 %v702
      %v1129 = vunpack.c.h.b16 %v702
      %v1130 = vunpack.c.l.b16 %v703
      %v1131 = vunpack.c.h.b16 %v703
      %v1132 = vunpack.c.l.b16 %v704
      %v1133 = vunpack.c.h.b16 %v704
      %v1134 = vunpack.c.l.b16 %v705
      %v1135 = vunpack.c.h.b16 %v705
      %v1136 = vunpack.c.l.b16 %v706
      %v1137 = vunpack.c.h.b16 %v706
      %v1138 = vunpack.c.l.b16 %v707
      %v1139 = vunpack.c.h.b16 %v707
      %v1140 = vunpack.c.l.b16 %v708
      %v1141 = vunpack.c.h.b16 %v708
      %v1142 = vunpack.c.l.b16 %v709
      %v1143 = vunpack.c.h.b16 %v709
      %v1144 = vunpack.c.l.b16 %v710
      %v1145 = vunpack.c.h.b16 %v710
      %v1146 = vunpack.c.l.b16 %v711
      %v1147 = vunpack.c.h.b16 %v711
      %v1148 = vunpack.c.l.b16 %v712
      %v1149 = vunpack.c.h.b16 %v712
      %v1150 = vunpack.c.l.b16 %v713
      %v1151 = vunpack.c.h.b16 %v713
      %v1152 = vunpack.c.l.b16 %v714
      %v1153 = vunpack.c.h.b16 %v714
      %v1154 = vunpack.c.l.b16 %v715
      %v1155 = vunpack.c.h.b16 %v715
      %v1156 = vunpack.c.l.b16 %v716
      %v1157 = vunpack.c.h.b16 %v716
      %v1158 = vunpack.c.l.b16 %v717
      %v1159 = vunpack.c.h.b16 %v717
      %v1160 = vunpack.c.l.b16 %v718
      %v1161 = vunpack.c.h.b16 %v718
      %v1162 = vunpack.c.l.b16 %v719
      %v1163 = vunpack.c.h.b16 %v719
      %v1164 = vunpack.c.l.b16 %v720
      %v1165 = vunpack.c.h.b16 %v720
      %v1166 = vunpack.c.l.b16 %v721
      %v1167 = vunpack.c.h.b16 %v721
      %v1168 = vunpack.c.l.b16 %v722
      %v1169 = vunpack.c.h.b16 %v722
      %v1170 = vunpack.c.l.b16 %v723
      %v1171 = vunpack.c.h.b16 %v723
      %v1172 = vunpack.c.l.b16 %v724
      %v1173 = vunpack.c.h.b16 %v724
      %v1174 = vunpack.c.l.b16 %v725
      %v1175 = vunpack.c.h.b16 %v725
      %v1176 = vunpack.c.l.b16 %v726
      %v1177 = vunpack.c.h.b16 %v726
      %v1178 = vunpack.c.l.b16 %v727
      %v1179 = vunpack.c.h.b16 %v727
      %v1180 = vunpack.c.l.b16 %v728
      %v1181 = vunpack.c.h.b16 %v728
      %v1182 = vunpack.c.l.b16 %v729
      %v1183 = vunpack.c.h.b16 %v729
      %v1184 = vunpack.c.l.b16 %v730
      %v1185 = vunpack.c.h.b16 %v730
      %v1186 = vunpack.c.l.b16 %v731
      %v1187 = vunpack.c.h.b16 %v731
      %v1188 = vunpack.c.l.b16 %v732
      %v1189 = vunpack.c.h.b16 %v732
      %v1190 = vunpack.c.l.b16 %v733
      %v1191 = vunpack.c.h.b16 %v733
      %v1192 = vunpack.c.l.b16 %v734
      %v1193 = vunpack.c.h.b16 %v734
      %v1194 = vunpack.c.l.b16 %v735
      %v1195 = vunpack.c.h.b16 %v735
      %v1196 = vunpack.c.l.b16 %v736
      %v1197 = vunpack.c.h.b16 %v736
      %v1198 = vunpack.c.l.b16 %v737
      %v1199 = vunpack.c.h.b16 %v737
      %v1200 = vunpack.c.l.b16 %v738
      %v1201 = vunpack.c.h.b16 %v738
      %v1202 = vunpack.c.l.b16 %v739
      %v1203 = vunpack.c.h.b16 %v739
      %v1204 = vunpack.c.l.b16 %v740
      %v1205 = vunpack.c.h.b16 %v740
      %v1206 = vunpack.c.l.b16 %v741
      %v1207 = vunpack.c.h.b16 %v741
      %v1208 = vunpack.c.l.b16 %v742
      %v1209 = vunpack.c.h.b16 %v742
      %v1210 = vunpack.c.l.b16 %v743
      %v1211 = vunpack.c.h.b16 %v743
      %v1212 = vunpack.c.l.b16 %v744
      %v1213 = vunpack.c.h.b16 %v744
      %v1214 = vunpack.c.l.b16 %v745
      %v1215 = vunpack.c.h.b16 %v745
      %v1216 = vunpack.c.l.b16 %v746
      %v1217 = vunpack.c.h.b16 %v746
      %v1218 = vunpack.c.l.b16 %v747
      %v1219 = vunpack.c.h.b16 %v747
      %v1220 = vunpack.c.l.b16 %v748
      %v1221 = vunpack.c.h.b16 %v748
      %v1222 = vunpack.c.l.b16 %v749
      %v1223 = vunpack.c.h.b16 %v749
      %v1224 = vunpack.c.l.b16 %v750
      %v1225 = vunpack.c.h.b16 %v750
      %v1226 = vunpack.c.l.b16 %v751
      %v1227 = vunpack.c.h.b16 %v751
      %v1228 = vunpack.c.l.b16 %v752
      %v1229 = vunpack.c.h.b16 %v752
      %v1230 = vunpack.c.l.b16 %v753
      %v1231 = vunpack.c.h.b16 %v753
      %v1232 = vunpack.c.l.b16 %v754
      %v1233 = vunpack.c.h.b16 %v754
      %v1234 = vunpack.c.l.b16 %v755
      %v1235 = vunpack.c.h.b16 %v755
      %v1236 = vunpack.c.l.b16 %v756
      %v1237 = vunpack.c.h.b16 %v756
      %v1238 = vunpack.c.l.b16 %v757
      %v1239 = vunpack.c.h.b16 %v757
      %v1240 = vunpack.c.l.b16 %v758
      %v1241 = vunpack.c.h.b16 %v758
      %v1242 = vunpack.c.l.b16 %v759
      %v1243 = vunpack.c.h.b16 %v759
      %v1244 = vunpack.c.l.b16 %v760
      %v1245 = vunpack.c.h.b16 %v760
      %v1246 = vunpack.c.l.b16 %v761
      %v1247 = vunpack.c.h.b16 %v761
      %v1248 = vunpack.c.l.b16 %v762
      %v1249 = vunpack.c.h.b16 %v762
      %v1250 = vunpack.c.l.b16 %v763
      %v1251 = vunpack.c.h.b16 %v763
      %v1252 = vunpack.c.l.b16 %v764
      %v1253 = vunpack.c.h.b16 %v764
      %v1254 = vunpack.c.l.b16 %v765
      %v1255 = vunpack.c.h.b16 %v765
      %v1256 = vunpack.c.l.b16 %v766
      %v1257 = vunpack.c.h.b16 %v766
      %v1258 = vunpack.c.l.b16 %v767
      %v1259 = vunpack.c.h.b16 %v767
      %v1260 = vunpack.c.l.b16 %v768
      %v1261 = vunpack.c.h.b16 %v768
      %v1262 = vunpack.c.l.b16 %v769
      %v1263 = vunpack.c.h.b16 %v769
      %v1264 = vunpack.c.l.b16 %v770
      %v1265 = vunpack.c.h.b16 %v770
      %v1266 = vunpack.c.l.b16 %v771
      %v1267 = vunpack.c.h.b16 %v771
      %v1268 = vunpack.c.l.b16 %v772
      %v1269 = vunpack.c.h.b16 %v772
      %v1270 = vunpack.c.l.b16 %v773
      %v1271 = vunpack.c.h.b16 %v773
      %v1272 = vunpack.c.l.b16 %v774
      %v1273 = vunpack.c.h.b16 %v774
      %v1274 = vunpack.c.l.b16 %v775
      %v1275 = vunpack.c.h.b16 %v775
      %v1276 = vunpack.c.l.b16 %v776
      %v1277 = vunpack.c.h.b16 %v776
      %v1278 = vunpack.c.l.b16 %v777
      %v1279 = vunpack.c.h.b16 %v777
      %v1280 = vunpack.c.l.b16 %v778
      %v1281 = vunpack.c.h.b16 %v778
      %v1282 = vunpack.c.l.b16 %v779
      %v1283 = vunpack.c.h.b16 %v779
      %v1284 = vunpack.c.l.b16 %v780
      %v1285 = vunpack.c.h.b16 %v780
      %v1286 = vunpack.c.l.b16 %v781
      %v1287 = vunpack.c.h.b16 %v781
      %v1288 = vunpack.c.l.b16 %v782
      %v1289 = vunpack.c.h.b16 %v782
      %v1290 = vunpack.c.l.b16 %v783
      %v1291 = vunpack.c.h.b16 %v783
      %v1292 = vunpack.c.l.b16 %v784
      %v1293 = vunpack.c.h.b16 %v784
      %v1294 = vunpack.c.l.b16 %v785
      %v1295 = vunpack.c.h.b16 %v785
      %v1296 = vunpack.c.l.b16 %v786
      %v1297 = vunpack.c.h.b16 %v786
      %v1298 = vunpack.c.l.b16 %v787
      %v1299 = vunpack.c.h.b16 %v787
      %v1300 = vunpack.c.l.b16 %v788
      %v1301 = vunpack.c.h.b16 %v788
      %v1302 = vunpack.c.l.b16 %v789
      %v1303 = vunpack.c.h.b16 %v789
      %v1304 = vunpack.c.l.b16 %v790
      %v1305 = vunpack.c.h.b16 %v790
      %v1306 = vunpack.c.l.b16 %v791
      %v1307 = vunpack.c.h.b16 %v791
      %v1308 = vunpack.c.l.b16 %v792
      %v1309 = vunpack.c.h.b16 %v792
      %v1310 = vunpack.c.l.b16 %v793
      %v1311 = vunpack.c.h.b16 %v793
      %v1312 = vunpack.c.l.b16 %v794
      %v1313 = vunpack.c.h.b16 %v794
      %v1314 = vunpack.c.l.b16 %v795
      %v1315 = vunpack.c.h.b16 %v795
      %v1316 = vunpack.c.l.b16 %v796
      %v1317 = vunpack.c.h.b16 %v796
      %v1318 = vunpack.c.l.b16 %v797
      %v1319 = vunpack.c.h.b16 %v797
      %v1320 = vunpack.c.l.b16 %v798
      %v1321 = vunpack.c.h.b16 %v798
      %v1322 = vunpack.c.l.b16 %v799
      %v1323 = vunpack.c.h.b16 %v799
      %v1324 = vunpack.c.l.b16 %v800
      %v1325 = vunpack.c.h.b16 %v800
      %v1326 = vunpack.c.l.b16 %v801
      %v1327 = vunpack.c.h.b16 %v801
      %v1328 = vunpack.c.l.b16 %v802
      %v1329 = vunpack.c.h.b16 %v802
      %v1330 = vunpack.c.l.b16 %v803
      %v1331 = vunpack.c.h.b16 %v803
      %v1332 = vunpack.c.l.b16 %v804
      %v1333 = vunpack.c.h.b16 %v804
      %v1334 = vunpack.c.l.b16 %v805
      %v1335 = vunpack.c.h.b16 %v805
      %v1336 = vunpack.c.l.b16 %v806
      %v1337 = vunpack.c.h.b16 %v806
      %v1338 = vunpack.c.l.b16 %v807
      %v1339 = vunpack.c.h.b16 %v807
      %v1340 = vunpack.c.l.b16 %v808
      %v1341 = vunpack.c.h.b16 %v808
      %v1342 = vunpack.c.l.b16 %v809
      %v1343 = vunpack.c.h.b16 %v809
      %v1344 = vunpack.c.l.b16 %v810
      %v1345 = vunpack.c.h.b16 %v810
      %v1346 = vunpack.c.l.b16 %v811
      %v1347 = vunpack.c.h.b16 %v811
      %v1348 = vunpack.c.l.b16 %v812
      %v1349 = vunpack.c.h.b16 %v812
      %v1350 = vunpack.c.l.b16 %v813
      %v1351 = vunpack.c.h.b16 %v813
      %v1352 = vunpack.c.l.b16 %v814
      %v1353 = vunpack.c.h.b16 %v814
      %v1354 = vunpack.c.l.b16 %v815
      %v1355 = vunpack.c.h.b16 %v815
      %v1356 = vunpack.c.l.b16 %v816
      %v1357 = vunpack.c.h.b16 %v816
      %v1358 = vunpack.c.l.b16 %v817
      %v1359 = vunpack.c.h.b16 %v817
      %v1360 = vunpack.c.l.b16 %v818
      %v1361 = vunpack.c.h.b16 %v818
      %v1362 = vunpack.c.l.b16 %v819
      %v1363 = vunpack.c.h.b16 %v819
      %v1364 = vunpack.c.l.b16 %v820
      %v1365 = vunpack.c.h.b16 %v820
      %v1366 = vunpack.c.l.b16 %v821
      %v1367 = vunpack.c.h.b16 %v821
      %v1368 = vunpack.c.l.b16 %v822
      %v1369 = vunpack.c.h.b16 %v822
      %v1370 = vunpack.c.l.b16 %v823
      %v1371 = vunpack.c.h.b16 %v823
      %v1372 = vunpack.c.l.b16 %v824
      %v1373 = vunpack.c.h.b16 %v824
      %v1374 = vunpack.c.l.b16 %v825
      %v1375 = vunpack.c.h.b16 %v825
      %v1376 = vunpack.c.l.b16 %v826
      %v1377 = vunpack.c.h.b16 %v826
      %v1378 = vunpack.c.l.b16 %v827
      %v1379 = vunpack.c.h.b16 %v827
      %v1380 = vunpack.c.l.b16 %v828
      %v1381 = vunpack.c.h.b16 %v828
      %v1382 = vunpack.c.l.b16 %v829
      %v1383 = vunpack.c.h.b16 %v829
      %v1384 = vunpack.c.l.b16 %v830
      %v1385 = vunpack.c.h.b16 %v830
      %v1386 = vunpack.c.l.b16 %v831
      %v1387 = vunpack.c.h.b16 %v831
      %v1388 = vunpack.c.l.b16 %v832
      %v1389 = vunpack.c.h.b16 %v832
      %v1390 = vunpack.c.l.b16 %v833
      %v1391 = vunpack.c.h.b16 %v833
      %v1392 = vunpack.c.l.b16 %v834
      %v1393 = vunpack.c.h.b16 %v834
      %v1394 = vunpack.c.l.b16 %v835
      %v1395 = vunpack.c.h.b16 %v835
      %v1396 = vunpack.c.l.b16 %v836
      %v1397 = vunpack.c.h.b16 %v836
      %v1398 = vunpack.c.l.b16 %v837
      %v1399 = vunpack.c.h.b16 %v837
      %v1400 = vunpack.c.l.b16 %v838
      %v1401 = vunpack.c.h.b16 %v838
      %v1402 = vunpack.c.l.b16 %v839
      %v1403 = vunpack.c.h.b16 %v839
      %v1404 = vunpack.c.l.b16 %v840
      %v1405 = vunpack.c.h.b16 %v840
      %v1406 = vunpack.c.l.b16 %v841
      %v1407 = vunpack.c.h.b16 %v841
      %v1408 = vunpack.c.l.b16 %v842
      %v1409 = vunpack.c.h.b16 %v842
      %v1410 = vunpack.c.l.b16 %v843
      %v1411 = vunpack.c.h.b16 %v843
      %v1412 = vunpack.c.l.b16 %v844
      %v1413 = vunpack.c.h.b16 %v844
      %v1414 = vunpack.c.l.b16 %v845
      %v1415 = vunpack.c.h.b16 %v845
      %v1416 = vunpack.c.l.b16 %v846
      %v1417 = vunpack.c.h.b16 %v846
      %v1418 = vunpack.c.l.b16 %v847
      %v1419 = vunpack.c.h.b16 %v847
      %v1420 = vunpack.c.l.b16 %v848
      %v1421 = vunpack.c.h.b16 %v848
      %v1422 = vunpack.c.l.b16 %v849
      %v1423 = vunpack.c.h.b16 %v849
      %v1424 = vunpack.c.l.b16 %v850
      %v1425 = vunpack.c.h.b16 %v850
      %v1426 = vunpack.c.l.b16 %v851
      %v1427 = vunpack.c.h.b16 %v851
      %v1428 = vunpack.c.l.b16 %v852
      %v1429 = vunpack.c.h.b16 %v852
      %v1430 = vunpack.c.l.b16 %v853
      %v1431 = vunpack.c.h.b16 %v853
      %v1432 = vunpack.c.l.b16 %v854
      %v1433 = vunpack.c.h.b16 %v854
      %v1434 = vunpack.c.l.b16 %v855
      %v1435 = vunpack.c.h.b16 %v855
      %v1436 = vunpack.c.l.b16 %v856
      %v1437 = vunpack.c.h.b16 %v856
      %v1438 = vunpack.c.l.b16 %v857
      %v1439 = vunpack.c.h.b16 %v857
      %v1440 = vunpack.c.l.b16 %v858
      %v1441 = vunpack.c.h.b16 %v858
      %v1442 = vunpack.c.l.b16 %v859
      %v1443 = vunpack.c.h.b16 %v859
      %v1444 = vunpack.c.l.b16 %v860
      %v1445 = vunpack.c.h.b16 %v860
      %v1446 = vunpack.c.l.b16 %v861
      %v1447 = vunpack.c.h.b16 %v861
      %v1448 = vunpack.c.l.b16 %v862
      %v1449 = vunpack.c.h.b16 %v862
      %v1450 = vunpack.c.l.b16 %v863
      %v1451 = vunpack.c.h.b16 %v863
      %v1452 = vunpack.c.l.b16 %v864
      %v1453 = vunpack.c.h.b16 %v864
      %v1454 = vunpack.c.l.b16 %v865
      %v1455 = vunpack.c.h.b16 %v865
      %v1456 = vunpack.c.l.b16 %v866
      %v1457 = vunpack.c.h.b16 %v866
      %v1458 = vunpack.c.l.b16 %v867
      %v1459 = vunpack.c.h.b16 %v867
      %v1460 = vunpack.c.l.b16 %v868
      %v1461 = vunpack.c.h.b16 %v868
      %v1462 = vunpack.c.l.b16 %v869
      %v1463 = vunpack.c.h.b16 %v869
      %v1464 = vunpack.c.l.b16 %v870
      %v1465 = vunpack.c.h.b16 %v870
      %v1466 = vunpack.c.l.b16 %v871
      %v1467 = vunpack.c.h.b16 %v871
      %v1468 = vunpack.c.l.b16 %v872
      %v1469 = vunpack.c.h.b16 %v872
      %v1470 = vunpack.c.l.b16 %v873
      %v1471 = vunpack.c.h.b16 %v873
      %v1472 = vpack.c.b16 %v1084, %v1080
      %v1473 = vpack.c.b16 %v1085, %v1081
      %v1474 = vpack.c.b16 %v1086, %v1082
      %v1475 = vpack.c.b16 %v1087, %v1083
      %v1476 = vpack.c.b16 %v1092, %v1088
      %v1477 = vpack.c.b16 %v1093, %v1089
      %v1478 = vpack.c.b16 %v1094, %v1090
      %v1479 = vpack.c.b16 %v1095, %v1091
      %v1480 = vpack.c.b16 %v1100, %v1096
      %v1481 = vpack.c.b16 %v1101, %v1097
      %v1482 = vpack.c.b16 %v1102, %v1098
      %v1483 = vpack.c.b16 %v1103, %v1099
      %v1484 = vpack.c.b16 %v1108, %v1104
      %v1485 = vpack.c.b16 %v1109, %v1105
      %v1486 = vpack.c.b16 %v1110, %v1106
      %v1487 = vpack.c.b16 %v1111, %v1107
      %v1488 = vpack.c.b16 %v1116, %v1112
      %v1489 = vpack.c.b16 %v1117, %v1113
      %v1490 = vpack.c.b16 %v1118, %v1114
      %v1491 = vpack.c.b16 %v1119, %v1115
      %v1492 = vpack.c.b16 %v1124, %v1120
      %v1493 = vpack.c.b16 %v1125, %v1121
      %v1494 = vpack.c.b16 %v1126, %v1122
      %v1495 = vpack.c.b16 %v1127, %v1123
      %v1496 = vpack.c.b16 %v1132, %v1128
      %v1497 = vpack.c.b16 %v1133, %v1129
      %v1498 = vpack.c.b16 %v1134, %v1130
      %v1499 = vpack.c.b16 %v1135, %v1131
      %v1500 = vpack.c.b16 %v1140, %v1136
      %v1501 = vpack.c.b16 %v1141, %v1137
      %v1502 = vpack.c.b16 %v1142, %v1138
      %v1503 = vpack.c.b16 %v1143, %v1139
      %v1504 = vpack.c.b16 %v1148, %v1144
      %v1505 = vpack.c.b16 %v1149, %v1145
      %v1506 = vpack.c.b16 %v1150, %v1146
      %v1507 = vpack.c.b16 %v1151, %v1147
      %v1508 = vpack.c.b16 %v1156, %v1152
      %v1509 = vpack.c.b16 %v1157, %v1153
      %v1510 = vpack.c.b16 %v1158, %v1154
      %v1511 = vpack.c.b16 %v1159, %v1155
      %v1512 = vpack.c.b16 %v1164, %v1160
      %v1513 = vpack.c.b16 %v1165, %v1161
      %v1514 = vpack.c.b16 %v1166, %v1162
      %v1515 = vpack.c.b16 %v1167, %v1163
      %v1516 = vpack.c.b16 %v1172, %v1168
      %v1517 = vpack.c.b16 %v1173, %v1169
      %v1518 = vpack.c.b16 %v1174, %v1170
      %v1519 = vpack.c.b16 %v1175, %v1171
      %v1520 = vpack.c.b16 %v1180, %v1176
      %v1521 = vpack.c.b16 %v1181, %v1177
      %v1522 = vpack.c.b16 %v1182, %v1178
      %v1523 = vpack.c.b16 %v1183, %v1179
      %v1524 = vpack.c.b16 %v1188, %v1184
      %v1525 = vpack.c.b16 %v1189, %v1185
      %v1526 = vpack.c.b16 %v1190, %v1186
      %v1527 = vpack.c.b16 %v1191, %v1187
      %v1528 = vpack.c.b16 %v1196, %v1192
      %v1529 = vpack.c.b16 %v1197, %v1193
      %v1530 = vpack.c.b16 %v1198, %v1194
      %v1531 = vpack.c.b16 %v1199, %v1195
      %v1532 = vpack.c.b16 %v1204, %v1200
      %v1533 = vpack.c.b16 %v1205, %v1201
      %v1534 = vpack.c.b16 %v1206, %v1202
      %v1535 = vpack.c.b16 %v1207, %v1203
      %v1536 = vpack.c.b16 %v1212, %v1208
      %v1537 = vpack.c.b16 %v1213, %v1209
      %v1538 = vpack.c.b16 %v1214, %v1210
      %v1539 = vpack.c.b16 %v1215, %v1211
      %v1540 = vpack.c.b16 %v1220, %v1216
      %v1541 = vpack.c.b16 %v1221, %v1217
      %v1542 = vpack.c.b16 %v1222, %v1218
      %v1543 = vpack.c.b16 %v1223, %v1219
      %v1544 = vpack.c.b16 %v1228, %v1224
      %v1545 = vpack.c.b16 %v1229, %v1225
      %v1546 = vpack.c.b16 %v1230, %v1226
      %v1547 = vpack.c.b16 %v1231, %v1227
      %v1548 = vpack.c.b16 %v1236, %v1232
      %v1549 = vpack.c.b16 %v1237, %v1233
      %v1550 = vpack.c.b16 %v1238, %v1234
      %v1551 = vpack.c.b16 %v1239, %v1235
      %v1552 = vpack.c.b16 %v1244, %v1240
      %v1553 = vpack.c.b16 %v1245, %v1241
      %v1554 = vpack.c.b16 %v1246, %v1242
      %v1555 = vpack.c.b16 %v1247, %v1243
      %v1556 = vpack.c.b16 %v1252, %v1248
      %v1557 = vpack.c.b16 %v1253, %v1249
      %v1558 = vpack.c.b16 %v1254, %v1250
      %v1559 = vpack.c.b16 %v1255, %v1251
      %v1560 = vpack.c.b16 %v1260, %v1256
      %v1561 = vpack.c.b16 %v1261, %v1257
      %v1562 = vpack.c.b16 %v1262, %v1258
      %v1563 = vpack.c.b16 %v1263, %v1259
      %v1564 = vpack.c.b16 %v1268, %v1264
      %v1565 = vpack.c.b16 %v1269, %v1265
      %v1566 = vpack.c.b16 %v1270, %v1266
      %v1567 = vpack.c.b16 %v1271, %v1267
      %v1568 = vpack.c.b16 %v1276, %v1272
      %v1569 = vpack.c.b16 %v1277, %v1273
      %v1570 = vpack.c.b16 %v1278, %v1274
      %v1571 = vpack.c.b16 %v1279, %v1275
      %v1572 = vpack.c.b16 %v1284, %v1280
      %v1573 = vpack.c.b16 %v1285, %v1281
      %v1574 = vpack.c.b16 %v1286, %v1282
      %v1575 = vpack.c.b16 %v1287, %v1283
      %v1576 = vpack.c.b16 %v1292, %v1288
      %v1577 = vpack.c.b16 %v1293, %v1289
      %v1578 = vpack.c.b16 %v1294, %v1290
      %v1579 = vpack.c.b16 %v1295, %v1291
      %v1580 = vpack.c.b16 %v1300, %v1296
      %v1581 = vpack.c.b16 %v1301, %v1297
      %v1582 = vpack.c.b16 %v1302, %v1298
      %v1583 = vpack.c.b16 %v1303, %v1299
      %v1584 = vpack.c.b16 %v1308, %v1304
      %v1585 = vpack.c.b16 %v1309, %v1305
      %v1586 = vpack.c.b16 %v1310, %v1306
      %v1587 = vpack.c.b16 %v1311, %v1307
      %v1588 = vpack.c.b16 %v1316, %v1312
      %v1589 = vpack.c.b16 %v1317, %v1313
      %v1590 = vpack.c.b16 %v1318, %v1314
      %v1591 = vpack.c.b16 %v1319, %v1315
      %v1592 = vpack.c.b16 %v1324, %v1320
      %v1593 = vpack.c.b16 %v1325, %v1321
      %v1594 = vpack.c.b16 %v1326, %v1322
      %v1595 = vpack.c.b16 %v1327, %v1323
      %v1596 = vpack.c.b16 %v1332, %v1328
      %v1597 = vpack.c.b16 %v1333, %v1329
      %v1598 = vpack.c.b16 %v1334, %v1330
      %v1599 = vpack.c.b16 %v1335, %v1331
      %v1600 = vpack.c.b16 %v1340, %v1336
      %v1601 = vpack.c.b16 %v1341, %v1337
      %v1602 = vpack.c.b16 %v1342, %v1338
      %v1603 = vpack.c.b16 %v1343, %v1339
      %v1604 = vpack.c.b16 %v1348, %v1344
      %v1605 = vpack.c.b16 %v1349, %v1345
      %v1606 = vpack.c.b16 %v1350, %v1346
      %v1607 = vpack.c.b16 %v1351, %v1347
      %v1608 = vpack.c.b16 %v1356, %v1352
      %v1609 = vpack.c.b16 %v1357, %v1353
      %v1610 = vpack.c.b16 %v1358, %v1354
      %v1611 = vpack.c.b16 %v1359, %v1355
      %v1612 = vpack.c.b16 %v1364, %v1360
      %v1613 = vpack.c.b16 %v1365, %v1361
      %v1614 = vpack.c.b16 %v1366, %v1362
      %v1615 = vpack.c.b16 %v1367, %v1363
      %v1616 = vpack.c.b16 %v1372, %v1368
      %v1617 = vpack.c.b16 %v1373, %v1369
      %v1618 = vpack.c.b16 %v1374, %v1370
      %v1619 = vpack.c.b16 %v1375, %v1371
      %v1620 = vpack.c.b16 %v1380, %v1376
      %v1621 = vpack.c.b16 %v1381, %v1377
      %v1622 = vpack.c.b16 %v1382, %v1378
      %v1623 = vpack.c.b16 %v1383, %v1379
      %v1624 = vpack.c.b16 %v1388, %v1384
      %v1625 = vpack.c.b16 %v1389, %v1385
      %v1626 = vpack.c.b16 %v1390, %v1386
      %v1627 = vpack.c.b16 %v1391, %v1387
      %v1628 = vpack.c.b16 %v1396, %v1392
      %v1629 = vpack.c.b16 %v1397, %v1393
      %v1630 = vpack.c.b16 %v1398, %v1394
      %v1631 = vpack.c.b16 %v1399, %v1395
      %v1632 = vpack.c.b16 %v1404, %v1400
      %v1633 = vpack.c.b16 %v1405, %v1401
      %v1634 = vpack.c.b16 %v1406, %v1402
      %v1635 = vpack.c.b16 %v1407, %v1403
      %v1636 = vpack.c.b16 %v1412, %v1408
      %v1637 = vpack.c.b16 %v1413, %v1409
      %v1638 = vpack.c.b16 %v1414, %v1410
      %v1639 = vpack.c.b16 %v1415, %v1411
      %v1640 = vpack.c.b16 %v1420, %v1416
      %v1641 = vpack.c.b16 %v1421, %v1417
      %v1642 = vpack.c.b16 %v1422, %v1418
      %v1643 = vpack.c.b16 %v1423, %v1419
      %v1644 = vpack.c.b16 %v1428, %v1424
      %v1645 = vpack.c.b16 %v1429, %v1425
      %v1646 = vpack.c.b16 %v1430, %v1426
      %v1647 = vpack.c.b16 %v1431, %v1427
      %v1648 = vpack.c.b16 %v1436, %v1432
      %v1649 = vpack.c.b16 %v1437, %v1433
      %v1650 = vpack.c.b16 %v1438, %v1434
      %v1651 = vpack.c.b16 %v1439, %v1435
      %v1652 = vpack.c.b16 %v1444, %v1440
      %v1653 = vpack.c.b16 %v1445, %v1441
      %v1654 = vpack.c.b16 %v1446, %v1442
      %v1655 = vpack.c.b16 %v1447, %v1443
      %v1656 = vpack.c.b16 %v1452, %v1448
      %v1657 = vpack.c.b16 %v1453, %v1449
      %v1658 = vpack.c.b16 %v1454, %v1450
      %v1659 = vpack.c.b16 %v1455, %v1451
      %v1660 = vpack.c.b16 %v1460, %v1456
      %v1661 = vpack.c.b16 %v1461, %v1457
      %v1662 = vpack.c.b16 %v1462, %v1458
      %v1663 = vpack.c.b16 %v1463, %v1459
      %v1664 = vpack.c.b16 %v1468, %v1464
      %v1665 = vpack.c.b16 %v1469, %v1465
      %v1666 = vpack.c.b16 %v1470, %v1466
      %v1667 = vpack.c.b16 %v1471, %v1467
      %vm1864 = vcmask 130048
      %v1866 = vsel %vm1864, %v572, 0
      %v1869 = vsel %vm1864, %v579, 0
      %v1872 = vsel %vm1864, %v586, 0
      %v1875 = vsel %vm1864, %v593, 0
      %v1878 = vsel %vm1864, %v600, 0
      %v1881 = vsel %vm1864, %v607, 0
      %v1884 = vsel %vm1864, %v614, 0
      %v1887 = vsel %vm1864, %v621, 0
      %v1890 = vsel %vm1864, %v628, 0
      %v1893 = vsel %vm1864, %v635, 0
      %v1896 = vsel %vm1864, %v642, 0
      %v1899 = vsel %vm1864, %v649, 0
      %v1902 = vsel %vm1864, %v656, 0
      %v1905 = vsel %vm1864, %v663, 0
      %v1908 = vsel %vm1864, %v670, 0
      %v1911 = vsel %vm1864, %v677, 0
      %1913 = vmatpush.bf16.msra.mxu0 %v1500
      %1914 = vmatpush.bf16.msra.mxu0 %v1496
      %1915 = vmatpush.bf16.msra.mxu0 %v1492
      %1916 = vmatpush.bf16.msra.mxu0 %v1488
      %1917 = vmatpush.bf16.msra.mxu0 %v1484
      %1918 = vmatpush.bf16.msra.mxu0 %v1480
      %1919 = vmatpush.bf16.msra.mxu0 %v1476
      %1920 = vmatpush.bf16.msra.mxu0 %v1472
      %1921 = vmatmul.bf16.gmra.mxu0 %v566
      %v1922 = vpop.f32.mrf.mxu0
      %v1923 = vadd.f32 %v876, %v1922
      %v1924 = vpop.f32.mrf.mxu0
      %v1925 = vadd.f32 %v876, %v1924
      %1926 = vmatmul.bf16.gmra.mxu0 %v573
      %v1927 = vpop.f32.mrf.mxu0
      %v1928 = vadd.f32 %v876, %v1927
      %v1929 = vpop.f32.mrf.mxu0
      %v1930 = vadd.f32 %v876, %v1929
      %1931 = vmatmul.bf16.gmra.mxu0 %v580
      %v1932 = vpop.f32.mrf.mxu0
      %v1933 = vadd.f32 %v876, %v1932
      %v1934 = vpop.f32.mrf.mxu0
      %v1935 = vadd.f32 %v876, %v1934
      %1936 = vmatmul.bf16.gmra.mxu0 %v587
      %v1937 = vpop.f32.mrf.mxu0
      %v1938 = vadd.f32 %v876, %v1937
      %v1939 = vpop.f32.mrf.mxu0
      %v1940 = vadd.f32 %v876, %v1939
      %1941 = vmatmul.bf16.gmra.mxu0 %v594
      %v1942 = vpop.f32.mrf.mxu0
      %v1943 = vadd.f32 %v876, %v1942
      %v1944 = vpop.f32.mrf.mxu0
      %v1945 = vadd.f32 %v876, %v1944
      %1946 = vmatmul.bf16.gmra.mxu0 %v601
      %v1947 = vpop.f32.mrf.mxu0
      %v1948 = vadd.f32 %v876, %v1947
      %v1949 = vpop.f32.mrf.mxu0
      %v1950 = vadd.f32 %v876, %v1949
      %1951 = vmatmul.bf16.gmra.mxu0 %v608
      %v1952 = vpop.f32.mrf.mxu0
      %v1953 = vadd.f32 %v876, %v1952
      %v1954 = vpop.f32.mrf.mxu0
      %v1955 = vadd.f32 %v876, %v1954
      %1956 = vmatmul.bf16.gmra.mxu0 %v615
      %v1957 = vpop.f32.mrf.mxu0
      %v1958 = vadd.f32 %v876, %v1957
      %v1959 = vpop.f32.mrf.mxu0
      %v1960 = vadd.f32 %v876, %v1959
      %1961 = vmatmul.bf16.gmra.mxu0 %v622
      %v1962 = vpop.f32.mrf.mxu0
      %v1963 = vadd.f32 %v876, %v1962
      %v1964 = vpop.f32.mrf.mxu0
      %v1965 = vadd.f32 %v876, %v1964
      %1966 = vmatmul.bf16.gmra.mxu0 %v629
      %v1967 = vpop.f32.mrf.mxu0
      %v1968 = vadd.f32 %v876, %v1967
      %v1969 = vpop.f32.mrf.mxu0
      %v1970 = vadd.f32 %v876, %v1969
      %1971 = vmatmul.bf16.gmra.mxu0 %v636
      %v1972 = vpop.f32.mrf.mxu0
      %v1973 = vadd.f32 %v876, %v1972
      %v1974 = vpop.f32.mrf.mxu0
      %v1975 = vadd.f32 %v876, %v1974
      %1976 = vmatmul.bf16.gmra.mxu0 %v643
      %v1977 = vpop.f32.mrf.mxu0
      %v1978 = vadd.f32 %v876, %v1977
      %v1979 = vpop.f32.mrf.mxu0
      %v1980 = vadd.f32 %v876, %v1979
      %1981 = vmatmul.bf16.gmra.mxu0 %v650
      %v1982 = vpop.f32.mrf.mxu0
      %v1983 = vadd.f32 %v876, %v1982
      %v1984 = vpop.f32.mrf.mxu0
      %v1985 = vadd.f32 %v876, %v1984
      %1986 = vmatmul.bf16.gmra.mxu0 %v657
      %v1987 = vpop.f32.mrf.mxu0
      %v1988 = vadd.f32 %v876, %v1987
      %v1989 = vpop.f32.mrf.mxu0
      %v1990 = vadd.f32 %v876, %v1989
      %1991 = vmatmul.bf16.gmra.mxu0 %v664
      %v1992 = vpop.f32.mrf.mxu0
      %v1993 = vadd.f32 %v876, %v1992
      %v1994 = vpop.f32.mrf.mxu0
      %v1995 = vadd.f32 %v876, %v1994
      %1996 = vmatmul.bf16.gmra.mxu0 %v671
      %v1997 = vpop.f32.mrf.mxu0
      %v1998 = vadd.f32 %v876, %v1997
      %v1999 = vpop.f32.mrf.mxu0
      %v2000 = vadd.f32 %v876, %v1999
      %2001 = vdwg.mxu0
      %2002 = vmatpush.bf16.msra.mxu0 %v1532
      %2003 = vmatpush.bf16.msra.mxu0 %v1528
      %2004 = vmatpush.bf16.msra.mxu0 %v1524
      %2005 = vmatpush.bf16.msra.mxu0 %v1520
      %2006 = vmatpush.bf16.msra.mxu0 %v1516
      %2007 = vmatpush.bf16.msra.mxu0 %v1512
      %2008 = vmatpush.bf16.msra.mxu0 %v1508
      %2009 = vmatpush.bf16.msra.mxu0 %v1504
      %2010 = vmatmul.bf16.gmra.mxu0 %v567
      %v2011 = vpop.f32.mrf.mxu0
      %v2012 = vadd.f32 %v1923, %v2011
      %v2013 = vpop.f32.mrf.mxu0
      %v2014 = vadd.f32 %v1925, %v2013
      %2015 = vmatmul.bf16.gmra.mxu0 %v574
      %v2016 = vpop.f32.mrf.mxu0
      %v2017 = vadd.f32 %v1928, %v2016
      %v2018 = vpop.f32.mrf.mxu0
      %v2019 = vadd.f32 %v1930, %v2018
      %2020 = vmatmul.bf16.gmra.mxu0 %v581
      %v2021 = vpop.f32.mrf.mxu0
      %v2022 = vadd.f32 %v1933, %v2021
      %v2023 = vpop.f32.mrf.mxu0
      %v2024 = vadd.f32 %v1935, %v2023
      %2025 = vmatmul.bf16.gmra.mxu0 %v588
      %v2026 = vpop.f32.mrf.mxu0
      %v2027 = vadd.f32 %v1938, %v2026
      %v2028 = vpop.f32.mrf.mxu0
      %v2029 = vadd.f32 %v1940, %v2028
      %2030 = vmatmul.bf16.gmra.mxu0 %v595
      %v2031 = vpop.f32.mrf.mxu0
      %v2032 = vadd.f32 %v1943, %v2031
      %v2033 = vpop.f32.mrf.mxu0
      %v2034 = vadd.f32 %v1945, %v2033
      %2035 = vmatmul.bf16.gmra.mxu0 %v602
      %v2036 = vpop.f32.mrf.mxu0
      %v2037 = vadd.f32 %v1948, %v2036
      %v2038 = vpop.f32.mrf.mxu0
      %v2039 = vadd.f32 %v1950, %v2038
      %2040 = vmatmul.bf16.gmra.mxu0 %v609
      %v2041 = vpop.f32.mrf.mxu0
      %v2042 = vadd.f32 %v1953, %v2041
      %v2043 = vpop.f32.mrf.mxu0
      %v2044 = vadd.f32 %v1955, %v2043
      %2045 = vmatmul.bf16.gmra.mxu0 %v616
      %v2046 = vpop.f32.mrf.mxu0
      %v2047 = vadd.f32 %v1958, %v2046
      %v2048 = vpop.f32.mrf.mxu0
      %v2049 = vadd.f32 %v1960, %v2048
      %2050 = vmatmul.bf16.gmra.mxu0 %v623
      %v2051 = vpop.f32.mrf.mxu0
      %v2052 = vadd.f32 %v1963, %v2051
      %v2053 = vpop.f32.mrf.mxu0
      %v2054 = vadd.f32 %v1965, %v2053
      %2055 = vmatmul.bf16.gmra.mxu0 %v630
      %v2056 = vpop.f32.mrf.mxu0
      %v2057 = vadd.f32 %v1968, %v2056
      %v2058 = vpop.f32.mrf.mxu0
      %v2059 = vadd.f32 %v1970, %v2058
      %2060 = vmatmul.bf16.gmra.mxu0 %v637
      %v2061 = vpop.f32.mrf.mxu0
      %v2062 = vadd.f32 %v1973, %v2061
      %v2063 = vpop.f32.mrf.mxu0
      %v2064 = vadd.f32 %v1975, %v2063
      %2065 = vmatmul.bf16.gmra.mxu0 %v644
      %v2066 = vpop.f32.mrf.mxu0
      %v2067 = vadd.f32 %v1978, %v2066
      %v2068 = vpop.f32.mrf.mxu0
      %v2069 = vadd.f32 %v1980, %v2068
      %2070 = vmatmul.bf16.gmra.mxu0 %v651
      %v2071 = vpop.f32.mrf.mxu0
      %v2072 = vadd.f32 %v1983, %v2071
      %v2073 = vpop.f32.mrf.mxu0
      %v2074 = vadd.f32 %v1985, %v2073
      %2075 = vmatmul.bf16.gmra.mxu0 %v658
      %v2076 = vpop.f32.mrf.mxu0
      %v2077 = vadd.f32 %v1988, %v2076
      %v2078 = vpop.f32.mrf.mxu0
      %v2079 = vadd.f32 %v1990, %v2078
      %2080 = vmatmul.bf16.gmra.mxu0 %v665
      %v2081 = vpop.f32.mrf.mxu0
      %v2082 = vadd.f32 %v1993, %v2081
      %v2083 = vpop.f32.mrf.mxu0
      %v2084 = vadd.f32 %v1995, %v2083
      %2085 = vmatmul.bf16.gmra.mxu0 %v672
      %v2086 = vpop.f32.mrf.mxu0
      %v2087 = vadd.f32 %v1998, %v2086
      %v2088 = vpop.f32.mrf.mxu0
      %v2089 = vadd.f32 %v2000, %v2088
      %2090 = vdwg.mxu0
      %2091 = vmatpush.bf16.msra.mxu0 %v1564
      %2092 = vmatpush.bf16.msra.mxu0 %v1560
      %2093 = vmatpush.bf16.msra.mxu0 %v1556
      %2094 = vmatpush.bf16.msra.mxu0 %v1552
      %2095 = vmatpush.bf16.msra.mxu0 %v1548
      %2096 = vmatpush.bf16.msra.mxu0 %v1544
      %2097 = vmatpush.bf16.msra.mxu0 %v1540
      %2098 = vmatpush.bf16.msra.mxu0 %v1536
      %2099 = vmatmul.bf16.gmra.mxu0 %v568
      %v2100 = vpop.f32.mrf.mxu0
      %v2101 = vadd.f32 %v2012, %v2100
      %v2102 = vpop.f32.mrf.mxu0
      %v2103 = vadd.f32 %v2014, %v2102
      %2104 = vmatmul.bf16.gmra.mxu0 %v575
      %v2105 = vpop.f32.mrf.mxu0
      %v2106 = vadd.f32 %v2017, %v2105
      %v2107 = vpop.f32.mrf.mxu0
      %v2108 = vadd.f32 %v2019, %v2107
      %2109 = vmatmul.bf16.gmra.mxu0 %v582
      %v2110 = vpop.f32.mrf.mxu0
      %v2111 = vadd.f32 %v2022, %v2110
      %v2112 = vpop.f32.mrf.mxu0
      %v2113 = vadd.f32 %v2024, %v2112
      %2114 = vmatmul.bf16.gmra.mxu0 %v589
      %v2115 = vpop.f32.mrf.mxu0
      %v2116 = vadd.f32 %v2027, %v2115
      %v2117 = vpop.f32.mrf.mxu0
      %v2118 = vadd.f32 %v2029, %v2117
      %2119 = vmatmul.bf16.gmra.mxu0 %v596
      %v2120 = vpop.f32.mrf.mxu0
      %v2121 = vadd.f32 %v2032, %v2120
      %v2122 = vpop.f32.mrf.mxu0
      %v2123 = vadd.f32 %v2034, %v2122
      %2124 = vmatmul.bf16.gmra.mxu0 %v603
      %v2125 = vpop.f32.mrf.mxu0
      %v2126 = vadd.f32 %v2037, %v2125
      %v2127 = vpop.f32.mrf.mxu0
      %v2128 = vadd.f32 %v2039, %v2127
      %2129 = vmatmul.bf16.gmra.mxu0 %v610
      %v2130 = vpop.f32.mrf.mxu0
      %v2131 = vadd.f32 %v2042, %v2130
      %v2132 = vpop.f32.mrf.mxu0
      %v2133 = vadd.f32 %v2044, %v2132
      %2134 = vmatmul.bf16.gmra.mxu0 %v617
      %v2135 = vpop.f32.mrf.mxu0
      %v2136 = vadd.f32 %v2047, %v2135
      %v2137 = vpop.f32.mrf.mxu0
      %v2138 = vadd.f32 %v2049, %v2137
      %2139 = vmatmul.bf16.gmra.mxu0 %v624
      %v2140 = vpop.f32.mrf.mxu0
      %v2141 = vadd.f32 %v2052, %v2140
      %v2142 = vpop.f32.mrf.mxu0
      %v2143 = vadd.f32 %v2054, %v2142
      %2144 = vmatmul.bf16.gmra.mxu0 %v631
      %v2145 = vpop.f32.mrf.mxu0
      %v2146 = vadd.f32 %v2057, %v2145
      %v2147 = vpop.f32.mrf.mxu0
      %v2148 = vadd.f32 %v2059, %v2147
      %2149 = vmatmul.bf16.gmra.mxu0 %v638
      %v2150 = vpop.f32.mrf.mxu0
      %v2151 = vadd.f32 %v2062, %v2150
      %v2152 = vpop.f32.mrf.mxu0
      %v2153 = vadd.f32 %v2064, %v2152
      %2154 = vmatmul.bf16.gmra.mxu0 %v645
      %v2155 = vpop.f32.mrf.mxu0
      %v2156 = vadd.f32 %v2067, %v2155
      %v2157 = vpop.f32.mrf.mxu0
      %v2158 = vadd.f32 %v2069, %v2157
      %2159 = vmatmul.bf16.gmra.mxu0 %v652
      %v2160 = vpop.f32.mrf.mxu0
      %v2161 = vadd.f32 %v2072, %v2160
      %v2162 = vpop.f32.mrf.mxu0
      %v2163 = vadd.f32 %v2074, %v2162
      %2164 = vmatmul.bf16.gmra.mxu0 %v659
      %v2165 = vpop.f32.mrf.mxu0
      %v2166 = vadd.f32 %v2077, %v2165
      %v2167 = vpop.f32.mrf.mxu0
      %v2168 = vadd.f32 %v2079, %v2167
      %2169 = vmatmul.bf16.gmra.mxu0 %v666
      %v2170 = vpop.f32.mrf.mxu0
      %v2171 = vadd.f32 %v2082, %v2170
      %v2172 = vpop.f32.mrf.mxu0
      %v2173 = vadd.f32 %v2084, %v2172
      %2174 = vmatmul.bf16.gmra.mxu0 %v673
      %v2175 = vpop.f32.mrf.mxu0
      %v2176 = vadd.f32 %v2087, %v2175
      %v2177 = vpop.f32.mrf.mxu0
      %v2178 = vadd.f32 %v2089, %v2177
      %2179 = vdwg.mxu0
      %2180 = vmatpush.bf16.msra.mxu0 %v1596
      %2181 = vmatpush.bf16.msra.mxu0 %v1592
      %2182 = vmatpush.bf16.msra.mxu0 %v1588
      %2183 = vmatpush.bf16.msra.mxu0 %v1584
      %2184 = vmatpush.bf16.msra.mxu0 %v1580
      %2185 = vmatpush.bf16.msra.mxu0 %v1576
      %2186 = vmatpush.bf16.msra.mxu0 %v1572
      %2187 = vmatpush.bf16.msra.mxu0 %v1568
      %2188 = vmatmul.bf16.gmra.mxu0 %v569
      %v2189 = vpop.f32.mrf.mxu0
      %v2190 = vadd.f32 %v2101, %v2189
      %v2191 = vpop.f32.mrf.mxu0
      %v2192 = vadd.f32 %v2103, %v2191
      %2193 = vmatmul.bf16.gmra.mxu0 %v576
      %v2194 = vpop.f32.mrf.mxu0
      %v2195 = vadd.f32 %v2106, %v2194
      %v2196 = vpop.f32.mrf.mxu0
      %v2197 = vadd.f32 %v2108, %v2196
      %2198 = vmatmul.bf16.gmra.mxu0 %v583
      %v2199 = vpop.f32.mrf.mxu0
      %v2200 = vadd.f32 %v2111, %v2199
      %v2201 = vpop.f32.mrf.mxu0
      %v2202 = vadd.f32 %v2113, %v2201
      %2203 = vmatmul.bf16.gmra.mxu0 %v590
      %v2204 = vpop.f32.mrf.mxu0
      %v2205 = vadd.f32 %v2116, %v2204
      %v2206 = vpop.f32.mrf.mxu0
      %v2207 = vadd.f32 %v2118, %v2206
      %2208 = vmatmul.bf16.gmra.mxu0 %v597
      %v2209 = vpop.f32.mrf.mxu0
      %v2210 = vadd.f32 %v2121, %v2209
      %v2211 = vpop.f32.mrf.mxu0
      %v2212 = vadd.f32 %v2123, %v2211
      %2213 = vmatmul.bf16.gmra.mxu0 %v604
      %v2214 = vpop.f32.mrf.mxu0
      %v2215 = vadd.f32 %v2126, %v2214
      %v2216 = vpop.f32.mrf.mxu0
      %v2217 = vadd.f32 %v2128, %v2216
      %2218 = vmatmul.bf16.gmra.mxu0 %v611
      %v2219 = vpop.f32.mrf.mxu0
      %v2220 = vadd.f32 %v2131, %v2219
      %v2221 = vpop.f32.mrf.mxu0
      %v2222 = vadd.f32 %v2133, %v2221
      %2223 = vmatmul.bf16.gmra.mxu0 %v618
      %v2224 = vpop.f32.mrf.mxu0
      %v2225 = vadd.f32 %v2136, %v2224
      %v2226 = vpop.f32.mrf.mxu0
      %v2227 = vadd.f32 %v2138, %v2226
      %2228 = vmatmul.bf16.gmra.mxu0 %v625
      %v2229 = vpop.f32.mrf.mxu0
      %v2230 = vadd.f32 %v2141, %v2229
      %v2231 = vpop.f32.mrf.mxu0
      %v2232 = vadd.f32 %v2143, %v2231
      %2233 = vmatmul.bf16.gmra.mxu0 %v632
      %v2234 = vpop.f32.mrf.mxu0
      %v2235 = vadd.f32 %v2146, %v2234
      %v2236 = vpop.f32.mrf.mxu0
      %v2237 = vadd.f32 %v2148, %v2236
      %2238 = vmatmul.bf16.gmra.mxu0 %v639
      %v2239 = vpop.f32.mrf.mxu0
      %v2240 = vadd.f32 %v2151, %v2239
      %v2241 = vpop.f32.mrf.mxu0
      %v2242 = vadd.f32 %v2153, %v2241
      %2243 = vmatmul.bf16.gmra.mxu0 %v646
      %v2244 = vpop.f32.mrf.mxu0
      %v2245 = vadd.f32 %v2156, %v2244
      %v2246 = vpop.f32.mrf.mxu0
      %v2247 = vadd.f32 %v2158, %v2246
      %2248 = vmatmul.bf16.gmra.mxu0 %v653
      %v2249 = vpop.f32.mrf.mxu0
      %v2250 = vadd.f32 %v2161, %v2249
      %v2251 = vpop.f32.mrf.mxu0
      %v2252 = vadd.f32 %v2163, %v2251
      %2253 = vmatmul.bf16.gmra.mxu0 %v660
      %v2254 = vpop.f32.mrf.mxu0
      %v2255 = vadd.f32 %v2166, %v2254
      %v2256 = vpop.f32.mrf.mxu0
      %v2257 = vadd.f32 %v2168, %v2256
      %2258 = vmatmul.bf16.gmra.mxu0 %v667
      %v2259 = vpop.f32.mrf.mxu0
      %v2260 = vadd.f32 %v2171, %v2259
      %v2261 = vpop.f32.mrf.mxu0
      %v2262 = vadd.f32 %v2173, %v2261
      %2263 = vmatmul.bf16.gmra.mxu0 %v674
      %v2264 = vpop.f32.mrf.mxu0
      %v2265 = vadd.f32 %v2176, %v2264
      %v2266 = vpop.f32.mrf.mxu0
      %v2267 = vadd.f32 %v2178, %v2266
      %2268 = vdwg.mxu0
      %2269 = vmatpush.bf16.msra.mxu0 %v1628
      %2270 = vmatpush.bf16.msra.mxu0 %v1624
      %2271 = vmatpush.bf16.msra.mxu0 %v1620
      %2272 = vmatpush.bf16.msra.mxu0 %v1616
      %2273 = vmatpush.bf16.msra.mxu0 %v1612
      %2274 = vmatpush.bf16.msra.mxu0 %v1608
      %2275 = vmatpush.bf16.msra.mxu0 %v1604
      %2276 = vmatpush.bf16.msra.mxu0 %v1600
      %2277 = vmatmul.bf16.gmra.mxu0 %v570
      %v2278 = vpop.f32.mrf.mxu0
      %v2279 = vadd.f32 %v2190, %v2278
      %v2280 = vpop.f32.mrf.mxu0
      %v2281 = vadd.f32 %v2192, %v2280
      %2282 = vmatmul.bf16.gmra.mxu0 %v577
      %v2283 = vpop.f32.mrf.mxu0
      %v2284 = vadd.f32 %v2195, %v2283
      %v2285 = vpop.f32.mrf.mxu0
      %v2286 = vadd.f32 %v2197, %v2285
      %2287 = vmatmul.bf16.gmra.mxu0 %v584
      %v2288 = vpop.f32.mrf.mxu0
      %v2289 = vadd.f32 %v2200, %v2288
      %v2290 = vpop.f32.mrf.mxu0
      %v2291 = vadd.f32 %v2202, %v2290
      %2292 = vmatmul.bf16.gmra.mxu0 %v591
      %v2293 = vpop.f32.mrf.mxu0
      %v2294 = vadd.f32 %v2205, %v2293
      %v2295 = vpop.f32.mrf.mxu0
      %v2296 = vadd.f32 %v2207, %v2295
      %2297 = vmatmul.bf16.gmra.mxu0 %v598
      %v2298 = vpop.f32.mrf.mxu0
      %v2299 = vadd.f32 %v2210, %v2298
      %v2300 = vpop.f32.mrf.mxu0
      %v2301 = vadd.f32 %v2212, %v2300
      %2302 = vmatmul.bf16.gmra.mxu0 %v605
      %v2303 = vpop.f32.mrf.mxu0
      %v2304 = vadd.f32 %v2215, %v2303
      %v2305 = vpop.f32.mrf.mxu0
      %v2306 = vadd.f32 %v2217, %v2305
      %2307 = vmatmul.bf16.gmra.mxu0 %v612
      %v2308 = vpop.f32.mrf.mxu0
      %v2309 = vadd.f32 %v2220, %v2308
      %v2310 = vpop.f32.mrf.mxu0
      %v2311 = vadd.f32 %v2222, %v2310
      %2312 = vmatmul.bf16.gmra.mxu0 %v619
      %v2313 = vpop.f32.mrf.mxu0
      %v2314 = vadd.f32 %v2225, %v2313
      %v2315 = vpop.f32.mrf.mxu0
      %v2316 = vadd.f32 %v2227, %v2315
      %2317 = vmatmul.bf16.gmra.mxu0 %v626
      %v2318 = vpop.f32.mrf.mxu0
      %v2319 = vadd.f32 %v2230, %v2318
      %v2320 = vpop.f32.mrf.mxu0
      %v2321 = vadd.f32 %v2232, %v2320
      %2322 = vmatmul.bf16.gmra.mxu0 %v633
      %v2323 = vpop.f32.mrf.mxu0
      %v2324 = vadd.f32 %v2235, %v2323
      %v2325 = vpop.f32.mrf.mxu0
      %v2326 = vadd.f32 %v2237, %v2325
      %2327 = vmatmul.bf16.gmra.mxu0 %v640
      %v2328 = vpop.f32.mrf.mxu0
      %v2329 = vadd.f32 %v2240, %v2328
      %v2330 = vpop.f32.mrf.mxu0
      %v2331 = vadd.f32 %v2242, %v2330
      %2332 = vmatmul.bf16.gmra.mxu0 %v647
      %v2333 = vpop.f32.mrf.mxu0
      %v2334 = vadd.f32 %v2245, %v2333
      %v2335 = vpop.f32.mrf.mxu0
      %v2336 = vadd.f32 %v2247, %v2335
      %2337 = vmatmul.bf16.gmra.mxu0 %v654
      %v2338 = vpop.f32.mrf.mxu0
      %v2339 = vadd.f32 %v2250, %v2338
      %v2340 = vpop.f32.mrf.mxu0
      %v2341 = vadd.f32 %v2252, %v2340
      %2342 = vmatmul.bf16.gmra.mxu0 %v661
      %v2343 = vpop.f32.mrf.mxu0
      %v2344 = vadd.f32 %v2255, %v2343
      %v2345 = vpop.f32.mrf.mxu0
      %v2346 = vadd.f32 %v2257, %v2345
      %2347 = vmatmul.bf16.gmra.mxu0 %v668
      %v2348 = vpop.f32.mrf.mxu0
      %v2349 = vadd.f32 %v2260, %v2348
      %v2350 = vpop.f32.mrf.mxu0
      %v2351 = vadd.f32 %v2262, %v2350
      %2352 = vmatmul.bf16.gmra.mxu0 %v675
      %v2353 = vpop.f32.mrf.mxu0
      %v2354 = vadd.f32 %v2265, %v2353
      %v2355 = vpop.f32.mrf.mxu0
      %v2356 = vadd.f32 %v2267, %v2355
      %2357 = vdwg.mxu0
      %2358 = vmatpush.bf16.msra.mxu0 %v1660
      %2359 = vmatpush.bf16.msra.mxu0 %v1656
      %2360 = vmatpush.bf16.msra.mxu0 %v1652
      %2361 = vmatpush.bf16.msra.mxu0 %v1648
      %2362 = vmatpush.bf16.msra.mxu0 %v1644
      %2363 = vmatpush.bf16.msra.mxu0 %v1640
      %2364 = vmatpush.bf16.msra.mxu0 %v1636
      %2365 = vmatpush.bf16.msra.mxu0 %v1632
      %2366 = vmatmul.bf16.gmra.mxu0 %v571
      %v2367 = vpop.f32.mrf.mxu0
      %v2368 = vadd.f32 %v2279, %v2367
      %v2369 = vpop.f32.mrf.mxu0
      %v2370 = vadd.f32 %v2281, %v2369
      %2371 = vmatmul.bf16.gmra.mxu0 %v578
      %v2372 = vpop.f32.mrf.mxu0
      %v2373 = vadd.f32 %v2284, %v2372
      %v2374 = vpop.f32.mrf.mxu0
      %v2375 = vadd.f32 %v2286, %v2374
      %2376 = vmatmul.bf16.gmra.mxu0 %v585
      %v2377 = vpop.f32.mrf.mxu0
      %v2378 = vadd.f32 %v2289, %v2377
      %v2379 = vpop.f32.mrf.mxu0
      %v2380 = vadd.f32 %v2291, %v2379
      %2381 = vmatmul.bf16.gmra.mxu0 %v592
      %v2382 = vpop.f32.mrf.mxu0
      %v2383 = vadd.f32 %v2294, %v2382
      %v2384 = vpop.f32.mrf.mxu0
      %v2385 = vadd.f32 %v2296, %v2384
      %2386 = vmatmul.bf16.gmra.mxu0 %v599
      %v2387 = vpop.f32.mrf.mxu0
      %v2388 = vadd.f32 %v2299, %v2387
      %v2389 = vpop.f32.mrf.mxu0
      %v2390 = vadd.f32 %v2301, %v2389
      %2391 = vmatmul.bf16.gmra.mxu0 %v606
      %v2392 = vpop.f32.mrf.mxu0
      %v2393 = vadd.f32 %v2304, %v2392
      %v2394 = vpop.f32.mrf.mxu0
      %v2395 = vadd.f32 %v2306, %v2394
      %2396 = vmatmul.bf16.gmra.mxu0 %v613
      %v2397 = vpop.f32.mrf.mxu0
      %v2398 = vadd.f32 %v2309, %v2397
      %v2399 = vpop.f32.mrf.mxu0
      %v2400 = vadd.f32 %v2311, %v2399
      %2401 = vmatmul.bf16.gmra.mxu0 %v620
      %v2402 = vpop.f32.mrf.mxu0
      %v2403 = vadd.f32 %v2314, %v2402
      %v2404 = vpop.f32.mrf.mxu0
      %v2405 = vadd.f32 %v2316, %v2404
      %2406 = vmatmul.bf16.gmra.mxu0 %v627
      %v2407 = vpop.f32.mrf.mxu0
      %v2408 = vadd.f32 %v2319, %v2407
      %v2409 = vpop.f32.mrf.mxu0
      %v2410 = vadd.f32 %v2321, %v2409
      %2411 = vmatmul.bf16.gmra.mxu0 %v634
      %v2412 = vpop.f32.mrf.mxu0
      %v2413 = vadd.f32 %v2324, %v2412
      %v2414 = vpop.f32.mrf.mxu0
      %v2415 = vadd.f32 %v2326, %v2414
      %2416 = vmatmul.bf16.gmra.mxu0 %v641
      %v2417 = vpop.f32.mrf.mxu0
      %v2418 = vadd.f32 %v2329, %v2417
      %v2419 = vpop.f32.mrf.mxu0
      %v2420 = vadd.f32 %v2331, %v2419
      %2421 = vmatmul.bf16.gmra.mxu0 %v648
      %v2422 = vpop.f32.mrf.mxu0
      %v2423 = vadd.f32 %v2334, %v2422
      %v2424 = vpop.f32.mrf.mxu0
      %v2425 = vadd.f32 %v2336, %v2424
      %2426 = vmatmul.bf16.gmra.mxu0 %v655
      %v2427 = vpop.f32.mrf.mxu0
      %v2428 = vadd.f32 %v2339, %v2427
      %v2429 = vpop.f32.mrf.mxu0
      %v2430 = vadd.f32 %v2341, %v2429
      %2431 = vmatmul.bf16.gmra.mxu0 %v662
      %v2432 = vpop.f32.mrf.mxu0
      %v2433 = vadd.f32 %v2344, %v2432
      %v2434 = vpop.f32.mrf.mxu0
      %v2435 = vadd.f32 %v2346, %v2434
      %2436 = vmatmul.bf16.gmra.mxu0 %v669
      %v2437 = vpop.f32.mrf.mxu0
      %v2438 = vadd.f32 %v2349, %v2437
      %v2439 = vpop.f32.mrf.mxu0
      %v2440 = vadd.f32 %v2351, %v2439
      %2441 = vmatmul.bf16.gmra.mxu0 %v676
      %v2442 = vpop.f32.mrf.mxu0
      %v2443 = vadd.f32 %v2354, %v2442
      %v2444 = vpop.f32.mrf.mxu0
      %v2445 = vadd.f32 %v2356, %v2444
      %2446 = vdwg.mxu0
      %2447 = vmatpush.bf16.msra.mxu0 0
      %2448 = vmatpush.bf16.msra.mxu0 0
      %2449 = vmatpush.bf16.msra.mxu0 0
      %2450 = vmatpush.bf16.msra.mxu0 0
      %2451 = vmatpush.bf16.msra.mxu0 0
      %2452 = vmatpush.bf16.msra.mxu0 0
      %2453 = vmatpush.bf16.msra.mxu0 0
      %2454 = vmatpush.bf16.msra.mxu0 %v1664
      %2455 = vmatmul.bf16.gmra.mxu0 %v1866
      %v2456 = vpop.f32.mrf.mxu0
      %v2457 = vadd.f32 %v2368, %v2456
      %v2458 = vpop.f32.mrf.mxu0
      %v2459 = vadd.f32 %v2370, %v2458
      %2460 = vmatmul.bf16.gmra.mxu0 %v1869
      %v2461 = vpop.f32.mrf.mxu0
      %v2462 = vadd.f32 %v2373, %v2461
      %v2463 = vpop.f32.mrf.mxu0
      %v2464 = vadd.f32 %v2375, %v2463
      %2465 = vmatmul.bf16.gmra.mxu0 %v1872
      %v2466 = vpop.f32.mrf.mxu0
      %v2467 = vadd.f32 %v2378, %v2466
      %v2468 = vpop.f32.mrf.mxu0
      %v2469 = vadd.f32 %v2380, %v2468
      %2470 = vmatmul.bf16.gmra.mxu0 %v1875
      %v2471 = vpop.f32.mrf.mxu0
      %v2472 = vadd.f32 %v2383, %v2471
      %v2473 = vpop.f32.mrf.mxu0
      %v2474 = vadd.f32 %v2385, %v2473
      %2475 = vmatmul.bf16.gmra.mxu0 %v1878
      %v2476 = vpop.f32.mrf.mxu0
      %v2477 = vadd.f32 %v2388, %v2476
      %v2478 = vpop.f32.mrf.mxu0
      %v2479 = vadd.f32 %v2390, %v2478
      %2480 = vmatmul.bf16.gmra.mxu0 %v1881
      %v2481 = vpop.f32.mrf.mxu0
      %v2482 = vadd.f32 %v2393, %v2481
      %v2483 = vpop.f32.mrf.mxu0
      %v2484 = vadd.f32 %v2395, %v2483
      %2485 = vmatmul.bf16.gmra.mxu0 %v1884
      %v2486 = vpop.f32.mrf.mxu0
      %v2487 = vadd.f32 %v2398, %v2486
      %v2488 = vpop.f32.mrf.mxu0
      %v2489 = vadd.f32 %v2400, %v2488
      %2490 = vmatmul.bf16.gmra.mxu0 %v1887
      %v2491 = vpop.f32.mrf.mxu0
      %v2492 = vadd.f32 %v2403, %v2491
      %v2493 = vpop.f32.mrf.mxu0
      %v2494 = vadd.f32 %v2405, %v2493
      %2495 = vmatmul.bf16.gmra.mxu0 %v1890
      %v2496 = vpop.f32.mrf.mxu0
      %v2497 = vadd.f32 %v2408, %v2496
      %v2498 = vpop.f32.mrf.mxu0
      %v2499 = vadd.f32 %v2410, %v2498
      %2500 = vmatmul.bf16.gmra.mxu0 %v1893
      %v2501 = vpop.f32.mrf.mxu0
      %v2502 = vadd.f32 %v2413, %v2501
      %v2503 = vpop.f32.mrf.mxu0
      %v2504 = vadd.f32 %v2415, %v2503
      %2505 = vmatmul.bf16.gmra.mxu0 %v1896
      %v2506 = vpop.f32.mrf.mxu0
      %v2507 = vadd.f32 %v2418, %v2506
      %v2508 = vpop.f32.mrf.mxu0
      %v2509 = vadd.f32 %v2420, %v2508
      %2510 = vmatmul.bf16.gmra.mxu0 %v1899
      %v2511 = vpop.f32.mrf.mxu0
      %v2512 = vadd.f32 %v2423, %v2511
      %v2513 = vpop.f32.mrf.mxu0
      %v2514 = vadd.f32 %v2425, %v2513
      %2515 = vmatmul.bf16.gmra.mxu0 %v1902
      %v2516 = vpop.f32.mrf.mxu0
      %v2517 = vadd.f32 %v2428, %v2516
      %v2518 = vpop.f32.mrf.mxu0
      %v2519 = vadd.f32 %v2430, %v2518
      %2520 = vmatmul.bf16.gmra.mxu0 %v1905
      %v2521 = vpop.f32.mrf.mxu0
      %v2522 = vadd.f32 %v2433, %v2521
      %v2523 = vpop.f32.mrf.mxu0
      %v2524 = vadd.f32 %v2435, %v2523
      %2525 = vmatmul.bf16.gmra.mxu0 %v1908
      %v2526 = vpop.f32.mrf.mxu0
      %v2527 = vadd.f32 %v2438, %v2526
      %v2528 = vpop.f32.mrf.mxu0
      %v2529 = vadd.f32 %v2440, %v2528
      %2530 = vmatmul.bf16.gmra.mxu0 %v1911
      %v2531 = vpop.f32.mrf.mxu0
      %v2532 = vadd.f32 %v2443, %v2531
      %v2533 = vpop.f32.mrf.mxu0
      %v2534 = vadd.f32 %v2445, %v2533
      %2535 = vdwg.mxu0
      %2536 = vmatpush.bf16.msra.mxu0 %v1501
      %2537 = vmatpush.bf16.msra.mxu0 %v1497
      %2538 = vmatpush.bf16.msra.mxu0 %v1493
      %2539 = vmatpush.bf16.msra.mxu0 %v1489
      %2540 = vmatpush.bf16.msra.mxu0 %v1485
      %2541 = vmatpush.bf16.msra.mxu0 %v1481
      %2542 = vmatpush.bf16.msra.mxu0 %v1477
      %2543 = vmatpush.bf16.msra.mxu0 %v1473
      %2544 = vmatmul.bf16.gmra.mxu0 %v566
      %v2545 = vpop.f32.mrf.mxu0
      %v2546 = vadd.f32 %v877, %v2545
      %v2547 = vpop.f32.mrf.mxu0
      %v2548 = vadd.f32 %v877, %v2547
      %2549 = vmatmul.bf16.gmra.mxu0 %v573
      %v2550 = vpop.f32.mrf.mxu0
      %v2551 = vadd.f32 %v877, %v2550
      %v2552 = vpop.f32.mrf.mxu0
      %v2553 = vadd.f32 %v877, %v2552
      %2554 = vmatmul.bf16.gmra.mxu0 %v580
      %v2555 = vpop.f32.mrf.mxu0
      %v2556 = vadd.f32 %v877, %v2555
      %v2557 = vpop.f32.mrf.mxu0
      %v2558 = vadd.f32 %v877, %v2557
      %2559 = vmatmul.bf16.gmra.mxu0 %v587
      %v2560 = vpop.f32.mrf.mxu0
      %v2561 = vadd.f32 %v877, %v2560
      %v2562 = vpop.f32.mrf.mxu0
      %v2563 = vadd.f32 %v877, %v2562
      %2564 = vmatmul.bf16.gmra.mxu0 %v594
      %v2565 = vpop.f32.mrf.mxu0
      %v2566 = vadd.f32 %v877, %v2565
      %v2567 = vpop.f32.mrf.mxu0
      %v2568 = vadd.f32 %v877, %v2567
      %2569 = vmatmul.bf16.gmra.mxu0 %v601
      %v2570 = vpop.f32.mrf.mxu0
      %v2571 = vadd.f32 %v877, %v2570
      %v2572 = vpop.f32.mrf.mxu0
      %v2573 = vadd.f32 %v877, %v2572
      %2574 = vmatmul.bf16.gmra.mxu0 %v608
      %v2575 = vpop.f32.mrf.mxu0
      %v2576 = vadd.f32 %v877, %v2575
      %v2577 = vpop.f32.mrf.mxu0
      %v2578 = vadd.f32 %v877, %v2577
      %2579 = vmatmul.bf16.gmra.mxu0 %v615
      %v2580 = vpop.f32.mrf.mxu0
      %v2581 = vadd.f32 %v877, %v2580
      %v2582 = vpop.f32.mrf.mxu0
      %v2583 = vadd.f32 %v877, %v2582
      %2584 = vmatmul.bf16.gmra.mxu0 %v622
      %v2585 = vpop.f32.mrf.mxu0
      %v2586 = vadd.f32 %v877, %v2585
      %v2587 = vpop.f32.mrf.mxu0
      %v2588 = vadd.f32 %v877, %v2587
      %2589 = vmatmul.bf16.gmra.mxu0 %v629
      %v2590 = vpop.f32.mrf.mxu0
      %v2591 = vadd.f32 %v877, %v2590
      %v2592 = vpop.f32.mrf.mxu0
      %v2593 = vadd.f32 %v877, %v2592
      %2594 = vmatmul.bf16.gmra.mxu0 %v636
      %v2595 = vpop.f32.mrf.mxu0
      %v2596 = vadd.f32 %v877, %v2595
      %v2597 = vpop.f32.mrf.mxu0
      %v2598 = vadd.f32 %v877, %v2597
      %2599 = vmatmul.bf16.gmra.mxu0 %v643
      %v2600 = vpop.f32.mrf.mxu0
      %v2601 = vadd.f32 %v877, %v2600
      %v2602 = vpop.f32.mrf.mxu0
      %v2603 = vadd.f32 %v877, %v2602
      %2604 = vmatmul.bf16.gmra.mxu0 %v650
      %v2605 = vpop.f32.mrf.mxu0
      %v2606 = vadd.f32 %v877, %v2605
      %v2607 = vpop.f32.mrf.mxu0
      %v2608 = vadd.f32 %v877, %v2607
      %2609 = vmatmul.bf16.gmra.mxu0 %v657
      %v2610 = vpop.f32.mrf.mxu0
      %v2611 = vadd.f32 %v877, %v2610
      %v2612 = vpop.f32.mrf.mxu0
      %v2613 = vadd.f32 %v877, %v2612
      %2614 = vmatmul.bf16.gmra.mxu0 %v664
      %v2615 = vpop.f32.mrf.mxu0
      %v2616 = vadd.f32 %v877, %v2615
      %v2617 = vpop.f32.mrf.mxu0
      %v2618 = vadd.f32 %v877, %v2617
      %2619 = vmatmul.bf16.gmra.mxu0 %v671
      %v2620 = vpop.f32.mrf.mxu0
      %v2621 = vadd.f32 %v877, %v2620
      %v2622 = vpop.f32.mrf.mxu0
      %v2623 = vadd.f32 %v877, %v2622
      %2624 = vdwg.mxu0
      %2625 = vmatpush.bf16.msra.mxu0 %v1533
      %2626 = vmatpush.bf16.msra.mxu0 %v1529
      %2627 = vmatpush.bf16.msra.mxu0 %v1525
      %2628 = vmatpush.bf16.msra.mxu0 %v1521
      %2629 = vmatpush.bf16.msra.mxu0 %v1517
      %2630 = vmatpush.bf16.msra.mxu0 %v1513
      %2631 = vmatpush.bf16.msra.mxu0 %v1509
      %2632 = vmatpush.bf16.msra.mxu0 %v1505
      %2633 = vmatmul.bf16.gmra.mxu0 %v567
      %v2634 = vpop.f32.mrf.mxu0
      %v2635 = vadd.f32 %v2546, %v2634
      %v2636 = vpop.f32.mrf.mxu0
      %v2637 = vadd.f32 %v2548, %v2636
      %2638 = vmatmul.bf16.gmra.mxu0 %v574
      %v2639 = vpop.f32.mrf.mxu0
      %v2640 = vadd.f32 %v2551, %v2639
      %v2641 = vpop.f32.mrf.mxu0
      %v2642 = vadd.f32 %v2553, %v2641
      %2643 = vmatmul.bf16.gmra.mxu0 %v581
      %v2644 = vpop.f32.mrf.mxu0
      %v2645 = vadd.f32 %v2556, %v2644
      %v2646 = vpop.f32.mrf.mxu0
      %v2647 = vadd.f32 %v2558, %v2646
      %2648 = vmatmul.bf16.gmra.mxu0 %v588
      %v2649 = vpop.f32.mrf.mxu0
      %v2650 = vadd.f32 %v2561, %v2649
      %v2651 = vpop.f32.mrf.mxu0
      %v2652 = vadd.f32 %v2563, %v2651
      %2653 = vmatmul.bf16.gmra.mxu0 %v595
      %v2654 = vpop.f32.mrf.mxu0
      %v2655 = vadd.f32 %v2566, %v2654
      %v2656 = vpop.f32.mrf.mxu0
      %v2657 = vadd.f32 %v2568, %v2656
      %2658 = vmatmul.bf16.gmra.mxu0 %v602
      %v2659 = vpop.f32.mrf.mxu0
      %v2660 = vadd.f32 %v2571, %v2659
      %v2661 = vpop.f32.mrf.mxu0
      %v2662 = vadd.f32 %v2573, %v2661
      %2663 = vmatmul.bf16.gmra.mxu0 %v609
      %v2664 = vpop.f32.mrf.mxu0
      %v2665 = vadd.f32 %v2576, %v2664
      %v2666 = vpop.f32.mrf.mxu0
      %v2667 = vadd.f32 %v2578, %v2666
      %2668 = vmatmul.bf16.gmra.mxu0 %v616
      %v2669 = vpop.f32.mrf.mxu0
      %v2670 = vadd.f32 %v2581, %v2669
      %v2671 = vpop.f32.mrf.mxu0
      %v2672 = vadd.f32 %v2583, %v2671
      %2673 = vmatmul.bf16.gmra.mxu0 %v623
      %v2674 = vpop.f32.mrf.mxu0
      %v2675 = vadd.f32 %v2586, %v2674
      %v2676 = vpop.f32.mrf.mxu0
      %v2677 = vadd.f32 %v2588, %v2676
      %2678 = vmatmul.bf16.gmra.mxu0 %v630
      %v2679 = vpop.f32.mrf.mxu0
      %v2680 = vadd.f32 %v2591, %v2679
      %v2681 = vpop.f32.mrf.mxu0
      %v2682 = vadd.f32 %v2593, %v2681
      %2683 = vmatmul.bf16.gmra.mxu0 %v637
      %v2684 = vpop.f32.mrf.mxu0
      %v2685 = vadd.f32 %v2596, %v2684
      %v2686 = vpop.f32.mrf.mxu0
      %v2687 = vadd.f32 %v2598, %v2686
      %2688 = vmatmul.bf16.gmra.mxu0 %v644
      %v2689 = vpop.f32.mrf.mxu0
      %v2690 = vadd.f32 %v2601, %v2689
      %v2691 = vpop.f32.mrf.mxu0
      %v2692 = vadd.f32 %v2603, %v2691
      %2693 = vmatmul.bf16.gmra.mxu0 %v651
      %v2694 = vpop.f32.mrf.mxu0
      %v2695 = vadd.f32 %v2606, %v2694
      %v2696 = vpop.f32.mrf.mxu0
      %v2697 = vadd.f32 %v2608, %v2696
      %2698 = vmatmul.bf16.gmra.mxu0 %v658
      %v2699 = vpop.f32.mrf.mxu0
      %v2700 = vadd.f32 %v2611, %v2699
      %v2701 = vpop.f32.mrf.mxu0
      %v2702 = vadd.f32 %v2613, %v2701
      %2703 = vmatmul.bf16.gmra.mxu0 %v665
      %v2704 = vpop.f32.mrf.mxu0
      %v2705 = vadd.f32 %v2616, %v2704
      %v2706 = vpop.f32.mrf.mxu0
      %v2707 = vadd.f32 %v2618, %v2706
      %2708 = vmatmul.bf16.gmra.mxu0 %v672
      %v2709 = vpop.f32.mrf.mxu0
      %v2710 = vadd.f32 %v2621, %v2709
      %v2711 = vpop.f32.mrf.mxu0
      %v2712 = vadd.f32 %v2623, %v2711
      %2713 = vdwg.mxu0
      %2714 = vmatpush.bf16.msra.mxu0 %v1565
      %2715 = vmatpush.bf16.msra.mxu0 %v1561
      %2716 = vmatpush.bf16.msra.mxu0 %v1557
      %2717 = vmatpush.bf16.msra.mxu0 %v1553
      %2718 = vmatpush.bf16.msra.mxu0 %v1549
      %2719 = vmatpush.bf16.msra.mxu0 %v1545
      %2720 = vmatpush.bf16.msra.mxu0 %v1541
      %2721 = vmatpush.bf16.msra.mxu0 %v1537
      %2722 = vmatmul.bf16.gmra.mxu0 %v568
      %v2723 = vpop.f32.mrf.mxu0
      %v2724 = vadd.f32 %v2635, %v2723
      %v2725 = vpop.f32.mrf.mxu0
      %v2726 = vadd.f32 %v2637, %v2725
      %2727 = vmatmul.bf16.gmra.mxu0 %v575
      %v2728 = vpop.f32.mrf.mxu0
      %v2729 = vadd.f32 %v2640, %v2728
      %v2730 = vpop.f32.mrf.mxu0
      %v2731 = vadd.f32 %v2642, %v2730
      %2732 = vmatmul.bf16.gmra.mxu0 %v582
      %v2733 = vpop.f32.mrf.mxu0
      %v2734 = vadd.f32 %v2645, %v2733
      %v2735 = vpop.f32.mrf.mxu0
      %v2736 = vadd.f32 %v2647, %v2735
      %2737 = vmatmul.bf16.gmra.mxu0 %v589
      %v2738 = vpop.f32.mrf.mxu0
      %v2739 = vadd.f32 %v2650, %v2738
      %v2740 = vpop.f32.mrf.mxu0
      %v2741 = vadd.f32 %v2652, %v2740
      %2742 = vmatmul.bf16.gmra.mxu0 %v596
      %v2743 = vpop.f32.mrf.mxu0
      %v2744 = vadd.f32 %v2655, %v2743
      %v2745 = vpop.f32.mrf.mxu0
      %v2746 = vadd.f32 %v2657, %v2745
      %2747 = vmatmul.bf16.gmra.mxu0 %v603
      %v2748 = vpop.f32.mrf.mxu0
      %v2749 = vadd.f32 %v2660, %v2748
      %v2750 = vpop.f32.mrf.mxu0
      %v2751 = vadd.f32 %v2662, %v2750
      %2752 = vmatmul.bf16.gmra.mxu0 %v610
      %v2753 = vpop.f32.mrf.mxu0
      %v2754 = vadd.f32 %v2665, %v2753
      %v2755 = vpop.f32.mrf.mxu0
      %v2756 = vadd.f32 %v2667, %v2755
      %2757 = vmatmul.bf16.gmra.mxu0 %v617
      %v2758 = vpop.f32.mrf.mxu0
      %v2759 = vadd.f32 %v2670, %v2758
      %v2760 = vpop.f32.mrf.mxu0
      %v2761 = vadd.f32 %v2672, %v2760
      %2762 = vmatmul.bf16.gmra.mxu0 %v624
      %v2763 = vpop.f32.mrf.mxu0
      %v2764 = vadd.f32 %v2675, %v2763
      %v2765 = vpop.f32.mrf.mxu0
      %v2766 = vadd.f32 %v2677, %v2765
      %2767 = vmatmul.bf16.gmra.mxu0 %v631
      %v2768 = vpop.f32.mrf.mxu0
      %v2769 = vadd.f32 %v2680, %v2768
      %v2770 = vpop.f32.mrf.mxu0
      %v2771 = vadd.f32 %v2682, %v2770
      %2772 = vmatmul.bf16.gmra.mxu0 %v638
      %v2773 = vpop.f32.mrf.mxu0
      %v2774 = vadd.f32 %v2685, %v2773
      %v2775 = vpop.f32.mrf.mxu0
      %v2776 = vadd.f32 %v2687, %v2775
      %2777 = vmatmul.bf16.gmra.mxu0 %v645
      %v2778 = vpop.f32.mrf.mxu0
      %v2779 = vadd.f32 %v2690, %v2778
      %v2780 = vpop.f32.mrf.mxu0
      %v2781 = vadd.f32 %v2692, %v2780
      %2782 = vmatmul.bf16.gmra.mxu0 %v652
      %v2783 = vpop.f32.mrf.mxu0
      %v2784 = vadd.f32 %v2695, %v2783
      %v2785 = vpop.f32.mrf.mxu0
      %v2786 = vadd.f32 %v2697, %v2785
      %2787 = vmatmul.bf16.gmra.mxu0 %v659
      %v2788 = vpop.f32.mrf.mxu0
      %v2789 = vadd.f32 %v2700, %v2788
      %v2790 = vpop.f32.mrf.mxu0
      %v2791 = vadd.f32 %v2702, %v2790
      %2792 = vmatmul.bf16.gmra.mxu0 %v666
      %v2793 = vpop.f32.mrf.mxu0
      %v2794 = vadd.f32 %v2705, %v2793
      %v2795 = vpop.f32.mrf.mxu0
      %v2796 = vadd.f32 %v2707, %v2795
      %2797 = vmatmul.bf16.gmra.mxu0 %v673
      %v2798 = vpop.f32.mrf.mxu0
      %v2799 = vadd.f32 %v2710, %v2798
      %v2800 = vpop.f32.mrf.mxu0
      %v2801 = vadd.f32 %v2712, %v2800
      %2802 = vdwg.mxu0
      %2803 = vmatpush.bf16.msra.mxu0 %v1597
      %2804 = vmatpush.bf16.msra.mxu0 %v1593
      %2805 = vmatpush.bf16.msra.mxu0 %v1589
      %2806 = vmatpush.bf16.msra.mxu0 %v1585
      %2807 = vmatpush.bf16.msra.mxu0 %v1581
      %2808 = vmatpush.bf16.msra.mxu0 %v1577
      %2809 = vmatpush.bf16.msra.mxu0 %v1573
      %2810 = vmatpush.bf16.msra.mxu0 %v1569
      %2811 = vmatmul.bf16.gmra.mxu0 %v569
      %v2812 = vpop.f32.mrf.mxu0
      %v2813 = vadd.f32 %v2724, %v2812
      %v2814 = vpop.f32.mrf.mxu0
      %v2815 = vadd.f32 %v2726, %v2814
      %2816 = vmatmul.bf16.gmra.mxu0 %v576
      %v2817 = vpop.f32.mrf.mxu0
      %v2818 = vadd.f32 %v2729, %v2817
      %v2819 = vpop.f32.mrf.mxu0
      %v2820 = vadd.f32 %v2731, %v2819
      %2821 = vmatmul.bf16.gmra.mxu0 %v583
      %v2822 = vpop.f32.mrf.mxu0
      %v2823 = vadd.f32 %v2734, %v2822
      %v2824 = vpop.f32.mrf.mxu0
      %v2825 = vadd.f32 %v2736, %v2824
      %2826 = vmatmul.bf16.gmra.mxu0 %v590
      %v2827 = vpop.f32.mrf.mxu0
      %v2828 = vadd.f32 %v2739, %v2827
      %v2829 = vpop.f32.mrf.mxu0
      %v2830 = vadd.f32 %v2741, %v2829
      %2831 = vmatmul.bf16.gmra.mxu0 %v597
      %v2832 = vpop.f32.mrf.mxu0
      %v2833 = vadd.f32 %v2744, %v2832
      %v2834 = vpop.f32.mrf.mxu0
      %v2835 = vadd.f32 %v2746, %v2834
      %2836 = vmatmul.bf16.gmra.mxu0 %v604
      %v2837 = vpop.f32.mrf.mxu0
      %v2838 = vadd.f32 %v2749, %v2837
      %v2839 = vpop.f32.mrf.mxu0
      %v2840 = vadd.f32 %v2751, %v2839
      %2841 = vmatmul.bf16.gmra.mxu0 %v611
      %v2842 = vpop.f32.mrf.mxu0
      %v2843 = vadd.f32 %v2754, %v2842
      %v2844 = vpop.f32.mrf.mxu0
      %v2845 = vadd.f32 %v2756, %v2844
      %2846 = vmatmul.bf16.gmra.mxu0 %v618
      %v2847 = vpop.f32.mrf.mxu0
      %v2848 = vadd.f32 %v2759, %v2847
      %v2849 = vpop.f32.mrf.mxu0
      %v2850 = vadd.f32 %v2761, %v2849
      %2851 = vmatmul.bf16.gmra.mxu0 %v625
      %v2852 = vpop.f32.mrf.mxu0
      %v2853 = vadd.f32 %v2764, %v2852
      %v2854 = vpop.f32.mrf.mxu0
      %v2855 = vadd.f32 %v2766, %v2854
      %2856 = vmatmul.bf16.gmra.mxu0 %v632
      %v2857 = vpop.f32.mrf.mxu0
      %v2858 = vadd.f32 %v2769, %v2857
      %v2859 = vpop.f32.mrf.mxu0
      %v2860 = vadd.f32 %v2771, %v2859
      %2861 = vmatmul.bf16.gmra.mxu0 %v639
      %v2862 = vpop.f32.mrf.mxu0
      %v2863 = vadd.f32 %v2774, %v2862
      %v2864 = vpop.f32.mrf.mxu0
      %v2865 = vadd.f32 %v2776, %v2864
      %2866 = vmatmul.bf16.gmra.mxu0 %v646
      %v2867 = vpop.f32.mrf.mxu0
      %v2868 = vadd.f32 %v2779, %v2867
      %v2869 = vpop.f32.mrf.mxu0
      %v2870 = vadd.f32 %v2781, %v2869
      %2871 = vmatmul.bf16.gmra.mxu0 %v653
      %v2872 = vpop.f32.mrf.mxu0
      %v2873 = vadd.f32 %v2784, %v2872
      %v2874 = vpop.f32.mrf.mxu0
      %v2875 = vadd.f32 %v2786, %v2874
      %2876 = vmatmul.bf16.gmra.mxu0 %v660
      %v2877 = vpop.f32.mrf.mxu0
      %v2878 = vadd.f32 %v2789, %v2877
      %v2879 = vpop.f32.mrf.mxu0
      %v2880 = vadd.f32 %v2791, %v2879
      %2881 = vmatmul.bf16.gmra.mxu0 %v667
      %v2882 = vpop.f32.mrf.mxu0
      %v2883 = vadd.f32 %v2794, %v2882
      %v2884 = vpop.f32.mrf.mxu0
      %v2885 = vadd.f32 %v2796, %v2884
      %2886 = vmatmul.bf16.gmra.mxu0 %v674
      %v2887 = vpop.f32.mrf.mxu0
      %v2888 = vadd.f32 %v2799, %v2887
      %v2889 = vpop.f32.mrf.mxu0
      %v2890 = vadd.f32 %v2801, %v2889
      %2891 = vdwg.mxu0
      %2892 = vmatpush.bf16.msra.mxu0 %v1629
      %2893 = vmatpush.bf16.msra.mxu0 %v1625
      %2894 = vmatpush.bf16.msra.mxu0 %v1621
      %2895 = vmatpush.bf16.msra.mxu0 %v1617
      %2896 = vmatpush.bf16.msra.mxu0 %v1613
      %2897 = vmatpush.bf16.msra.mxu0 %v1609
      %2898 = vmatpush.bf16.msra.mxu0 %v1605
      %2899 = vmatpush.bf16.msra.mxu0 %v1601
      %2900 = vmatmul.bf16.gmra.mxu0 %v570
      %v2901 = vpop.f32.mrf.mxu0
      %v2902 = vadd.f32 %v2813, %v2901
      %v2903 = vpop.f32.mrf.mxu0
      %v2904 = vadd.f32 %v2815, %v2903
      %2905 = vmatmul.bf16.gmra.mxu0 %v577
      %v2906 = vpop.f32.mrf.mxu0
      %v2907 = vadd.f32 %v2818, %v2906
      %v2908 = vpop.f32.mrf.mxu0
      %v2909 = vadd.f32 %v2820, %v2908
      %2910 = vmatmul.bf16.gmra.mxu0 %v584
      %v2911 = vpop.f32.mrf.mxu0
      %v2912 = vadd.f32 %v2823, %v2911
      %v2913 = vpop.f32.mrf.mxu0
      %v2914 = vadd.f32 %v2825, %v2913
      %2915 = vmatmul.bf16.gmra.mxu0 %v591
      %v2916 = vpop.f32.mrf.mxu0
      %v2917 = vadd.f32 %v2828, %v2916
      %v2918 = vpop.f32.mrf.mxu0
      %v2919 = vadd.f32 %v2830, %v2918
      %2920 = vmatmul.bf16.gmra.mxu0 %v598
      %v2921 = vpop.f32.mrf.mxu0
      %v2922 = vadd.f32 %v2833, %v2921
      %v2923 = vpop.f32.mrf.mxu0
      %v2924 = vadd.f32 %v2835, %v2923
      %2925 = vmatmul.bf16.gmra.mxu0 %v605
      %v2926 = vpop.f32.mrf.mxu0
      %v2927 = vadd.f32 %v2838, %v2926
      %v2928 = vpop.f32.mrf.mxu0
      %v2929 = vadd.f32 %v2840, %v2928
      %2930 = vmatmul.bf16.gmra.mxu0 %v612
      %v2931 = vpop.f32.mrf.mxu0
      %v2932 = vadd.f32 %v2843, %v2931
      %v2933 = vpop.f32.mrf.mxu0
      %v2934 = vadd.f32 %v2845, %v2933
      %2935 = vmatmul.bf16.gmra.mxu0 %v619
      %v2936 = vpop.f32.mrf.mxu0
      %v2937 = vadd.f32 %v2848, %v2936
      %v2938 = vpop.f32.mrf.mxu0
      %v2939 = vadd.f32 %v2850, %v2938
      %2940 = vmatmul.bf16.gmra.mxu0 %v626
      %v2941 = vpop.f32.mrf.mxu0
      %v2942 = vadd.f32 %v2853, %v2941
      %v2943 = vpop.f32.mrf.mxu0
      %v2944 = vadd.f32 %v2855, %v2943
      %2945 = vmatmul.bf16.gmra.mxu0 %v633
      %v2946 = vpop.f32.mrf.mxu0
      %v2947 = vadd.f32 %v2858, %v2946
      %v2948 = vpop.f32.mrf.mxu0
      %v2949 = vadd.f32 %v2860, %v2948
      %2950 = vmatmul.bf16.gmra.mxu0 %v640
      %v2951 = vpop.f32.mrf.mxu0
      %v2952 = vadd.f32 %v2863, %v2951
      %v2953 = vpop.f32.mrf.mxu0
      %v2954 = vadd.f32 %v2865, %v2953
      %2955 = vmatmul.bf16.gmra.mxu0 %v647
      %v2956 = vpop.f32.mrf.mxu0
      %v2957 = vadd.f32 %v2868, %v2956
      %v2958 = vpop.f32.mrf.mxu0
      %v2959 = vadd.f32 %v2870, %v2958
      %2960 = vmatmul.bf16.gmra.mxu0 %v654
      %v2961 = vpop.f32.mrf.mxu0
      %v2962 = vadd.f32 %v2873, %v2961
      %v2963 = vpop.f32.mrf.mxu0
      %v2964 = vadd.f32 %v2875, %v2963
      %2965 = vmatmul.bf16.gmra.mxu0 %v661
      %v2966 = vpop.f32.mrf.mxu0
      %v2967 = vadd.f32 %v2878, %v2966
      %v2968 = vpop.f32.mrf.mxu0
      %v2969 = vadd.f32 %v2880, %v2968
      %2970 = vmatmul.bf16.gmra.mxu0 %v668
      %v2971 = vpop.f32.mrf.mxu0
      %v2972 = vadd.f32 %v2883, %v2971
      %v2973 = vpop.f32.mrf.mxu0
      %v2974 = vadd.f32 %v2885, %v2973
      %2975 = vmatmul.bf16.gmra.mxu0 %v675
      %v2976 = vpop.f32.mrf.mxu0
      %v2977 = vadd.f32 %v2888, %v2976
      %v2978 = vpop.f32.mrf.mxu0
      %v2979 = vadd.f32 %v2890, %v2978
      %2980 = vdwg.mxu0
      %2981 = vmatpush.bf16.msra.mxu0 %v1661
      %2982 = vmatpush.bf16.msra.mxu0 %v1657
      %2983 = vmatpush.bf16.msra.mxu0 %v1653
      %2984 = vmatpush.bf16.msra.mxu0 %v1649
      %2985 = vmatpush.bf16.msra.mxu0 %v1645
      %2986 = vmatpush.bf16.msra.mxu0 %v1641
      %2987 = vmatpush.bf16.msra.mxu0 %v1637
      %2988 = vmatpush.bf16.msra.mxu0 %v1633
      %2989 = vmatmul.bf16.gmra.mxu0 %v571
      %v2990 = vpop.f32.mrf.mxu0
      %v2991 = vadd.f32 %v2902, %v2990
      %v2992 = vpop.f32.mrf.mxu0
      %v2993 = vadd.f32 %v2904, %v2992
      %2994 = vmatmul.bf16.gmra.mxu0 %v578
      %v2995 = vpop.f32.mrf.mxu0
      %v2996 = vadd.f32 %v2907, %v2995
      %v2997 = vpop.f32.mrf.mxu0
      %v2998 = vadd.f32 %v2909, %v2997
      %2999 = vmatmul.bf16.gmra.mxu0 %v585
      %v3000 = vpop.f32.mrf.mxu0
      %v3001 = vadd.f32 %v2912, %v3000
      %v3002 = vpop.f32.mrf.mxu0
      %v3003 = vadd.f32 %v2914, %v3002
      %3004 = vmatmul.bf16.gmra.mxu0 %v592
      %v3005 = vpop.f32.mrf.mxu0
      %v3006 = vadd.f32 %v2917, %v3005
      %v3007 = vpop.f32.mrf.mxu0
      %v3008 = vadd.f32 %v2919, %v3007
      %3009 = vmatmul.bf16.gmra.mxu0 %v599
      %v3010 = vpop.f32.mrf.mxu0
      %v3011 = vadd.f32 %v2922, %v3010
      %v3012 = vpop.f32.mrf.mxu0
      %v3013 = vadd.f32 %v2924, %v3012
      %3014 = vmatmul.bf16.gmra.mxu0 %v606
      %v3015 = vpop.f32.mrf.mxu0
      %v3016 = vadd.f32 %v2927, %v3015
      %v3017 = vpop.f32.mrf.mxu0
      %v3018 = vadd.f32 %v2929, %v3017
      %3019 = vmatmul.bf16.gmra.mxu0 %v613
      %v3020 = vpop.f32.mrf.mxu0
      %v3021 = vadd.f32 %v2932, %v3020
      %v3022 = vpop.f32.mrf.mxu0
      %v3023 = vadd.f32 %v2934, %v3022
      %3024 = vmatmul.bf16.gmra.mxu0 %v620
      %v3025 = vpop.f32.mrf.mxu0
      %v3026 = vadd.f32 %v2937, %v3025
      %v3027 = vpop.f32.mrf.mxu0
      %v3028 = vadd.f32 %v2939, %v3027
      %3029 = vmatmul.bf16.gmra.mxu0 %v627
      %v3030 = vpop.f32.mrf.mxu0
      %v3031 = vadd.f32 %v2942, %v3030
      %v3032 = vpop.f32.mrf.mxu0
      %v3033 = vadd.f32 %v2944, %v3032
      %3034 = vmatmul.bf16.gmra.mxu0 %v634
      %v3035 = vpop.f32.mrf.mxu0
      %v3036 = vadd.f32 %v2947, %v3035
      %v3037 = vpop.f32.mrf.mxu0
      %v3038 = vadd.f32 %v2949, %v3037
      %3039 = vmatmul.bf16.gmra.mxu0 %v641
      %v3040 = vpop.f32.mrf.mxu0
      %v3041 = vadd.f32 %v2952, %v3040
      %v3042 = vpop.f32.mrf.mxu0
      %v3043 = vadd.f32 %v2954, %v3042
      %3044 = vmatmul.bf16.gmra.mxu0 %v648
      %v3045 = vpop.f32.mrf.mxu0
      %v3046 = vadd.f32 %v2957, %v3045
      %v3047 = vpop.f32.mrf.mxu0
      %v3048 = vadd.f32 %v2959, %v3047
      %3049 = vmatmul.bf16.gmra.mxu0 %v655
      %v3050 = vpop.f32.mrf.mxu0
      %v3051 = vadd.f32 %v2962, %v3050
      %v3052 = vpop.f32.mrf.mxu0
      %v3053 = vadd.f32 %v2964, %v3052
      %3054 = vmatmul.bf16.gmra.mxu0 %v662
      %v3055 = vpop.f32.mrf.mxu0
      %v3056 = vadd.f32 %v2967, %v3055
      %v3057 = vpop.f32.mrf.mxu0
      %v3058 = vadd.f32 %v2969, %v3057
      %3059 = vmatmul.bf16.gmra.mxu0 %v669
      %v3060 = vpop.f32.mrf.mxu0
      %v3061 = vadd.f32 %v2972, %v3060
      %v3062 = vpop.f32.mrf.mxu0
      %v3063 = vadd.f32 %v2974, %v3062
      %3064 = vmatmul.bf16.gmra.mxu0 %v676
      %v3065 = vpop.f32.mrf.mxu0
      %v3066 = vadd.f32 %v2977, %v3065
      %v3067 = vpop.f32.mrf.mxu0
      %v3068 = vadd.f32 %v2979, %v3067
      %3069 = vdwg.mxu0
      %3070 = vmatpush.bf16.msra.mxu0 0
      %3071 = vmatpush.bf16.msra.mxu0 0
      %3072 = vmatpush.bf16.msra.mxu0 0
      %3073 = vmatpush.bf16.msra.mxu0 0
      %3074 = vmatpush.bf16.msra.mxu0 0
      %3075 = vmatpush.bf16.msra.mxu0 0
      %3076 = vmatpush.bf16.msra.mxu0 0
      %3077 = vmatpush.bf16.msra.mxu0 %v1665
      %3078 = vmatmul.bf16.gmra.mxu0 %v1866
      %v3079 = vpop.f32.mrf.mxu0
      %v3080 = vadd.f32 %v2991, %v3079
      %v3081 = vpop.f32.mrf.mxu0
      %v3082 = vadd.f32 %v2993, %v3081
      %3083 = vmatmul.bf16.gmra.mxu0 %v1869
      %v3084 = vpop.f32.mrf.mxu0
      %v3085 = vadd.f32 %v2996, %v3084
      %v3086 = vpop.f32.mrf.mxu0
      %v3087 = vadd.f32 %v2998, %v3086
      %3088 = vmatmul.bf16.gmra.mxu0 %v1872
      %v3089 = vpop.f32.mrf.mxu0
      %v3090 = vadd.f32 %v3001, %v3089
      %v3091 = vpop.f32.mrf.mxu0
      %v3092 = vadd.f32 %v3003, %v3091
      %3093 = vmatmul.bf16.gmra.mxu0 %v1875
      %v3094 = vpop.f32.mrf.mxu0
      %v3095 = vadd.f32 %v3006, %v3094
      %v3096 = vpop.f32.mrf.mxu0
      %v3097 = vadd.f32 %v3008, %v3096
      %3098 = vmatmul.bf16.gmra.mxu0 %v1878
      %v3099 = vpop.f32.mrf.mxu0
      %v3100 = vadd.f32 %v3011, %v3099
      %v3101 = vpop.f32.mrf.mxu0
      %v3102 = vadd.f32 %v3013, %v3101
      %3103 = vmatmul.bf16.gmra.mxu0 %v1881
      %v3104 = vpop.f32.mrf.mxu0
      %v3105 = vadd.f32 %v3016, %v3104
      %v3106 = vpop.f32.mrf.mxu0
      %v3107 = vadd.f32 %v3018, %v3106
      %3108 = vmatmul.bf16.gmra.mxu0 %v1884
      %v3109 = vpop.f32.mrf.mxu0
      %v3110 = vadd.f32 %v3021, %v3109
      %v3111 = vpop.f32.mrf.mxu0
      %v3112 = vadd.f32 %v3023, %v3111
      %3113 = vmatmul.bf16.gmra.mxu0 %v1887
      %v3114 = vpop.f32.mrf.mxu0
      %v3115 = vadd.f32 %v3026, %v3114
      %v3116 = vpop.f32.mrf.mxu0
      %v3117 = vadd.f32 %v3028, %v3116
      %3118 = vmatmul.bf16.gmra.mxu0 %v1890
      %v3119 = vpop.f32.mrf.mxu0
      %v3120 = vadd.f32 %v3031, %v3119
      %v3121 = vpop.f32.mrf.mxu0
      %v3122 = vadd.f32 %v3033, %v3121
      %3123 = vmatmul.bf16.gmra.mxu0 %v1893
      %v3124 = vpop.f32.mrf.mxu0
      %v3125 = vadd.f32 %v3036, %v3124
      %v3126 = vpop.f32.mrf.mxu0
      %v3127 = vadd.f32 %v3038, %v3126
      %3128 = vmatmul.bf16.gmra.mxu0 %v1896
      %v3129 = vpop.f32.mrf.mxu0
      %v3130 = vadd.f32 %v3041, %v3129
      %v3131 = vpop.f32.mrf.mxu0
      %v3132 = vadd.f32 %v3043, %v3131
      %3133 = vmatmul.bf16.gmra.mxu0 %v1899
      %v3134 = vpop.f32.mrf.mxu0
      %v3135 = vadd.f32 %v3046, %v3134
      %v3136 = vpop.f32.mrf.mxu0
      %v3137 = vadd.f32 %v3048, %v3136
      %3138 = vmatmul.bf16.gmra.mxu0 %v1902
      %v3139 = vpop.f32.mrf.mxu0
      %v3140 = vadd.f32 %v3051, %v3139
      %v3141 = vpop.f32.mrf.mxu0
      %v3142 = vadd.f32 %v3053, %v3141
      %3143 = vmatmul.bf16.gmra.mxu0 %v1905
      %v3144 = vpop.f32.mrf.mxu0
      %v3145 = vadd.f32 %v3056, %v3144
      %v3146 = vpop.f32.mrf.mxu0
      %v3147 = vadd.f32 %v3058, %v3146
      %3148 = vmatmul.bf16.gmra.mxu0 %v1908
      %v3149 = vpop.f32.mrf.mxu0
      %v3150 = vadd.f32 %v3061, %v3149
      %v3151 = vpop.f32.mrf.mxu0
      %v3152 = vadd.f32 %v3063, %v3151
      %3153 = vmatmul.bf16.gmra.mxu0 %v1911
      %v3154 = vpop.f32.mrf.mxu0
      %v3155 = vadd.f32 %v3066, %v3154
      %v3156 = vpop.f32.mrf.mxu0
      %v3157 = vadd.f32 %v3068, %v3156
      %3158 = vdwg.mxu0
      %3159 = vmatpush.bf16.msra.mxu0 %v1502
      %3160 = vmatpush.bf16.msra.mxu0 %v1498
      %3161 = vmatpush.bf16.msra.mxu0 %v1494
      %3162 = vmatpush.bf16.msra.mxu0 %v1490
      %3163 = vmatpush.bf16.msra.mxu0 %v1486
      %3164 = vmatpush.bf16.msra.mxu0 %v1482
      %3165 = vmatpush.bf16.msra.mxu0 %v1478
      %3166 = vmatpush.bf16.msra.mxu0 %v1474
      %3167 = vmatmul.bf16.gmra.mxu0 %v566
      %v3168 = vpop.f32.mrf.mxu0
      %v3169 = vadd.f32 %v878, %v3168
      %v3170 = vpop.f32.mrf.mxu0
      %v3171 = vadd.f32 %v878, %v3170
      %3172 = vmatmul.bf16.gmra.mxu0 %v573
      %v3173 = vpop.f32.mrf.mxu0
      %v3174 = vadd.f32 %v878, %v3173
      %v3175 = vpop.f32.mrf.mxu0
      %v3176 = vadd.f32 %v878, %v3175
      %3177 = vmatmul.bf16.gmra.mxu0 %v580
      %v3178 = vpop.f32.mrf.mxu0
      %v3179 = vadd.f32 %v878, %v3178
      %v3180 = vpop.f32.mrf.mxu0
      %v3181 = vadd.f32 %v878, %v3180
      %3182 = vmatmul.bf16.gmra.mxu0 %v587
      %v3183 = vpop.f32.mrf.mxu0
      %v3184 = vadd.f32 %v878, %v3183
      %v3185 = vpop.f32.mrf.mxu0
      %v3186 = vadd.f32 %v878, %v3185
      %3187 = vmatmul.bf16.gmra.mxu0 %v594
      %v3188 = vpop.f32.mrf.mxu0
      %v3189 = vadd.f32 %v878, %v3188
      %v3190 = vpop.f32.mrf.mxu0
      %v3191 = vadd.f32 %v878, %v3190
      %3192 = vmatmul.bf16.gmra.mxu0 %v601
      %v3193 = vpop.f32.mrf.mxu0
      %v3194 = vadd.f32 %v878, %v3193
      %v3195 = vpop.f32.mrf.mxu0
      %v3196 = vadd.f32 %v878, %v3195
      %3197 = vmatmul.bf16.gmra.mxu0 %v608
      %v3198 = vpop.f32.mrf.mxu0
      %v3199 = vadd.f32 %v878, %v3198
      %v3200 = vpop.f32.mrf.mxu0
      %v3201 = vadd.f32 %v878, %v3200
      %3202 = vmatmul.bf16.gmra.mxu0 %v615
      %v3203 = vpop.f32.mrf.mxu0
      %v3204 = vadd.f32 %v878, %v3203
      %v3205 = vpop.f32.mrf.mxu0
      %v3206 = vadd.f32 %v878, %v3205
      %3207 = vmatmul.bf16.gmra.mxu0 %v622
      %v3208 = vpop.f32.mrf.mxu0
      %v3209 = vadd.f32 %v878, %v3208
      %v3210 = vpop.f32.mrf.mxu0
      %v3211 = vadd.f32 %v878, %v3210
      %3212 = vmatmul.bf16.gmra.mxu0 %v629
      %v3213 = vpop.f32.mrf.mxu0
      %v3214 = vadd.f32 %v878, %v3213
      %v3215 = vpop.f32.mrf.mxu0
      %v3216 = vadd.f32 %v878, %v3215
      %3217 = vmatmul.bf16.gmra.mxu0 %v636
      %v3218 = vpop.f32.mrf.mxu0
      %v3219 = vadd.f32 %v878, %v3218
      %v3220 = vpop.f32.mrf.mxu0
      %v3221 = vadd.f32 %v878, %v3220
      %3222 = vmatmul.bf16.gmra.mxu0 %v643
      %v3223 = vpop.f32.mrf.mxu0
      %v3224 = vadd.f32 %v878, %v3223
      %v3225 = vpop.f32.mrf.mxu0
      %v3226 = vadd.f32 %v878, %v3225
      %3227 = vmatmul.bf16.gmra.mxu0 %v650
      %v3228 = vpop.f32.mrf.mxu0
      %v3229 = vadd.f32 %v878, %v3228
      %v3230 = vpop.f32.mrf.mxu0
      %v3231 = vadd.f32 %v878, %v3230
      %3232 = vmatmul.bf16.gmra.mxu0 %v657
      %v3233 = vpop.f32.mrf.mxu0
      %v3234 = vadd.f32 %v878, %v3233
      %v3235 = vpop.f32.mrf.mxu0
      %v3236 = vadd.f32 %v878, %v3235
      %3237 = vmatmul.bf16.gmra.mxu0 %v664
      %v3238 = vpop.f32.mrf.mxu0
      %v3239 = vadd.f32 %v878, %v3238
      %v3240 = vpop.f32.mrf.mxu0
      %v3241 = vadd.f32 %v878, %v3240
      %3242 = vmatmul.bf16.gmra.mxu0 %v671
      %v3243 = vpop.f32.mrf.mxu0
      %v3244 = vadd.f32 %v878, %v3243
      %v3245 = vpop.f32.mrf.mxu0
      %v3246 = vadd.f32 %v878, %v3245
      %3247 = vdwg.mxu0
      %3248 = vmatpush.bf16.msra.mxu0 %v1534
      %3249 = vmatpush.bf16.msra.mxu0 %v1530
      %3250 = vmatpush.bf16.msra.mxu0 %v1526
      %3251 = vmatpush.bf16.msra.mxu0 %v1522
      %3252 = vmatpush.bf16.msra.mxu0 %v1518
      %3253 = vmatpush.bf16.msra.mxu0 %v1514
      %3254 = vmatpush.bf16.msra.mxu0 %v1510
      %3255 = vmatpush.bf16.msra.mxu0 %v1506
      %3256 = vmatmul.bf16.gmra.mxu0 %v567
      %v3257 = vpop.f32.mrf.mxu0
      %v3258 = vadd.f32 %v3169, %v3257
      %v3259 = vpop.f32.mrf.mxu0
      %v3260 = vadd.f32 %v3171, %v3259
      %3261 = vmatmul.bf16.gmra.mxu0 %v574
      %v3262 = vpop.f32.mrf.mxu0
      %v3263 = vadd.f32 %v3174, %v3262
      %v3264 = vpop.f32.mrf.mxu0
      %v3265 = vadd.f32 %v3176, %v3264
      %3266 = vmatmul.bf16.gmra.mxu0 %v581
      %v3267 = vpop.f32.mrf.mxu0
      %v3268 = vadd.f32 %v3179, %v3267
      %v3269 = vpop.f32.mrf.mxu0
      %v3270 = vadd.f32 %v3181, %v3269
      %3271 = vmatmul.bf16.gmra.mxu0 %v588
      %v3272 = vpop.f32.mrf.mxu0
      %v3273 = vadd.f32 %v3184, %v3272
      %v3274 = vpop.f32.mrf.mxu0
      %v3275 = vadd.f32 %v3186, %v3274
      %3276 = vmatmul.bf16.gmra.mxu0 %v595
      %v3277 = vpop.f32.mrf.mxu0
      %v3278 = vadd.f32 %v3189, %v3277
      %v3279 = vpop.f32.mrf.mxu0
      %v3280 = vadd.f32 %v3191, %v3279
      %3281 = vmatmul.bf16.gmra.mxu0 %v602
      %v3282 = vpop.f32.mrf.mxu0
      %v3283 = vadd.f32 %v3194, %v3282
      %v3284 = vpop.f32.mrf.mxu0
      %v3285 = vadd.f32 %v3196, %v3284
      %3286 = vmatmul.bf16.gmra.mxu0 %v609
      %v3287 = vpop.f32.mrf.mxu0
      %v3288 = vadd.f32 %v3199, %v3287
      %v3289 = vpop.f32.mrf.mxu0
      %v3290 = vadd.f32 %v3201, %v3289
      %3291 = vmatmul.bf16.gmra.mxu0 %v616
      %v3292 = vpop.f32.mrf.mxu0
      %v3293 = vadd.f32 %v3204, %v3292
      %v3294 = vpop.f32.mrf.mxu0
      %v3295 = vadd.f32 %v3206, %v3294
      %3296 = vmatmul.bf16.gmra.mxu0 %v623
      %v3297 = vpop.f32.mrf.mxu0
      %v3298 = vadd.f32 %v3209, %v3297
      %v3299 = vpop.f32.mrf.mxu0
      %v3300 = vadd.f32 %v3211, %v3299
      %3301 = vmatmul.bf16.gmra.mxu0 %v630
      %v3302 = vpop.f32.mrf.mxu0
      %v3303 = vadd.f32 %v3214, %v3302
      %v3304 = vpop.f32.mrf.mxu0
      %v3305 = vadd.f32 %v3216, %v3304
      %3306 = vmatmul.bf16.gmra.mxu0 %v637
      %v3307 = vpop.f32.mrf.mxu0
      %v3308 = vadd.f32 %v3219, %v3307
      %v3309 = vpop.f32.mrf.mxu0
      %v3310 = vadd.f32 %v3221, %v3309
      %3311 = vmatmul.bf16.gmra.mxu0 %v644
      %v3312 = vpop.f32.mrf.mxu0
      %v3313 = vadd.f32 %v3224, %v3312
      %v3314 = vpop.f32.mrf.mxu0
      %v3315 = vadd.f32 %v3226, %v3314
      %3316 = vmatmul.bf16.gmra.mxu0 %v651
      %v3317 = vpop.f32.mrf.mxu0
      %v3318 = vadd.f32 %v3229, %v3317
      %v3319 = vpop.f32.mrf.mxu0
      %v3320 = vadd.f32 %v3231, %v3319
      %3321 = vmatmul.bf16.gmra.mxu0 %v658
      %v3322 = vpop.f32.mrf.mxu0
      %v3323 = vadd.f32 %v3234, %v3322
      %v3324 = vpop.f32.mrf.mxu0
      %v3325 = vadd.f32 %v3236, %v3324
      %3326 = vmatmul.bf16.gmra.mxu0 %v665
      %v3327 = vpop.f32.mrf.mxu0
      %v3328 = vadd.f32 %v3239, %v3327
      %v3329 = vpop.f32.mrf.mxu0
      %v3330 = vadd.f32 %v3241, %v3329
      %3331 = vmatmul.bf16.gmra.mxu0 %v672
      %v3332 = vpop.f32.mrf.mxu0
      %v3333 = vadd.f32 %v3244, %v3332
      %v3334 = vpop.f32.mrf.mxu0
      %v3335 = vadd.f32 %v3246, %v3334
      %3336 = vdwg.mxu0
      %3337 = vmatpush.bf16.msra.mxu0 %v1566
      %3338 = vmatpush.bf16.msra.mxu0 %v1562
      %3339 = vmatpush.bf16.msra.mxu0 %v1558
      %3340 = vmatpush.bf16.msra.mxu0 %v1554
      %3341 = vmatpush.bf16.msra.mxu0 %v1550
      %3342 = vmatpush.bf16.msra.mxu0 %v1546
      %3343 = vmatpush.bf16.msra.mxu0 %v1542
      %3344 = vmatpush.bf16.msra.mxu0 %v1538
      %3345 = vmatmul.bf16.gmra.mxu0 %v568
      %v3346 = vpop.f32.mrf.mxu0
      %v3347 = vadd.f32 %v3258, %v3346
      %v3348 = vpop.f32.mrf.mxu0
      %v3349 = vadd.f32 %v3260, %v3348
      %3350 = vmatmul.bf16.gmra.mxu0 %v575
      %v3351 = vpop.f32.mrf.mxu0
      %v3352 = vadd.f32 %v3263, %v3351
      %v3353 = vpop.f32.mrf.mxu0
      %v3354 = vadd.f32 %v3265, %v3353
      %3355 = vmatmul.bf16.gmra.mxu0 %v582
      %v3356 = vpop.f32.mrf.mxu0
      %v3357 = vadd.f32 %v3268, %v3356
      %v3358 = vpop.f32.mrf.mxu0
      %v3359 = vadd.f32 %v3270, %v3358
      %3360 = vmatmul.bf16.gmra.mxu0 %v589
      %v3361 = vpop.f32.mrf.mxu0
      %v3362 = vadd.f32 %v3273, %v3361
      %v3363 = vpop.f32.mrf.mxu0
      %v3364 = vadd.f32 %v3275, %v3363
      %3365 = vmatmul.bf16.gmra.mxu0 %v596
      %v3366 = vpop.f32.mrf.mxu0
      %v3367 = vadd.f32 %v3278, %v3366
      %v3368 = vpop.f32.mrf.mxu0
      %v3369 = vadd.f32 %v3280, %v3368
      %3370 = vmatmul.bf16.gmra.mxu0 %v603
      %v3371 = vpop.f32.mrf.mxu0
      %v3372 = vadd.f32 %v3283, %v3371
      %v3373 = vpop.f32.mrf.mxu0
      %v3374 = vadd.f32 %v3285, %v3373
      %3375 = vmatmul.bf16.gmra.mxu0 %v610
      %v3376 = vpop.f32.mrf.mxu0
      %v3377 = vadd.f32 %v3288, %v3376
      %v3378 = vpop.f32.mrf.mxu0
      %v3379 = vadd.f32 %v3290, %v3378
      %3380 = vmatmul.bf16.gmra.mxu0 %v617
      %v3381 = vpop.f32.mrf.mxu0
      %v3382 = vadd.f32 %v3293, %v3381
      %v3383 = vpop.f32.mrf.mxu0
      %v3384 = vadd.f32 %v3295, %v3383
      %3385 = vmatmul.bf16.gmra.mxu0 %v624
      %v3386 = vpop.f32.mrf.mxu0
      %v3387 = vadd.f32 %v3298, %v3386
      %v3388 = vpop.f32.mrf.mxu0
      %v3389 = vadd.f32 %v3300, %v3388
      %3390 = vmatmul.bf16.gmra.mxu0 %v631
      %v3391 = vpop.f32.mrf.mxu0
      %v3392 = vadd.f32 %v3303, %v3391
      %v3393 = vpop.f32.mrf.mxu0
      %v3394 = vadd.f32 %v3305, %v3393
      %3395 = vmatmul.bf16.gmra.mxu0 %v638
      %v3396 = vpop.f32.mrf.mxu0
      %v3397 = vadd.f32 %v3308, %v3396
      %v3398 = vpop.f32.mrf.mxu0
      %v3399 = vadd.f32 %v3310, %v3398
      %3400 = vmatmul.bf16.gmra.mxu0 %v645
      %v3401 = vpop.f32.mrf.mxu0
      %v3402 = vadd.f32 %v3313, %v3401
      %v3403 = vpop.f32.mrf.mxu0
      %v3404 = vadd.f32 %v3315, %v3403
      %3405 = vmatmul.bf16.gmra.mxu0 %v652
      %v3406 = vpop.f32.mrf.mxu0
      %v3407 = vadd.f32 %v3318, %v3406
      %v3408 = vpop.f32.mrf.mxu0
      %v3409 = vadd.f32 %v3320, %v3408
      %3410 = vmatmul.bf16.gmra.mxu0 %v659
      %v3411 = vpop.f32.mrf.mxu0
      %v3412 = vadd.f32 %v3323, %v3411
      %v3413 = vpop.f32.mrf.mxu0
      %v3414 = vadd.f32 %v3325, %v3413
      %3415 = vmatmul.bf16.gmra.mxu0 %v666
      %v3416 = vpop.f32.mrf.mxu0
      %v3417 = vadd.f32 %v3328, %v3416
      %v3418 = vpop.f32.mrf.mxu0
      %v3419 = vadd.f32 %v3330, %v3418
      %3420 = vmatmul.bf16.gmra.mxu0 %v673
      %v3421 = vpop.f32.mrf.mxu0
      %v3422 = vadd.f32 %v3333, %v3421
      %v3423 = vpop.f32.mrf.mxu0
      %v3424 = vadd.f32 %v3335, %v3423
      %3425 = vdwg.mxu0
      %3426 = vmatpush.bf16.msra.mxu0 %v1598
      %3427 = vmatpush.bf16.msra.mxu0 %v1594
      %3428 = vmatpush.bf16.msra.mxu0 %v1590
      %3429 = vmatpush.bf16.msra.mxu0 %v1586
      %3430 = vmatpush.bf16.msra.mxu0 %v1582
      %3431 = vmatpush.bf16.msra.mxu0 %v1578
      %3432 = vmatpush.bf16.msra.mxu0 %v1574
      %3433 = vmatpush.bf16.msra.mxu0 %v1570
      %3434 = vmatmul.bf16.gmra.mxu0 %v569
      %v3435 = vpop.f32.mrf.mxu0
      %v3436 = vadd.f32 %v3347, %v3435
      %v3437 = vpop.f32.mrf.mxu0
      %v3438 = vadd.f32 %v3349, %v3437
      %3439 = vmatmul.bf16.gmra.mxu0 %v576
      %v3440 = vpop.f32.mrf.mxu0
      %v3441 = vadd.f32 %v3352, %v3440
      %v3442 = vpop.f32.mrf.mxu0
      %v3443 = vadd.f32 %v3354, %v3442
      %3444 = vmatmul.bf16.gmra.mxu0 %v583
      %v3445 = vpop.f32.mrf.mxu0
      %v3446 = vadd.f32 %v3357, %v3445
      %v3447 = vpop.f32.mrf.mxu0
      %v3448 = vadd.f32 %v3359, %v3447
      %3449 = vmatmul.bf16.gmra.mxu0 %v590
      %v3450 = vpop.f32.mrf.mxu0
      %v3451 = vadd.f32 %v3362, %v3450
      %v3452 = vpop.f32.mrf.mxu0
      %v3453 = vadd.f32 %v3364, %v3452
      %3454 = vmatmul.bf16.gmra.mxu0 %v597
      %v3455 = vpop.f32.mrf.mxu0
      %v3456 = vadd.f32 %v3367, %v3455
      %v3457 = vpop.f32.mrf.mxu0
      %v3458 = vadd.f32 %v3369, %v3457
      %3459 = vmatmul.bf16.gmra.mxu0 %v604
      %v3460 = vpop.f32.mrf.mxu0
      %v3461 = vadd.f32 %v3372, %v3460
      %v3462 = vpop.f32.mrf.mxu0
      %v3463 = vadd.f32 %v3374, %v3462
      %3464 = vmatmul.bf16.gmra.mxu0 %v611
      %v3465 = vpop.f32.mrf.mxu0
      %v3466 = vadd.f32 %v3377, %v3465
      %v3467 = vpop.f32.mrf.mxu0
      %v3468 = vadd.f32 %v3379, %v3467
      %3469 = vmatmul.bf16.gmra.mxu0 %v618
      %v3470 = vpop.f32.mrf.mxu0
      %v3471 = vadd.f32 %v3382, %v3470
      %v3472 = vpop.f32.mrf.mxu0
      %v3473 = vadd.f32 %v3384, %v3472
      %3474 = vmatmul.bf16.gmra.mxu0 %v625
      %v3475 = vpop.f32.mrf.mxu0
      %v3476 = vadd.f32 %v3387, %v3475
      %v3477 = vpop.f32.mrf.mxu0
      %v3478 = vadd.f32 %v3389, %v3477
      %3479 = vmatmul.bf16.gmra.mxu0 %v632
      %v3480 = vpop.f32.mrf.mxu0
      %v3481 = vadd.f32 %v3392, %v3480
      %v3482 = vpop.f32.mrf.mxu0
      %v3483 = vadd.f32 %v3394, %v3482
      %3484 = vmatmul.bf16.gmra.mxu0 %v639
      %v3485 = vpop.f32.mrf.mxu0
      %v3486 = vadd.f32 %v3397, %v3485
      %v3487 = vpop.f32.mrf.mxu0
      %v3488 = vadd.f32 %v3399, %v3487
      %3489 = vmatmul.bf16.gmra.mxu0 %v646
      %v3490 = vpop.f32.mrf.mxu0
      %v3491 = vadd.f32 %v3402, %v3490
      %v3492 = vpop.f32.mrf.mxu0
      %v3493 = vadd.f32 %v3404, %v3492
      %3494 = vmatmul.bf16.gmra.mxu0 %v653
      %v3495 = vpop.f32.mrf.mxu0
      %v3496 = vadd.f32 %v3407, %v3495
      %v3497 = vpop.f32.mrf.mxu0
      %v3498 = vadd.f32 %v3409, %v3497
      %3499 = vmatmul.bf16.gmra.mxu0 %v660
      %v3500 = vpop.f32.mrf.mxu0
      %v3501 = vadd.f32 %v3412, %v3500
      %v3502 = vpop.f32.mrf.mxu0
      %v3503 = vadd.f32 %v3414, %v3502
      %3504 = vmatmul.bf16.gmra.mxu0 %v667
      %v3505 = vpop.f32.mrf.mxu0
      %v3506 = vadd.f32 %v3417, %v3505
      %v3507 = vpop.f32.mrf.mxu0
      %v3508 = vadd.f32 %v3419, %v3507
      %3509 = vmatmul.bf16.gmra.mxu0 %v674
      %v3510 = vpop.f32.mrf.mxu0
      %v3511 = vadd.f32 %v3422, %v3510
      %v3512 = vpop.f32.mrf.mxu0
      %v3513 = vadd.f32 %v3424, %v3512
      %3514 = vdwg.mxu0
      %3515 = vmatpush.bf16.msra.mxu0 %v1630
      %3516 = vmatpush.bf16.msra.mxu0 %v1626
      %3517 = vmatpush.bf16.msra.mxu0 %v1622
      %3518 = vmatpush.bf16.msra.mxu0 %v1618
      %3519 = vmatpush.bf16.msra.mxu0 %v1614
      %3520 = vmatpush.bf16.msra.mxu0 %v1610
      %3521 = vmatpush.bf16.msra.mxu0 %v1606
      %3522 = vmatpush.bf16.msra.mxu0 %v1602
      %3523 = vmatmul.bf16.gmra.mxu0 %v570
      %v3524 = vpop.f32.mrf.mxu0
      %v3525 = vadd.f32 %v3436, %v3524
      %v3526 = vpop.f32.mrf.mxu0
      %v3527 = vadd.f32 %v3438, %v3526
      %3528 = vmatmul.bf16.gmra.mxu0 %v577
      %v3529 = vpop.f32.mrf.mxu0
      %v3530 = vadd.f32 %v3441, %v3529
      %v3531 = vpop.f32.mrf.mxu0
      %v3532 = vadd.f32 %v3443, %v3531
      %3533 = vmatmul.bf16.gmra.mxu0 %v584
      %v3534 = vpop.f32.mrf.mxu0
      %v3535 = vadd.f32 %v3446, %v3534
      %v3536 = vpop.f32.mrf.mxu0
      %v3537 = vadd.f32 %v3448, %v3536
      %3538 = vmatmul.bf16.gmra.mxu0 %v591
      %v3539 = vpop.f32.mrf.mxu0
      %v3540 = vadd.f32 %v3451, %v3539
      %v3541 = vpop.f32.mrf.mxu0
      %v3542 = vadd.f32 %v3453, %v3541
      %3543 = vmatmul.bf16.gmra.mxu0 %v598
      %v3544 = vpop.f32.mrf.mxu0
      %v3545 = vadd.f32 %v3456, %v3544
      %v3546 = vpop.f32.mrf.mxu0
      %v3547 = vadd.f32 %v3458, %v3546
      %3548 = vmatmul.bf16.gmra.mxu0 %v605
      %v3549 = vpop.f32.mrf.mxu0
      %v3550 = vadd.f32 %v3461, %v3549
      %v3551 = vpop.f32.mrf.mxu0
      %v3552 = vadd.f32 %v3463, %v3551
      %3553 = vmatmul.bf16.gmra.mxu0 %v612
      %v3554 = vpop.f32.mrf.mxu0
      %v3555 = vadd.f32 %v3466, %v3554
      %v3556 = vpop.f32.mrf.mxu0
      %v3557 = vadd.f32 %v3468, %v3556
      %3558 = vmatmul.bf16.gmra.mxu0 %v619
      %v3559 = vpop.f32.mrf.mxu0
      %v3560 = vadd.f32 %v3471, %v3559
      %v3561 = vpop.f32.mrf.mxu0
      %v3562 = vadd.f32 %v3473, %v3561
      %3563 = vmatmul.bf16.gmra.mxu0 %v626
      %v3564 = vpop.f32.mrf.mxu0
      %v3565 = vadd.f32 %v3476, %v3564
      %v3566 = vpop.f32.mrf.mxu0
      %v3567 = vadd.f32 %v3478, %v3566
      %3568 = vmatmul.bf16.gmra.mxu0 %v633
      %v3569 = vpop.f32.mrf.mxu0
      %v3570 = vadd.f32 %v3481, %v3569
      %v3571 = vpop.f32.mrf.mxu0
      %v3572 = vadd.f32 %v3483, %v3571
      %3573 = vmatmul.bf16.gmra.mxu0 %v640
      %v3574 = vpop.f32.mrf.mxu0
      %v3575 = vadd.f32 %v3486, %v3574
      %v3576 = vpop.f32.mrf.mxu0
      %v3577 = vadd.f32 %v3488, %v3576
      %3578 = vmatmul.bf16.gmra.mxu0 %v647
      %v3579 = vpop.f32.mrf.mxu0
      %v3580 = vadd.f32 %v3491, %v3579
      %v3581 = vpop.f32.mrf.mxu0
      %v3582 = vadd.f32 %v3493, %v3581
      %3583 = vmatmul.bf16.gmra.mxu0 %v654
      %v3584 = vpop.f32.mrf.mxu0
      %v3585 = vadd.f32 %v3496, %v3584
      %v3586 = vpop.f32.mrf.mxu0
      %v3587 = vadd.f32 %v3498, %v3586
      %3588 = vmatmul.bf16.gmra.mxu0 %v661
      %v3589 = vpop.f32.mrf.mxu0
      %v3590 = vadd.f32 %v3501, %v3589
      %v3591 = vpop.f32.mrf.mxu0
      %v3592 = vadd.f32 %v3503, %v3591
      %3593 = vmatmul.bf16.gmra.mxu0 %v668
      %v3594 = vpop.f32.mrf.mxu0
      %v3595 = vadd.f32 %v3506, %v3594
      %v3596 = vpop.f32.mrf.mxu0
      %v3597 = vadd.f32 %v3508, %v3596
      %3598 = vmatmul.bf16.gmra.mxu0 %v675
      %v3599 = vpop.f32.mrf.mxu0
      %v3600 = vadd.f32 %v3511, %v3599
      %v3601 = vpop.f32.mrf.mxu0
      %v3602 = vadd.f32 %v3513, %v3601
      %3603 = vdwg.mxu0
      %3604 = vmatpush.bf16.msra.mxu0 %v1662
      %3605 = vmatpush.bf16.msra.mxu0 %v1658
      %3606 = vmatpush.bf16.msra.mxu0 %v1654
      %3607 = vmatpush.bf16.msra.mxu0 %v1650
      %3608 = vmatpush.bf16.msra.mxu0 %v1646
      %3609 = vmatpush.bf16.msra.mxu0 %v1642
      %3610 = vmatpush.bf16.msra.mxu0 %v1638
      %3611 = vmatpush.bf16.msra.mxu0 %v1634
      %3612 = vmatmul.bf16.gmra.mxu0 %v571
      %v3613 = vpop.f32.mrf.mxu0
      %v3614 = vadd.f32 %v3525, %v3613
      %v3615 = vpop.f32.mrf.mxu0
      %v3616 = vadd.f32 %v3527, %v3615
      %3617 = vmatmul.bf16.gmra.mxu0 %v578
      %v3618 = vpop.f32.mrf.mxu0
      %v3619 = vadd.f32 %v3530, %v3618
      %v3620 = vpop.f32.mrf.mxu0
      %v3621 = vadd.f32 %v3532, %v3620
      %3622 = vmatmul.bf16.gmra.mxu0 %v585
      %v3623 = vpop.f32.mrf.mxu0
      %v3624 = vadd.f32 %v3535, %v3623
      %v3625 = vpop.f32.mrf.mxu0
      %v3626 = vadd.f32 %v3537, %v3625
      %3627 = vmatmul.bf16.gmra.mxu0 %v592
      %v3628 = vpop.f32.mrf.mxu0
      %v3629 = vadd.f32 %v3540, %v3628
      %v3630 = vpop.f32.mrf.mxu0
      %v3631 = vadd.f32 %v3542, %v3630
      %3632 = vmatmul.bf16.gmra.mxu0 %v599
      %v3633 = vpop.f32.mrf.mxu0
      %v3634 = vadd.f32 %v3545, %v3633
      %v3635 = vpop.f32.mrf.mxu0
      %v3636 = vadd.f32 %v3547, %v3635
      %3637 = vmatmul.bf16.gmra.mxu0 %v606
      %v3638 = vpop.f32.mrf.mxu0
      %v3639 = vadd.f32 %v3550, %v3638
      %v3640 = vpop.f32.mrf.mxu0
      %v3641 = vadd.f32 %v3552, %v3640
      %3642 = vmatmul.bf16.gmra.mxu0 %v613
      %v3643 = vpop.f32.mrf.mxu0
      %v3644 = vadd.f32 %v3555, %v3643
      %v3645 = vpop.f32.mrf.mxu0
      %v3646 = vadd.f32 %v3557, %v3645
      %3647 = vmatmul.bf16.gmra.mxu0 %v620
      %v3648 = vpop.f32.mrf.mxu0
      %v3649 = vadd.f32 %v3560, %v3648
      %v3650 = vpop.f32.mrf.mxu0
      %v3651 = vadd.f32 %v3562, %v3650
      %3652 = vmatmul.bf16.gmra.mxu0 %v627
      %v3653 = vpop.f32.mrf.mxu0
      %v3654 = vadd.f32 %v3565, %v3653
      %v3655 = vpop.f32.mrf.mxu0
      %v3656 = vadd.f32 %v3567, %v3655
      %3657 = vmatmul.bf16.gmra.mxu0 %v634
      %v3658 = vpop.f32.mrf.mxu0
      %v3659 = vadd.f32 %v3570, %v3658
      %v3660 = vpop.f32.mrf.mxu0
      %v3661 = vadd.f32 %v3572, %v3660
      %3662 = vmatmul.bf16.gmra.mxu0 %v641
      %v3663 = vpop.f32.mrf.mxu0
      %v3664 = vadd.f32 %v3575, %v3663
      %v3665 = vpop.f32.mrf.mxu0
      %v3666 = vadd.f32 %v3577, %v3665
      %3667 = vmatmul.bf16.gmra.mxu0 %v648
      %v3668 = vpop.f32.mrf.mxu0
      %v3669 = vadd.f32 %v3580, %v3668
      %v3670 = vpop.f32.mrf.mxu0
      %v3671 = vadd.f32 %v3582, %v3670
      %3672 = vmatmul.bf16.gmra.mxu0 %v655
      %v3673 = vpop.f32.mrf.mxu0
      %v3674 = vadd.f32 %v3585, %v3673
      %v3675 = vpop.f32.mrf.mxu0
      %v3676 = vadd.f32 %v3587, %v3675
      %3677 = vmatmul.bf16.gmra.mxu0 %v662
      %v3678 = vpop.f32.mrf.mxu0
      %v3679 = vadd.f32 %v3590, %v3678
      %v3680 = vpop.f32.mrf.mxu0
      %v3681 = vadd.f32 %v3592, %v3680
      %3682 = vmatmul.bf16.gmra.mxu0 %v669
      %v3683 = vpop.f32.mrf.mxu0
      %v3684 = vadd.f32 %v3595, %v3683
      %v3685 = vpop.f32.mrf.mxu0
      %v3686 = vadd.f32 %v3597, %v3685
      %3687 = vmatmul.bf16.gmra.mxu0 %v676
      %v3688 = vpop.f32.mrf.mxu0
      %v3689 = vadd.f32 %v3600, %v3688
      %v3690 = vpop.f32.mrf.mxu0
      %v3691 = vadd.f32 %v3602, %v3690
      %3692 = vdwg.mxu0
      %3693 = vmatpush.bf16.msra.mxu0 0
      %3694 = vmatpush.bf16.msra.mxu0 0
      %3695 = vmatpush.bf16.msra.mxu0 0
      %3696 = vmatpush.bf16.msra.mxu0 0
      %3697 = vmatpush.bf16.msra.mxu0 0
      %3698 = vmatpush.bf16.msra.mxu0 0
      %3699 = vmatpush.bf16.msra.mxu0 0
      %3700 = vmatpush.bf16.msra.mxu0 %v1666
      %3701 = vmatmul.bf16.gmra.mxu0 %v1866
      %v3702 = vpop.f32.mrf.mxu0
      %v3703 = vadd.f32 %v3614, %v3702
      %v3704 = vpop.f32.mrf.mxu0
      %v3705 = vadd.f32 %v3616, %v3704
      %3706 = vmatmul.bf16.gmra.mxu0 %v1869
      %v3707 = vpop.f32.mrf.mxu0
      %v3708 = vadd.f32 %v3619, %v3707
      %v3709 = vpop.f32.mrf.mxu0
      %v3710 = vadd.f32 %v3621, %v3709
      %3711 = vmatmul.bf16.gmra.mxu0 %v1872
      %v3712 = vpop.f32.mrf.mxu0
      %v3713 = vadd.f32 %v3624, %v3712
      %v3714 = vpop.f32.mrf.mxu0
      %v3715 = vadd.f32 %v3626, %v3714
      %3716 = vmatmul.bf16.gmra.mxu0 %v1875
      %v3717 = vpop.f32.mrf.mxu0
      %v3718 = vadd.f32 %v3629, %v3717
      %v3719 = vpop.f32.mrf.mxu0
      %v3720 = vadd.f32 %v3631, %v3719
      %3721 = vmatmul.bf16.gmra.mxu0 %v1878
      %v3722 = vpop.f32.mrf.mxu0
      %v3723 = vadd.f32 %v3634, %v3722
      %v3724 = vpop.f32.mrf.mxu0
      %v3725 = vadd.f32 %v3636, %v3724
      %3726 = vmatmul.bf16.gmra.mxu0 %v1881
      %v3727 = vpop.f32.mrf.mxu0
      %v3728 = vadd.f32 %v3639, %v3727
      %v3729 = vpop.f32.mrf.mxu0
      %v3730 = vadd.f32 %v3641, %v3729
      %3731 = vmatmul.bf16.gmra.mxu0 %v1884
      %v3732 = vpop.f32.mrf.mxu0
      %v3733 = vadd.f32 %v3644, %v3732
      %v3734 = vpop.f32.mrf.mxu0
      %v3735 = vadd.f32 %v3646, %v3734
      %3736 = vmatmul.bf16.gmra.mxu0 %v1887
      %v3737 = vpop.f32.mrf.mxu0
      %v3738 = vadd.f32 %v3649, %v3737
      %v3739 = vpop.f32.mrf.mxu0
      %v3740 = vadd.f32 %v3651, %v3739
      %3741 = vmatmul.bf16.gmra.mxu0 %v1890
      %v3742 = vpop.f32.mrf.mxu0
      %v3743 = vadd.f32 %v3654, %v3742
      %v3744 = vpop.f32.mrf.mxu0
      %v3745 = vadd.f32 %v3656, %v3744
      %3746 = vmatmul.bf16.gmra.mxu0 %v1893
      %v3747 = vpop.f32.mrf.mxu0
      %v3748 = vadd.f32 %v3659, %v3747
      %v3749 = vpop.f32.mrf.mxu0
      %v3750 = vadd.f32 %v3661, %v3749
      %3751 = vmatmul.bf16.gmra.mxu0 %v1896
      %v3752 = vpop.f32.mrf.mxu0
      %v3753 = vadd.f32 %v3664, %v3752
      %v3754 = vpop.f32.mrf.mxu0
      %v3755 = vadd.f32 %v3666, %v3754
      %3756 = vmatmul.bf16.gmra.mxu0 %v1899
      %v3757 = vpop.f32.mrf.mxu0
      %v3758 = vadd.f32 %v3669, %v3757
      %v3759 = vpop.f32.mrf.mxu0
      %v3760 = vadd.f32 %v3671, %v3759
      %3761 = vmatmul.bf16.gmra.mxu0 %v1902
      %v3762 = vpop.f32.mrf.mxu0
      %v3763 = vadd.f32 %v3674, %v3762
      %v3764 = vpop.f32.mrf.mxu0
      %v3765 = vadd.f32 %v3676, %v3764
      %3766 = vmatmul.bf16.gmra.mxu0 %v1905
      %v3767 = vpop.f32.mrf.mxu0
      %v3768 = vadd.f32 %v3679, %v3767
      %v3769 = vpop.f32.mrf.mxu0
      %v3770 = vadd.f32 %v3681, %v3769
      %3771 = vmatmul.bf16.gmra.mxu0 %v1908
      %v3772 = vpop.f32.mrf.mxu0
      %v3773 = vadd.f32 %v3684, %v3772
      %v3774 = vpop.f32.mrf.mxu0
      %v3775 = vadd.f32 %v3686, %v3774
      %3776 = vmatmul.bf16.gmra.mxu0 %v1911
      %v3777 = vpop.f32.mrf.mxu0
      %v3778 = vadd.f32 %v3689, %v3777
      %v3779 = vpop.f32.mrf.mxu0
      %v3780 = vadd.f32 %v3691, %v3779
      %3781 = vdwg.mxu0
      %3782 = vmatpush.bf16.msra.mxu0 %v1503
      %3783 = vmatpush.bf16.msra.mxu0 %v1499
      %3784 = vmatpush.bf16.msra.mxu0 %v1495
      %3785 = vmatpush.bf16.msra.mxu0 %v1491
      %3786 = vmatpush.bf16.msra.mxu0 %v1487
      %3787 = vmatpush.bf16.msra.mxu0 %v1483
      %3788 = vmatpush.bf16.msra.mxu0 %v1479
      %3789 = vmatpush.bf16.msra.mxu0 %v1475
      %3790 = vmatmul.bf16.gmra.mxu0 %v566
      %v3791 = vpop.f32.mrf.mxu0
      %v3792 = vadd.f32 %v879, %v3791
      %v3793 = vpop.f32.mrf.mxu0
      %v3794 = vadd.f32 %v879, %v3793
      %3795 = vmatmul.bf16.gmra.mxu0 %v573
      %v3796 = vpop.f32.mrf.mxu0
      %v3797 = vadd.f32 %v879, %v3796
      %v3798 = vpop.f32.mrf.mxu0
      %v3799 = vadd.f32 %v879, %v3798
      %3800 = vmatmul.bf16.gmra.mxu0 %v580
      %v3801 = vpop.f32.mrf.mxu0
      %v3802 = vadd.f32 %v879, %v3801
      %v3803 = vpop.f32.mrf.mxu0
      %v3804 = vadd.f32 %v879, %v3803
      %3805 = vmatmul.bf16.gmra.mxu0 %v587
      %v3806 = vpop.f32.mrf.mxu0
      %v3807 = vadd.f32 %v879, %v3806
      %v3808 = vpop.f32.mrf.mxu0
      %v3809 = vadd.f32 %v879, %v3808
      %3810 = vmatmul.bf16.gmra.mxu0 %v594
      %v3811 = vpop.f32.mrf.mxu0
      %v3812 = vadd.f32 %v879, %v3811
      %v3813 = vpop.f32.mrf.mxu0
      %v3814 = vadd.f32 %v879, %v3813
      %3815 = vmatmul.bf16.gmra.mxu0 %v601
      %v3816 = vpop.f32.mrf.mxu0
      %v3817 = vadd.f32 %v879, %v3816
      %v3818 = vpop.f32.mrf.mxu0
      %v3819 = vadd.f32 %v879, %v3818
      %3820 = vmatmul.bf16.gmra.mxu0 %v608
      %v3821 = vpop.f32.mrf.mxu0
      %v3822 = vadd.f32 %v879, %v3821
      %v3823 = vpop.f32.mrf.mxu0
      %v3824 = vadd.f32 %v879, %v3823
      %3825 = vmatmul.bf16.gmra.mxu0 %v615
      %v3826 = vpop.f32.mrf.mxu0
      %v3827 = vadd.f32 %v879, %v3826
      %v3828 = vpop.f32.mrf.mxu0
      %v3829 = vadd.f32 %v879, %v3828
      %3830 = vmatmul.bf16.gmra.mxu0 %v622
      %v3831 = vpop.f32.mrf.mxu0
      %v3832 = vadd.f32 %v879, %v3831
      %v3833 = vpop.f32.mrf.mxu0
      %v3834 = vadd.f32 %v879, %v3833
      %3835 = vmatmul.bf16.gmra.mxu0 %v629
      %v3836 = vpop.f32.mrf.mxu0
      %v3837 = vadd.f32 %v879, %v3836
      %v3838 = vpop.f32.mrf.mxu0
      %v3839 = vadd.f32 %v879, %v3838
      %3840 = vmatmul.bf16.gmra.mxu0 %v636
      %v3841 = vpop.f32.mrf.mxu0
      %v3842 = vadd.f32 %v879, %v3841
      %v3843 = vpop.f32.mrf.mxu0
      %v3844 = vadd.f32 %v879, %v3843
      %3845 = vmatmul.bf16.gmra.mxu0 %v643
      %v3846 = vpop.f32.mrf.mxu0
      %v3847 = vadd.f32 %v879, %v3846
      %v3848 = vpop.f32.mrf.mxu0
      %v3849 = vadd.f32 %v879, %v3848
      %3850 = vmatmul.bf16.gmra.mxu0 %v650
      %v3851 = vpop.f32.mrf.mxu0
      %v3852 = vadd.f32 %v879, %v3851
      %v3853 = vpop.f32.mrf.mxu0
      %v3854 = vadd.f32 %v879, %v3853
      %3855 = vmatmul.bf16.gmra.mxu0 %v657
      %v3856 = vpop.f32.mrf.mxu0
      %v3857 = vadd.f32 %v879, %v3856
      %v3858 = vpop.f32.mrf.mxu0
      %v3859 = vadd.f32 %v879, %v3858
      %3860 = vmatmul.bf16.gmra.mxu0 %v664
      %v3861 = vpop.f32.mrf.mxu0
      %v3862 = vadd.f32 %v879, %v3861
      %v3863 = vpop.f32.mrf.mxu0
      %v3864 = vadd.f32 %v879, %v3863
      %3865 = vmatmul.bf16.gmra.mxu0 %v671
      %v3866 = vpop.f32.mrf.mxu0
      %v3867 = vadd.f32 %v879, %v3866
      %v3868 = vpop.f32.mrf.mxu0
      %v3869 = vadd.f32 %v879, %v3868
      %3870 = vdwg.mxu0
      %3871 = vmatpush.bf16.msra.mxu0 %v1535
      %3872 = vmatpush.bf16.msra.mxu0 %v1531
      %3873 = vmatpush.bf16.msra.mxu0 %v1527
      %3874 = vmatpush.bf16.msra.mxu0 %v1523
      %3875 = vmatpush.bf16.msra.mxu0 %v1519
      %3876 = vmatpush.bf16.msra.mxu0 %v1515
      %3877 = vmatpush.bf16.msra.mxu0 %v1511
      %3878 = vmatpush.bf16.msra.mxu0 %v1507
      %3879 = vmatmul.bf16.gmra.mxu0 %v567
      %v3880 = vpop.f32.mrf.mxu0
      %v3881 = vadd.f32 %v3792, %v3880
      %v3882 = vpop.f32.mrf.mxu0
      %v3883 = vadd.f32 %v3794, %v3882
      %3884 = vmatmul.bf16.gmra.mxu0 %v574
      %v3885 = vpop.f32.mrf.mxu0
      %v3886 = vadd.f32 %v3797, %v3885
      %v3887 = vpop.f32.mrf.mxu0
      %v3888 = vadd.f32 %v3799, %v3887
      %3889 = vmatmul.bf16.gmra.mxu0 %v581
      %v3890 = vpop.f32.mrf.mxu0
      %v3891 = vadd.f32 %v3802, %v3890
      %v3892 = vpop.f32.mrf.mxu0
      %v3893 = vadd.f32 %v3804, %v3892
      %3894 = vmatmul.bf16.gmra.mxu0 %v588
      %v3895 = vpop.f32.mrf.mxu0
      %v3896 = vadd.f32 %v3807, %v3895
      %v3897 = vpop.f32.mrf.mxu0
      %v3898 = vadd.f32 %v3809, %v3897
      %3899 = vmatmul.bf16.gmra.mxu0 %v595
      %v3900 = vpop.f32.mrf.mxu0
      %v3901 = vadd.f32 %v3812, %v3900
      %v3902 = vpop.f32.mrf.mxu0
      %v3903 = vadd.f32 %v3814, %v3902
      %3904 = vmatmul.bf16.gmra.mxu0 %v602
      %v3905 = vpop.f32.mrf.mxu0
      %v3906 = vadd.f32 %v3817, %v3905
      %v3907 = vpop.f32.mrf.mxu0
      %v3908 = vadd.f32 %v3819, %v3907
      %3909 = vmatmul.bf16.gmra.mxu0 %v609
      %v3910 = vpop.f32.mrf.mxu0
      %v3911 = vadd.f32 %v3822, %v3910
      %v3912 = vpop.f32.mrf.mxu0
      %v3913 = vadd.f32 %v3824, %v3912
      %3914 = vmatmul.bf16.gmra.mxu0 %v616
      %v3915 = vpop.f32.mrf.mxu0
      %v3916 = vadd.f32 %v3827, %v3915
      %v3917 = vpop.f32.mrf.mxu0
      %v3918 = vadd.f32 %v3829, %v3917
      %3919 = vmatmul.bf16.gmra.mxu0 %v623
      %v3920 = vpop.f32.mrf.mxu0
      %v3921 = vadd.f32 %v3832, %v3920
      %v3922 = vpop.f32.mrf.mxu0
      %v3923 = vadd.f32 %v3834, %v3922
      %3924 = vmatmul.bf16.gmra.mxu0 %v630
      %v3925 = vpop.f32.mrf.mxu0
      %v3926 = vadd.f32 %v3837, %v3925
      %v3927 = vpop.f32.mrf.mxu0
      %v3928 = vadd.f32 %v3839, %v3927
      %3929 = vmatmul.bf16.gmra.mxu0 %v637
      %v3930 = vpop.f32.mrf.mxu0
      %v3931 = vadd.f32 %v3842, %v3930
      %v3932 = vpop.f32.mrf.mxu0
      %v3933 = vadd.f32 %v3844, %v3932
      %3934 = vmatmul.bf16.gmra.mxu0 %v644
      %v3935 = vpop.f32.mrf.mxu0
      %v3936 = vadd.f32 %v3847, %v3935
      %v3937 = vpop.f32.mrf.mxu0
      %v3938 = vadd.f32 %v3849, %v3937
      %3939 = vmatmul.bf16.gmra.mxu0 %v651
      %v3940 = vpop.f32.mrf.mxu0
      %v3941 = vadd.f32 %v3852, %v3940
      %v3942 = vpop.f32.mrf.mxu0
      %v3943 = vadd.f32 %v3854, %v3942
      %3944 = vmatmul.bf16.gmra.mxu0 %v658
      %v3945 = vpop.f32.mrf.mxu0
      %v3946 = vadd.f32 %v3857, %v3945
      %v3947 = vpop.f32.mrf.mxu0
      %v3948 = vadd.f32 %v3859, %v3947
      %3949 = vmatmul.bf16.gmra.mxu0 %v665
      %v3950 = vpop.f32.mrf.mxu0
      %v3951 = vadd.f32 %v3862, %v3950
      %v3952 = vpop.f32.mrf.mxu0
      %v3953 = vadd.f32 %v3864, %v3952
      %3954 = vmatmul.bf16.gmra.mxu0 %v672
      %v3955 = vpop.f32.mrf.mxu0
      %v3956 = vadd.f32 %v3867, %v3955
      %v3957 = vpop.f32.mrf.mxu0
      %v3958 = vadd.f32 %v3869, %v3957
      %3959 = vdwg.mxu0
      %3960 = vmatpush.bf16.msra.mxu0 %v1567
      %3961 = vmatpush.bf16.msra.mxu0 %v1563
      %3962 = vmatpush.bf16.msra.mxu0 %v1559
      %3963 = vmatpush.bf16.msra.mxu0 %v1555
      %3964 = vmatpush.bf16.msra.mxu0 %v1551
      %3965 = vmatpush.bf16.msra.mxu0 %v1547
      %3966 = vmatpush.bf16.msra.mxu0 %v1543
      %3967 = vmatpush.bf16.msra.mxu0 %v1539
      %3968 = vmatmul.bf16.gmra.mxu0 %v568
      %v3969 = vpop.f32.mrf.mxu0
      %v3970 = vadd.f32 %v3881, %v3969
      %v3971 = vpop.f32.mrf.mxu0
      %v3972 = vadd.f32 %v3883, %v3971
      %3973 = vmatmul.bf16.gmra.mxu0 %v575
      %v3974 = vpop.f32.mrf.mxu0
      %v3975 = vadd.f32 %v3886, %v3974
      %v3976 = vpop.f32.mrf.mxu0
      %v3977 = vadd.f32 %v3888, %v3976
      %3978 = vmatmul.bf16.gmra.mxu0 %v582
      %v3979 = vpop.f32.mrf.mxu0
      %v3980 = vadd.f32 %v3891, %v3979
      %v3981 = vpop.f32.mrf.mxu0
      %v3982 = vadd.f32 %v3893, %v3981
      %3983 = vmatmul.bf16.gmra.mxu0 %v589
      %v3984 = vpop.f32.mrf.mxu0
      %v3985 = vadd.f32 %v3896, %v3984
      %v3986 = vpop.f32.mrf.mxu0
      %v3987 = vadd.f32 %v3898, %v3986
      %3988 = vmatmul.bf16.gmra.mxu0 %v596
      %v3989 = vpop.f32.mrf.mxu0
      %v3990 = vadd.f32 %v3901, %v3989
      %v3991 = vpop.f32.mrf.mxu0
      %v3992 = vadd.f32 %v3903, %v3991
      %3993 = vmatmul.bf16.gmra.mxu0 %v603
      %v3994 = vpop.f32.mrf.mxu0
      %v3995 = vadd.f32 %v3906, %v3994
      %v3996 = vpop.f32.mrf.mxu0
      %v3997 = vadd.f32 %v3908, %v3996
      %3998 = vmatmul.bf16.gmra.mxu0 %v610
      %v3999 = vpop.f32.mrf.mxu0
      %v4000 = vadd.f32 %v3911, %v3999
      %v4001 = vpop.f32.mrf.mxu0
      %v4002 = vadd.f32 %v3913, %v4001
      %4003 = vmatmul.bf16.gmra.mxu0 %v617
      %v4004 = vpop.f32.mrf.mxu0
      %v4005 = vadd.f32 %v3916, %v4004
      %v4006 = vpop.f32.mrf.mxu0
      %v4007 = vadd.f32 %v3918, %v4006
      %4008 = vmatmul.bf16.gmra.mxu0 %v624
      %v4009 = vpop.f32.mrf.mxu0
      %v4010 = vadd.f32 %v3921, %v4009
      %v4011 = vpop.f32.mrf.mxu0
      %v4012 = vadd.f32 %v3923, %v4011
      %4013 = vmatmul.bf16.gmra.mxu0 %v631
      %v4014 = vpop.f32.mrf.mxu0
      %v4015 = vadd.f32 %v3926, %v4014
      %v4016 = vpop.f32.mrf.mxu0
      %v4017 = vadd.f32 %v3928, %v4016
      %4018 = vmatmul.bf16.gmra.mxu0 %v638
      %v4019 = vpop.f32.mrf.mxu0
      %v4020 = vadd.f32 %v3931, %v4019
      %v4021 = vpop.f32.mrf.mxu0
      %v4022 = vadd.f32 %v3933, %v4021
      %4023 = vmatmul.bf16.gmra.mxu0 %v645
      %v4024 = vpop.f32.mrf.mxu0
      %v4025 = vadd.f32 %v3936, %v4024
      %v4026 = vpop.f32.mrf.mxu0
      %v4027 = vadd.f32 %v3938, %v4026
      %4028 = vmatmul.bf16.gmra.mxu0 %v652
      %v4029 = vpop.f32.mrf.mxu0
      %v4030 = vadd.f32 %v3941, %v4029
      %v4031 = vpop.f32.mrf.mxu0
      %v4032 = vadd.f32 %v3943, %v4031
      %4033 = vmatmul.bf16.gmra.mxu0 %v659
      %v4034 = vpop.f32.mrf.mxu0
      %v4035 = vadd.f32 %v3946, %v4034
      %v4036 = vpop.f32.mrf.mxu0
      %v4037 = vadd.f32 %v3948, %v4036
      %4038 = vmatmul.bf16.gmra.mxu0 %v666
      %v4039 = vpop.f32.mrf.mxu0
      %v4040 = vadd.f32 %v3951, %v4039
      %v4041 = vpop.f32.mrf.mxu0
      %v4042 = vadd.f32 %v3953, %v4041
      %4043 = vmatmul.bf16.gmra.mxu0 %v673
      %v4044 = vpop.f32.mrf.mxu0
      %v4045 = vadd.f32 %v3956, %v4044
      %v4046 = vpop.f32.mrf.mxu0
      %v4047 = vadd.f32 %v3958, %v4046
      %4048 = vdwg.mxu0
      %4049 = vmatpush.bf16.msra.mxu0 %v1599
      %4050 = vmatpush.bf16.msra.mxu0 %v1595
      %4051 = vmatpush.bf16.msra.mxu0 %v1591
      %4052 = vmatpush.bf16.msra.mxu0 %v1587
      %4053 = vmatpush.bf16.msra.mxu0 %v1583
      %4054 = vmatpush.bf16.msra.mxu0 %v1579
      %4055 = vmatpush.bf16.msra.mxu0 %v1575
      %4056 = vmatpush.bf16.msra.mxu0 %v1571
      %4057 = vmatmul.bf16.gmra.mxu0 %v569
      %v4058 = vpop.f32.mrf.mxu0
      %v4059 = vadd.f32 %v3970, %v4058
      %v4060 = vpop.f32.mrf.mxu0
      %v4061 = vadd.f32 %v3972, %v4060
      %4062 = vmatmul.bf16.gmra.mxu0 %v576
      %v4063 = vpop.f32.mrf.mxu0
      %v4064 = vadd.f32 %v3975, %v4063
      %v4065 = vpop.f32.mrf.mxu0
      %v4066 = vadd.f32 %v3977, %v4065
      %4067 = vmatmul.bf16.gmra.mxu0 %v583
      %v4068 = vpop.f32.mrf.mxu0
      %v4069 = vadd.f32 %v3980, %v4068
      %v4070 = vpop.f32.mrf.mxu0
      %v4071 = vadd.f32 %v3982, %v4070
      %4072 = vmatmul.bf16.gmra.mxu0 %v590
      %v4073 = vpop.f32.mrf.mxu0
      %v4074 = vadd.f32 %v3985, %v4073
      %v4075 = vpop.f32.mrf.mxu0
      %v4076 = vadd.f32 %v3987, %v4075
      %4077 = vmatmul.bf16.gmra.mxu0 %v597
      %v4078 = vpop.f32.mrf.mxu0
      %v4079 = vadd.f32 %v3990, %v4078
      %v4080 = vpop.f32.mrf.mxu0
      %v4081 = vadd.f32 %v3992, %v4080
      %4082 = vmatmul.bf16.gmra.mxu0 %v604
      %v4083 = vpop.f32.mrf.mxu0
      %v4084 = vadd.f32 %v3995, %v4083
      %v4085 = vpop.f32.mrf.mxu0
      %v4086 = vadd.f32 %v3997, %v4085
      %4087 = vmatmul.bf16.gmra.mxu0 %v611
      %v4088 = vpop.f32.mrf.mxu0
      %v4089 = vadd.f32 %v4000, %v4088
      %v4090 = vpop.f32.mrf.mxu0
      %v4091 = vadd.f32 %v4002, %v4090
      %4092 = vmatmul.bf16.gmra.mxu0 %v618
      %v4093 = vpop.f32.mrf.mxu0
      %v4094 = vadd.f32 %v4005, %v4093
      %v4095 = vpop.f32.mrf.mxu0
      %v4096 = vadd.f32 %v4007, %v4095
      %4097 = vmatmul.bf16.gmra.mxu0 %v625
      %v4098 = vpop.f32.mrf.mxu0
      %v4099 = vadd.f32 %v4010, %v4098
      %v4100 = vpop.f32.mrf.mxu0
      %v4101 = vadd.f32 %v4012, %v4100
      %4102 = vmatmul.bf16.gmra.mxu0 %v632
      %v4103 = vpop.f32.mrf.mxu0
      %v4104 = vadd.f32 %v4015, %v4103
      %v4105 = vpop.f32.mrf.mxu0
      %v4106 = vadd.f32 %v4017, %v4105
      %4107 = vmatmul.bf16.gmra.mxu0 %v639
      %v4108 = vpop.f32.mrf.mxu0
      %v4109 = vadd.f32 %v4020, %v4108
      %v4110 = vpop.f32.mrf.mxu0
      %v4111 = vadd.f32 %v4022, %v4110
      %4112 = vmatmul.bf16.gmra.mxu0 %v646
      %v4113 = vpop.f32.mrf.mxu0
      %v4114 = vadd.f32 %v4025, %v4113
      %v4115 = vpop.f32.mrf.mxu0
      %v4116 = vadd.f32 %v4027, %v4115
      %4117 = vmatmul.bf16.gmra.mxu0 %v653
      %v4118 = vpop.f32.mrf.mxu0
      %v4119 = vadd.f32 %v4030, %v4118
      %v4120 = vpop.f32.mrf.mxu0
      %v4121 = vadd.f32 %v4032, %v4120
      %4122 = vmatmul.bf16.gmra.mxu0 %v660
      %v4123 = vpop.f32.mrf.mxu0
      %v4124 = vadd.f32 %v4035, %v4123
      %v4125 = vpop.f32.mrf.mxu0
      %v4126 = vadd.f32 %v4037, %v4125
      %4127 = vmatmul.bf16.gmra.mxu0 %v667
      %v4128 = vpop.f32.mrf.mxu0
      %v4129 = vadd.f32 %v4040, %v4128
      %v4130 = vpop.f32.mrf.mxu0
      %v4131 = vadd.f32 %v4042, %v4130
      %4132 = vmatmul.bf16.gmra.mxu0 %v674
      %v4133 = vpop.f32.mrf.mxu0
      %v4134 = vadd.f32 %v4045, %v4133
      %v4135 = vpop.f32.mrf.mxu0
      %v4136 = vadd.f32 %v4047, %v4135
      %4137 = vdwg.mxu0
      %4138 = vmatpush.bf16.msra.mxu0 %v1631
      %4139 = vmatpush.bf16.msra.mxu0 %v1627
      %4140 = vmatpush.bf16.msra.mxu0 %v1623
      %4141 = vmatpush.bf16.msra.mxu0 %v1619
      %4142 = vmatpush.bf16.msra.mxu0 %v1615
      %4143 = vmatpush.bf16.msra.mxu0 %v1611
      %4144 = vmatpush.bf16.msra.mxu0 %v1607
      %4145 = vmatpush.bf16.msra.mxu0 %v1603
      %4146 = vmatmul.bf16.gmra.mxu0 %v570
      %v4147 = vpop.f32.mrf.mxu0
      %v4148 = vadd.f32 %v4059, %v4147
      %v4149 = vpop.f32.mrf.mxu0
      %v4150 = vadd.f32 %v4061, %v4149
      %4151 = vmatmul.bf16.gmra.mxu0 %v577
      %v4152 = vpop.f32.mrf.mxu0
      %v4153 = vadd.f32 %v4064, %v4152
      %v4154 = vpop.f32.mrf.mxu0
      %v4155 = vadd.f32 %v4066, %v4154
      %4156 = vmatmul.bf16.gmra.mxu0 %v584
      %v4157 = vpop.f32.mrf.mxu0
      %v4158 = vadd.f32 %v4069, %v4157
      %v4159 = vpop.f32.mrf.mxu0
      %v4160 = vadd.f32 %v4071, %v4159
      %4161 = vmatmul.bf16.gmra.mxu0 %v591
      %v4162 = vpop.f32.mrf.mxu0
      %v4163 = vadd.f32 %v4074, %v4162
      %v4164 = vpop.f32.mrf.mxu0
      %v4165 = vadd.f32 %v4076, %v4164
      %4166 = vmatmul.bf16.gmra.mxu0 %v598
      %v4167 = vpop.f32.mrf.mxu0
      %v4168 = vadd.f32 %v4079, %v4167
      %v4169 = vpop.f32.mrf.mxu0
      %v4170 = vadd.f32 %v4081, %v4169
      %4171 = vmatmul.bf16.gmra.mxu0 %v605
      %v4172 = vpop.f32.mrf.mxu0
      %v4173 = vadd.f32 %v4084, %v4172
      %v4174 = vpop.f32.mrf.mxu0
      %v4175 = vadd.f32 %v4086, %v4174
      %4176 = vmatmul.bf16.gmra.mxu0 %v612
      %v4177 = vpop.f32.mrf.mxu0
      %v4178 = vadd.f32 %v4089, %v4177
      %v4179 = vpop.f32.mrf.mxu0
      %v4180 = vadd.f32 %v4091, %v4179
      %4181 = vmatmul.bf16.gmra.mxu0 %v619
      %v4182 = vpop.f32.mrf.mxu0
      %v4183 = vadd.f32 %v4094, %v4182
      %v4184 = vpop.f32.mrf.mxu0
      %v4185 = vadd.f32 %v4096, %v4184
      %4186 = vmatmul.bf16.gmra.mxu0 %v626
      %v4187 = vpop.f32.mrf.mxu0
      %v4188 = vadd.f32 %v4099, %v4187
      %v4189 = vpop.f32.mrf.mxu0
      %v4190 = vadd.f32 %v4101, %v4189
      %4191 = vmatmul.bf16.gmra.mxu0 %v633
      %v4192 = vpop.f32.mrf.mxu0
      %v4193 = vadd.f32 %v4104, %v4192
      %v4194 = vpop.f32.mrf.mxu0
      %v4195 = vadd.f32 %v4106, %v4194
      %4196 = vmatmul.bf16.gmra.mxu0 %v640
      %v4197 = vpop.f32.mrf.mxu0
      %v4198 = vadd.f32 %v4109, %v4197
      %v4199 = vpop.f32.mrf.mxu0
      %v4200 = vadd.f32 %v4111, %v4199
      %4201 = vmatmul.bf16.gmra.mxu0 %v647
      %v4202 = vpop.f32.mrf.mxu0
      %v4203 = vadd.f32 %v4114, %v4202
      %v4204 = vpop.f32.mrf.mxu0
      %v4205 = vadd.f32 %v4116, %v4204
      %4206 = vmatmul.bf16.gmra.mxu0 %v654
      %v4207 = vpop.f32.mrf.mxu0
      %v4208 = vadd.f32 %v4119, %v4207
      %v4209 = vpop.f32.mrf.mxu0
      %v4210 = vadd.f32 %v4121, %v4209
      %4211 = vmatmul.bf16.gmra.mxu0 %v661
      %v4212 = vpop.f32.mrf.mxu0
      %v4213 = vadd.f32 %v4124, %v4212
      %v4214 = vpop.f32.mrf.mxu0
      %v4215 = vadd.f32 %v4126, %v4214
      %4216 = vmatmul.bf16.gmra.mxu0 %v668
      %v4217 = vpop.f32.mrf.mxu0
      %v4218 = vadd.f32 %v4129, %v4217
      %v4219 = vpop.f32.mrf.mxu0
      %v4220 = vadd.f32 %v4131, %v4219
      %4221 = vmatmul.bf16.gmra.mxu0 %v675
      %v4222 = vpop.f32.mrf.mxu0
      %v4223 = vadd.f32 %v4134, %v4222
      %v4224 = vpop.f32.mrf.mxu0
      %v4225 = vadd.f32 %v4136, %v4224
      %4226 = vdwg.mxu0
      %4227 = vmatpush.bf16.msra.mxu0 %v1663
      %4228 = vmatpush.bf16.msra.mxu0 %v1659
      %4229 = vmatpush.bf16.msra.mxu0 %v1655
      %4230 = vmatpush.bf16.msra.mxu0 %v1651
      %4231 = vmatpush.bf16.msra.mxu0 %v1647
      %4232 = vmatpush.bf16.msra.mxu0 %v1643
      %4233 = vmatpush.bf16.msra.mxu0 %v1639
      %4234 = vmatpush.bf16.msra.mxu0 %v1635
      %4235 = vmatmul.bf16.gmra.mxu0 %v571
      %v4236 = vpop.f32.mrf.mxu0
      %v4237 = vadd.f32 %v4148, %v4236
      %v4238 = vpop.f32.mrf.mxu0
      %v4239 = vadd.f32 %v4150, %v4238
      %4240 = vmatmul.bf16.gmra.mxu0 %v578
      %v4241 = vpop.f32.mrf.mxu0
      %v4242 = vadd.f32 %v4153, %v4241
      %v4243 = vpop.f32.mrf.mxu0
      %v4244 = vadd.f32 %v4155, %v4243
      %4245 = vmatmul.bf16.gmra.mxu0 %v585
      %v4246 = vpop.f32.mrf.mxu0
      %v4247 = vadd.f32 %v4158, %v4246
      %v4248 = vpop.f32.mrf.mxu0
      %v4249 = vadd.f32 %v4160, %v4248
      %4250 = vmatmul.bf16.gmra.mxu0 %v592
      %v4251 = vpop.f32.mrf.mxu0
      %v4252 = vadd.f32 %v4163, %v4251
      %v4253 = vpop.f32.mrf.mxu0
      %v4254 = vadd.f32 %v4165, %v4253
      %4255 = vmatmul.bf16.gmra.mxu0 %v599
      %v4256 = vpop.f32.mrf.mxu0
      %v4257 = vadd.f32 %v4168, %v4256
      %v4258 = vpop.f32.mrf.mxu0
      %v4259 = vadd.f32 %v4170, %v4258
      %4260 = vmatmul.bf16.gmra.mxu0 %v606
      %v4261 = vpop.f32.mrf.mxu0
      %v4262 = vadd.f32 %v4173, %v4261
      %v4263 = vpop.f32.mrf.mxu0
      %v4264 = vadd.f32 %v4175, %v4263
      %4265 = vmatmul.bf16.gmra.mxu0 %v613
      %v4266 = vpop.f32.mrf.mxu0
      %v4267 = vadd.f32 %v4178, %v4266
      %v4268 = vpop.f32.mrf.mxu0
      %v4269 = vadd.f32 %v4180, %v4268
      %4270 = vmatmul.bf16.gmra.mxu0 %v620
      %v4271 = vpop.f32.mrf.mxu0
      %v4272 = vadd.f32 %v4183, %v4271
      %v4273 = vpop.f32.mrf.mxu0
      %v4274 = vadd.f32 %v4185, %v4273
      %4275 = vmatmul.bf16.gmra.mxu0 %v627
      %v4276 = vpop.f32.mrf.mxu0
      %v4277 = vadd.f32 %v4188, %v4276
      %v4278 = vpop.f32.mrf.mxu0
      %v4279 = vadd.f32 %v4190, %v4278
      %4280 = vmatmul.bf16.gmra.mxu0 %v634
      %v4281 = vpop.f32.mrf.mxu0
      %v4282 = vadd.f32 %v4193, %v4281
      %v4283 = vpop.f32.mrf.mxu0
      %v4284 = vadd.f32 %v4195, %v4283
      %4285 = vmatmul.bf16.gmra.mxu0 %v641
      %v4286 = vpop.f32.mrf.mxu0
      %v4287 = vadd.f32 %v4198, %v4286
      %v4288 = vpop.f32.mrf.mxu0
      %v4289 = vadd.f32 %v4200, %v4288
      %4290 = vmatmul.bf16.gmra.mxu0 %v648
      %v4291 = vpop.f32.mrf.mxu0
      %v4292 = vadd.f32 %v4203, %v4291
      %v4293 = vpop.f32.mrf.mxu0
      %v4294 = vadd.f32 %v4205, %v4293
      %4295 = vmatmul.bf16.gmra.mxu0 %v655
      %v4296 = vpop.f32.mrf.mxu0
      %v4297 = vadd.f32 %v4208, %v4296
      %v4298 = vpop.f32.mrf.mxu0
      %v4299 = vadd.f32 %v4210, %v4298
      %4300 = vmatmul.bf16.gmra.mxu0 %v662
      %v4301 = vpop.f32.mrf.mxu0
      %v4302 = vadd.f32 %v4213, %v4301
      %v4303 = vpop.f32.mrf.mxu0
      %v4304 = vadd.f32 %v4215, %v4303
      %4305 = vmatmul.bf16.gmra.mxu0 %v669
      %v4306 = vpop.f32.mrf.mxu0
      %v4307 = vadd.f32 %v4218, %v4306
      %v4308 = vpop.f32.mrf.mxu0
      %v4309 = vadd.f32 %v4220, %v4308
      %4310 = vmatmul.bf16.gmra.mxu0 %v676
      %v4311 = vpop.f32.mrf.mxu0
      %v4312 = vadd.f32 %v4223, %v4311
      %v4313 = vpop.f32.mrf.mxu0
      %v4314 = vadd.f32 %v4225, %v4313
      %4315 = vdwg.mxu0
      %4316 = vmatpush.bf16.msra.mxu0 0
      %4317 = vmatpush.bf16.msra.mxu0 0
      %4318 = vmatpush.bf16.msra.mxu0 0
      %4319 = vmatpush.bf16.msra.mxu0 0
      %4320 = vmatpush.bf16.msra.mxu0 0
      %4321 = vmatpush.bf16.msra.mxu0 0
      %4322 = vmatpush.bf16.msra.mxu0 0
      %4323 = vmatpush.bf16.msra.mxu0 %v1667
      %4324 = vmatmul.bf16.gmra.mxu0 %v1866
      %v4325 = vpop.f32.mrf.mxu0
      %v4326 = vadd.f32 %v4237, %v4325
      %v4327 = vpop.f32.mrf.mxu0
      %v4328 = vadd.f32 %v4239, %v4327
      %4329 = vmatmul.bf16.gmra.mxu0 %v1869
      %v4330 = vpop.f32.mrf.mxu0
      %v4331 = vadd.f32 %v4242, %v4330
      %v4332 = vpop.f32.mrf.mxu0
      %v4333 = vadd.f32 %v4244, %v4332
      %4334 = vmatmul.bf16.gmra.mxu0 %v1872
      %v4335 = vpop.f32.mrf.mxu0
      %v4336 = vadd.f32 %v4247, %v4335
      %v4337 = vpop.f32.mrf.mxu0
      %v4338 = vadd.f32 %v4249, %v4337
      %4339 = vmatmul.bf16.gmra.mxu0 %v1875
      %v4340 = vpop.f32.mrf.mxu0
      %v4341 = vadd.f32 %v4252, %v4340
      %v4342 = vpop.f32.mrf.mxu0
      %v4343 = vadd.f32 %v4254, %v4342
      %4344 = vmatmul.bf16.gmra.mxu0 %v1878
      %v4345 = vpop.f32.mrf.mxu0
      %v4346 = vadd.f32 %v4257, %v4345
      %v4347 = vpop.f32.mrf.mxu0
      %v4348 = vadd.f32 %v4259, %v4347
      %4349 = vmatmul.bf16.gmra.mxu0 %v1881
      %v4350 = vpop.f32.mrf.mxu0
      %v4351 = vadd.f32 %v4262, %v4350
      %v4352 = vpop.f32.mrf.mxu0
      %v4353 = vadd.f32 %v4264, %v4352
      %4354 = vmatmul.bf16.gmra.mxu0 %v1884
      %v4355 = vpop.f32.mrf.mxu0
      %v4356 = vadd.f32 %v4267, %v4355
      %v4357 = vpop.f32.mrf.mxu0
      %v4358 = vadd.f32 %v4269, %v4357
      %4359 = vmatmul.bf16.gmra.mxu0 %v1887
      %v4360 = vpop.f32.mrf.mxu0
      %v4361 = vadd.f32 %v4272, %v4360
      %v4362 = vpop.f32.mrf.mxu0
      %v4363 = vadd.f32 %v4274, %v4362
      %4364 = vmatmul.bf16.gmra.mxu0 %v1890
      %v4365 = vpop.f32.mrf.mxu0
      %v4366 = vadd.f32 %v4277, %v4365
      %v4367 = vpop.f32.mrf.mxu0
      %v4368 = vadd.f32 %v4279, %v4367
      %4369 = vmatmul.bf16.gmra.mxu0 %v1893
      %v4370 = vpop.f32.mrf.mxu0
      %v4371 = vadd.f32 %v4282, %v4370
      %v4372 = vpop.f32.mrf.mxu0
      %v4373 = vadd.f32 %v4284, %v4372
      %4374 = vmatmul.bf16.gmra.mxu0 %v1896
      %v4375 = vpop.f32.mrf.mxu0
      %v4376 = vadd.f32 %v4287, %v4375
      %v4377 = vpop.f32.mrf.mxu0
      %v4378 = vadd.f32 %v4289, %v4377
      %4379 = vmatmul.bf16.gmra.mxu0 %v1899
      %v4380 = vpop.f32.mrf.mxu0
      %v4381 = vadd.f32 %v4292, %v4380
      %v4382 = vpop.f32.mrf.mxu0
      %v4383 = vadd.f32 %v4294, %v4382
      %4384 = vmatmul.bf16.gmra.mxu0 %v1902
      %v4385 = vpop.f32.mrf.mxu0
      %v4386 = vadd.f32 %v4297, %v4385
      %v4387 = vpop.f32.mrf.mxu0
      %v4388 = vadd.f32 %v4299, %v4387
      %4389 = vmatmul.bf16.gmra.mxu0 %v1905
      %v4390 = vpop.f32.mrf.mxu0
      %v4391 = vadd.f32 %v4302, %v4390
      %v4392 = vpop.f32.mrf.mxu0
      %v4393 = vadd.f32 %v4304, %v4392
      %4394 = vmatmul.bf16.gmra.mxu0 %v1908
      %v4395 = vpop.f32.mrf.mxu0
      %v4396 = vadd.f32 %v4307, %v4395
      %v4397 = vpop.f32.mrf.mxu0
      %v4398 = vadd.f32 %v4309, %v4397
      %4399 = vmatmul.bf16.gmra.mxu0 %v1911
      %v4400 = vpop.f32.mrf.mxu0
      %v4401 = vadd.f32 %v4312, %v4400
      %v4402 = vpop.f32.mrf.mxu0
      %v4403 = vadd.f32 %v4314, %v4402
      %4404 = vdwg.mxu0
      %vm4405 = vcmp.gt.f32.partialorder %v2457, 0.0
      %vm4406 = vcmp.gt.f32.partialorder %v3080, 0.0
      %vm4407 = vcmp.gt.f32.partialorder %v3703, 0.0
      %vm4408 = vcmp.gt.f32.partialorder %v4326, 0.0
      %vm4409 = vcmp.gt.f32.partialorder %v2459, 0.0
      %vm4410 = vcmp.gt.f32.partialorder %v3082, 0.0
      %vm4411 = vcmp.gt.f32.partialorder %v3705, 0.0
      %vm4412 = vcmp.gt.f32.partialorder %v4328, 0.0
      %vm4413 = vcmp.gt.f32.partialorder %v2462, 0.0
      %vm4414 = vcmp.gt.f32.partialorder %v3085, 0.0
      %vm4415 = vcmp.gt.f32.partialorder %v3708, 0.0
      %vm4416 = vcmp.gt.f32.partialorder %v4331, 0.0
      %vm4417 = vcmp.gt.f32.partialorder %v2464, 0.0
      %vm4418 = vcmp.gt.f32.partialorder %v3087, 0.0
      %vm4419 = vcmp.gt.f32.partialorder %v3710, 0.0
      %vm4420 = vcmp.gt.f32.partialorder %v4333, 0.0
      %vm4421 = vcmp.gt.f32.partialorder %v2467, 0.0
      %vm4422 = vcmp.gt.f32.partialorder %v3090, 0.0
      %vm4423 = vcmp.gt.f32.partialorder %v3713, 0.0
      %vm4424 = vcmp.gt.f32.partialorder %v4336, 0.0
      %vm4425 = vcmp.gt.f32.partialorder %v2469, 0.0
      %vm4426 = vcmp.gt.f32.partialorder %v3092, 0.0
      %vm4427 = vcmp.gt.f32.partialorder %v3715, 0.0
      %vm4428 = vcmp.gt.f32.partialorder %v4338, 0.0
      %vm4429 = vcmp.gt.f32.partialorder %v2472, 0.0
      %vm4430 = vcmp.gt.f32.partialorder %v3095, 0.0
      %vm4431 = vcmp.gt.f32.partialorder %v3718, 0.0
      %vm4432 = vcmp.gt.f32.partialorder %v4341, 0.0
      %vm4433 = vcmp.gt.f32.partialorder %v2474, 0.0
      %vm4434 = vcmp.gt.f32.partialorder %v3097, 0.0
      %vm4435 = vcmp.gt.f32.partialorder %v3720, 0.0
      %vm4436 = vcmp.gt.f32.partialorder %v4343, 0.0
      %vm4437 = vcmp.gt.f32.partialorder %v2477, 0.0
      %vm4438 = vcmp.gt.f32.partialorder %v3100, 0.0
      %vm4439 = vcmp.gt.f32.partialorder %v3723, 0.0
      %vm4440 = vcmp.gt.f32.partialorder %v4346, 0.0
      %vm4441 = vcmp.gt.f32.partialorder %v2479, 0.0
      %vm4442 = vcmp.gt.f32.partialorder %v3102, 0.0
      %vm4443 = vcmp.gt.f32.partialorder %v3725, 0.0
      %vm4444 = vcmp.gt.f32.partialorder %v4348, 0.0
      %vm4445 = vcmp.gt.f32.partialorder %v2482, 0.0
      %vm4446 = vcmp.gt.f32.partialorder %v3105, 0.0
      %vm4447 = vcmp.gt.f32.partialorder %v3728, 0.0
      %vm4448 = vcmp.gt.f32.partialorder %v4351, 0.0
      %vm4449 = vcmp.gt.f32.partialorder %v2484, 0.0
      %vm4450 = vcmp.gt.f32.partialorder %v3107, 0.0
      %vm4451 = vcmp.gt.f32.partialorder %v3730, 0.0
      %vm4452 = vcmp.gt.f32.partialorder %v4353, 0.0
      %vm4453 = vcmp.gt.f32.partialorder %v2487, 0.0
      %vm4454 = vcmp.gt.f32.partialorder %v3110, 0.0
      %vm4455 = vcmp.gt.f32.partialorder %v3733, 0.0
      %vm4456 = vcmp.gt.f32.partialorder %v4356, 0.0
      %vm4457 = vcmp.gt.f32.partialorder %v2489, 0.0
      %vm4458 = vcmp.gt.f32.partialorder %v3112, 0.0
      %vm4459 = vcmp.gt.f32.partialorder %v3735, 0.0
      %vm4460 = vcmp.gt.f32.partialorder %v4358, 0.0
      %vm4461 = vcmp.gt.f32.partialorder %v2492, 0.0
      %vm4462 = vcmp.gt.f32.partialorder %v3115, 0.0
      %vm4463 = vcmp.gt.f32.partialorder %v3738, 0.0
      %vm4464 = vcmp.gt.f32.partialorder %v4361, 0.0
      %vm4465 = vcmp.gt.f32.partialorder %v2494, 0.0
      %vm4466 = vcmp.gt.f32.partialorder %v3117, 0.0
      %vm4467 = vcmp.gt.f32.partialorder %v3740, 0.0
      %vm4468 = vcmp.gt.f32.partialorder %v4363, 0.0
      %vm4469 = vcmp.gt.f32.partialorder %v2497, 0.0
      %vm4470 = vcmp.gt.f32.partialorder %v3120, 0.0
      %vm4471 = vcmp.gt.f32.partialorder %v3743, 0.0
      %vm4472 = vcmp.gt.f32.partialorder %v4366, 0.0
      %vm4473 = vcmp.gt.f32.partialorder %v2499, 0.0
      %vm4474 = vcmp.gt.f32.partialorder %v3122, 0.0
      %vm4475 = vcmp.gt.f32.partialorder %v3745, 0.0
      %vm4476 = vcmp.gt.f32.partialorder %v4368, 0.0
      %vm4477 = vcmp.gt.f32.partialorder %v2502, 0.0
      %vm4478 = vcmp.gt.f32.partialorder %v3125, 0.0
      %vm4479 = vcmp.gt.f32.partialorder %v3748, 0.0
      %vm4480 = vcmp.gt.f32.partialorder %v4371, 0.0
      %vm4481 = vcmp.gt.f32.partialorder %v2504, 0.0
      %vm4482 = vcmp.gt.f32.partialorder %v3127, 0.0
      %vm4483 = vcmp.gt.f32.partialorder %v3750, 0.0
      %vm4484 = vcmp.gt.f32.partialorder %v4373, 0.0
      %vm4485 = vcmp.gt.f32.partialorder %v2507, 0.0
      %vm4486 = vcmp.gt.f32.partialorder %v3130, 0.0
      %vm4487 = vcmp.gt.f32.partialorder %v3753, 0.0
      %vm4488 = vcmp.gt.f32.partialorder %v4376, 0.0
      %vm4489 = vcmp.gt.f32.partialorder %v2509, 0.0
      %vm4490 = vcmp.gt.f32.partialorder %v3132, 0.0
      %vm4491 = vcmp.gt.f32.partialorder %v3755, 0.0
      %vm4492 = vcmp.gt.f32.partialorder %v4378, 0.0
      %vm4493 = vcmp.gt.f32.partialorder %v2512, 0.0
      %vm4494 = vcmp.gt.f32.partialorder %v3135, 0.0
      %vm4495 = vcmp.gt.f32.partialorder %v3758, 0.0
      %vm4496 = vcmp.gt.f32.partialorder %v4381, 0.0
      %vm4497 = vcmp.gt.f32.partialorder %v2514, 0.0
      %vm4498 = vcmp.gt.f32.partialorder %v3137, 0.0
      %vm4499 = vcmp.gt.f32.partialorder %v3760, 0.0
      %vm4500 = vcmp.gt.f32.partialorder %v4383, 0.0
      %vm4501 = vcmp.gt.f32.partialorder %v2517, 0.0
      %vm4502 = vcmp.gt.f32.partialorder %v3140, 0.0
      %vm4503 = vcmp.gt.f32.partialorder %v3763, 0.0
      %vm4504 = vcmp.gt.f32.partialorder %v4386, 0.0
      %vm4505 = vcmp.gt.f32.partialorder %v2519, 0.0
      %vm4506 = vcmp.gt.f32.partialorder %v3142, 0.0
      %vm4507 = vcmp.gt.f32.partialorder %v3765, 0.0
      %vm4508 = vcmp.gt.f32.partialorder %v4388, 0.0
      %vm4509 = vcmp.gt.f32.partialorder %v2522, 0.0
      %vm4510 = vcmp.gt.f32.partialorder %v3145, 0.0
      %vm4511 = vcmp.gt.f32.partialorder %v3768, 0.0
      %vm4512 = vcmp.gt.f32.partialorder %v4391, 0.0
      %vm4513 = vcmp.gt.f32.partialorder %v2524, 0.0
      %vm4514 = vcmp.gt.f32.partialorder %v3147, 0.0
      %vm4515 = vcmp.gt.f32.partialorder %v3770, 0.0
      %vm4516 = vcmp.gt.f32.partialorder %v4393, 0.0
      %vm4517 = vcmp.gt.f32.partialorder %v2527, 0.0
      %vm4518 = vcmp.gt.f32.partialorder %v3150, 0.0
      %vm4519 = vcmp.gt.f32.partialorder %v3773, 0.0
      %vm4520 = vcmp.gt.f32.partialorder %v4396, 0.0
      %vm4521 = vcmp.gt.f32.partialorder %v2529, 0.0
      %vm4522 = vcmp.gt.f32.partialorder %v3152, 0.0
      %vm4523 = vcmp.gt.f32.partialorder %v3775, 0.0
      %vm4524 = vcmp.gt.f32.partialorder %v4398, 0.0
      %vm4525 = vcmp.gt.f32.partialorder %v2532, 0.0
      %vm4526 = vcmp.gt.f32.partialorder %v3155, 0.0
      %vm4527 = vcmp.gt.f32.partialorder %v3778, 0.0
      %vm4528 = vcmp.gt.f32.partialorder %v4401, 0.0
      %vm4529 = vcmp.gt.f32.partialorder %v2534, 0.0
      %vm4530 = vcmp.gt.f32.partialorder %v3157, 0.0
      %vm4531 = vcmp.gt.f32.partialorder %v3780, 0.0
      %vm4532 = vcmp.gt.f32.partialorder %v4403, 0.0
      %v4533 = vmul.f32 %v2457, 0.2
      %v4534 = vmul.f32 %v3080, 0.2
      %v4535 = vmul.f32 %v3703, 0.2
      %v4536 = vmul.f32 %v4326, 0.2
      %v4537 = vmul.f32 %v2459, 0.2
      %v4538 = vmul.f32 %v3082, 0.2
      %v4539 = vmul.f32 %v3705, 0.2
      %v4540 = vmul.f32 %v4328, 0.2
      %v4541 = vmul.f32 %v2462, 0.2
      %v4542 = vmul.f32 %v3085, 0.2
      %v4543 = vmul.f32 %v3708, 0.2
      %v4544 = vmul.f32 %v4331, 0.2
      %v4545 = vmul.f32 %v2464, 0.2
      %v4546 = vmul.f32 %v3087, 0.2
      %v4547 = vmul.f32 %v3710, 0.2
      %v4548 = vmul.f32 %v4333, 0.2
      %v4549 = vmul.f32 %v2467, 0.2
      %v4550 = vmul.f32 %v3090, 0.2
      %v4551 = vmul.f32 %v3713, 0.2
      %v4552 = vmul.f32 %v4336, 0.2
      %v4553 = vmul.f32 %v2469, 0.2
      %v4554 = vmul.f32 %v3092, 0.2
      %v4555 = vmul.f32 %v3715, 0.2
      %v4556 = vmul.f32 %v4338, 0.2
      %v4557 = vmul.f32 %v2472, 0.2
      %v4558 = vmul.f32 %v3095, 0.2
      %v4559 = vmul.f32 %v3718, 0.2
      %v4560 = vmul.f32 %v4341, 0.2
      %v4561 = vmul.f32 %v2474, 0.2
      %v4562 = vmul.f32 %v3097, 0.2
      %v4563 = vmul.f32 %v3720, 0.2
      %v4564 = vmul.f32 %v4343, 0.2
      %v4565 = vmul.f32 %v2477, 0.2
      %v4566 = vmul.f32 %v3100, 0.2
      %v4567 = vmul.f32 %v3723, 0.2
      %v4568 = vmul.f32 %v4346, 0.2
      %v4569 = vmul.f32 %v2479, 0.2
      %v4570 = vmul.f32 %v3102, 0.2
      %v4571 = vmul.f32 %v3725, 0.2
      %v4572 = vmul.f32 %v4348, 0.2
      %v4573 = vmul.f32 %v2482, 0.2
      %v4574 = vmul.f32 %v3105, 0.2
      %v4575 = vmul.f32 %v3728, 0.2
      %v4576 = vmul.f32 %v4351, 0.2
      %v4577 = vmul.f32 %v2484, 0.2
      %v4578 = vmul.f32 %v3107, 0.2
      %v4579 = vmul.f32 %v3730, 0.2
      %v4580 = vmul.f32 %v4353, 0.2
      %v4581 = vmul.f32 %v2487, 0.2
      %v4582 = vmul.f32 %v3110, 0.2
      %v4583 = vmul.f32 %v3733, 0.2
      %v4584 = vmul.f32 %v4356, 0.2
      %v4585 = vmul.f32 %v2489, 0.2
      %v4586 = vmul.f32 %v3112, 0.2
      %v4587 = vmul.f32 %v3735, 0.2
      %v4588 = vmul.f32 %v4358, 0.2
      %v4589 = vmul.f32 %v2492, 0.2
      %v4590 = vmul.f32 %v3115, 0.2
      %v4591 = vmul.f32 %v3738, 0.2
      %v4592 = vmul.f32 %v4361, 0.2
      %v4593 = vmul.f32 %v2494, 0.2
      %v4594 = vmul.f32 %v3117, 0.2
      %v4595 = vmul.f32 %v3740, 0.2
      %v4596 = vmul.f32 %v4363, 0.2
      %v4597 = vmul.f32 %v2497, 0.2
      %v4598 = vmul.f32 %v3120, 0.2
      %v4599 = vmul.f32 %v3743, 0.2
      %v4600 = vmul.f32 %v4366, 0.2
      %v4601 = vmul.f32 %v2499, 0.2
      %v4602 = vmul.f32 %v3122, 0.2
      %v4603 = vmul.f32 %v3745, 0.2
      %v4604 = vmul.f32 %v4368, 0.2
      %v4605 = vmul.f32 %v2502, 0.2
      %v4606 = vmul.f32 %v3125, 0.2
      %v4607 = vmul.f32 %v3748, 0.2
      %v4608 = vmul.f32 %v4371, 0.2
      %v4609 = vmul.f32 %v2504, 0.2
      %v4610 = vmul.f32 %v3127, 0.2
      %v4611 = vmul.f32 %v3750, 0.2
      %v4612 = vmul.f32 %v4373, 0.2
      %v4613 = vmul.f32 %v2507, 0.2
      %v4614 = vmul.f32 %v3130, 0.2
      %v4615 = vmul.f32 %v3753, 0.2
      %v4616 = vmul.f32 %v4376, 0.2
      %v4617 = vmul.f32 %v2509, 0.2
      %v4618 = vmul.f32 %v3132, 0.2
      %v4619 = vmul.f32 %v3755, 0.2
      %v4620 = vmul.f32 %v4378, 0.2
      %v4621 = vmul.f32 %v2512, 0.2
      %v4622 = vmul.f32 %v3135, 0.2
      %v4623 = vmul.f32 %v3758, 0.2
      %v4624 = vmul.f32 %v4381, 0.2
      %v4625 = vmul.f32 %v2514, 0.2
      %v4626 = vmul.f32 %v3137, 0.2
      %v4627 = vmul.f32 %v3760, 0.2
      %v4628 = vmul.f32 %v4383, 0.2
      %v4629 = vmul.f32 %v2517, 0.2
      %v4630 = vmul.f32 %v3140, 0.2
      %v4631 = vmul.f32 %v3763, 0.2
      %v4632 = vmul.f32 %v4386, 0.2
      %v4633 = vmul.f32 %v2519, 0.2
      %v4634 = vmul.f32 %v3142, 0.2
      %v4635 = vmul.f32 %v3765, 0.2
      %v4636 = vmul.f32 %v4388, 0.2
      %v4637 = vmul.f32 %v2522, 0.2
      %v4638 = vmul.f32 %v3145, 0.2
      %v4639 = vmul.f32 %v3768, 0.2
      %v4640 = vmul.f32 %v4391, 0.2
      %v4641 = vmul.f32 %v2524, 0.2
      %v4642 = vmul.f32 %v3147, 0.2
      %v4643 = vmul.f32 %v3770, 0.2
      %v4644 = vmul.f32 %v4393, 0.2
      %v4645 = vmul.f32 %v2527, 0.2
      %v4646 = vmul.f32 %v3150, 0.2
      %v4647 = vmul.f32 %v3773, 0.2
      %v4648 = vmul.f32 %v4396, 0.2
      %v4649 = vmul.f32 %v2529, 0.2
      %v4650 = vmul.f32 %v3152, 0.2
      %v4651 = vmul.f32 %v3775, 0.2
      %v4652 = vmul.f32 %v4398, 0.2
      %v4653 = vmul.f32 %v2532, 0.2
      %v4654 = vmul.f32 %v3155, 0.2
      %v4655 = vmul.f32 %v3778, 0.2
      %v4656 = vmul.f32 %v4401, 0.2
      %v4657 = vmul.f32 %v2534, 0.2
      %v4658 = vmul.f32 %v3157, 0.2
      %v4659 = vmul.f32 %v3780, 0.2
      %v4660 = vmul.f32 %v4403, 0.2
      %v4661 = vsel %vm4405, %v2457, %v4533
      %v4662 = vsel %vm4406, %v3080, %v4534
      %v4663 = vsel %vm4407, %v3703, %v4535
      %v4664 = vsel %vm4408, %v4326, %v4536
      %v4665 = vsel %vm4409, %v2459, %v4537
      %v4666 = vsel %vm4410, %v3082, %v4538
      %v4667 = vsel %vm4411, %v3705, %v4539
      %v4668 = vsel %vm4412, %v4328, %v4540
      %v4669 = vsel %vm4413, %v2462, %v4541
      %v4670 = vsel %vm4414, %v3085, %v4542
      %v4671 = vsel %vm4415, %v3708, %v4543
      %v4672 = vsel %vm4416, %v4331, %v4544
      %v4673 = vsel %vm4417, %v2464, %v4545
      %v4674 = vsel %vm4418, %v3087, %v4546
      %v4675 = vsel %vm4419, %v3710, %v4547
      %v4676 = vsel %vm4420, %v4333, %v4548
      %v4677 = vsel %vm4421, %v2467, %v4549
      %v4678 = vsel %vm4422, %v3090, %v4550
      %v4679 = vsel %vm4423, %v3713, %v4551
      %v4680 = vsel %vm4424, %v4336, %v4552
      %v4681 = vsel %vm4425, %v2469, %v4553
      %v4682 = vsel %vm4426, %v3092, %v4554
      %v4683 = vsel %vm4427, %v3715, %v4555
      %v4684 = vsel %vm4428, %v4338, %v4556
      %v4685 = vsel %vm4429, %v2472, %v4557
      %v4686 = vsel %vm4430, %v3095, %v4558
      %v4687 = vsel %vm4431, %v3718, %v4559
      %v4688 = vsel %vm4432, %v4341, %v4560
      %v4689 = vsel %vm4433, %v2474, %v4561
      %v4690 = vsel %vm4434, %v3097, %v4562
      %v4691 = vsel %vm4435, %v3720, %v4563
      %v4692 = vsel %vm4436, %v4343, %v4564
      %v4693 = vsel %vm4437, %v2477, %v4565
      %v4694 = vsel %vm4438, %v3100, %v4566
      %v4695 = vsel %vm4439, %v3723, %v4567
      %v4696 = vsel %vm4440, %v4346, %v4568
      %v4697 = vsel %vm4441, %v2479, %v4569
      %v4698 = vsel %vm4442, %v3102, %v4570
      %v4699 = vsel %vm4443, %v3725, %v4571
      %v4700 = vsel %vm4444, %v4348, %v4572
      %v4701 = vsel %vm4445, %v2482, %v4573
      %v4702 = vsel %vm4446, %v3105, %v4574
      %v4703 = vsel %vm4447, %v3728, %v4575
      %v4704 = vsel %vm4448, %v4351, %v4576
      %v4705 = vsel %vm4449, %v2484, %v4577
      %v4706 = vsel %vm4450, %v3107, %v4578
      %v4707 = vsel %vm4451, %v3730, %v4579
      %v4708 = vsel %vm4452, %v4353, %v4580
      %v4709 = vsel %vm4453, %v2487, %v4581
      %v4710 = vsel %vm4454, %v3110, %v4582
      %v4711 = vsel %vm4455, %v3733, %v4583
      %v4712 = vsel %vm4456, %v4356, %v4584
      %v4713 = vsel %vm4457, %v2489, %v4585
      %v4714 = vsel %vm4458, %v3112, %v4586
      %v4715 = vsel %vm4459, %v3735, %v4587
      %v4716 = vsel %vm4460, %v4358, %v4588
      %v4717 = vsel %vm4461, %v2492, %v4589
      %v4718 = vsel %vm4462, %v3115, %v4590
      %v4719 = vsel %vm4463, %v3738, %v4591
      %v4720 = vsel %vm4464, %v4361, %v4592
      %v4721 = vsel %vm4465, %v2494, %v4593
      %v4722 = vsel %vm4466, %v3117, %v4594
      %v4723 = vsel %vm4467, %v3740, %v4595
      %v4724 = vsel %vm4468, %v4363, %v4596
      %v4725 = vsel %vm4469, %v2497, %v4597
      %v4726 = vsel %vm4470, %v3120, %v4598
      %v4727 = vsel %vm4471, %v3743, %v4599
      %v4728 = vsel %vm4472, %v4366, %v4600
      %v4729 = vsel %vm4473, %v2499, %v4601
      %v4730 = vsel %vm4474, %v3122, %v4602
      %v4731 = vsel %vm4475, %v3745, %v4603
      %v4732 = vsel %vm4476, %v4368, %v4604
      %v4733 = vsel %vm4477, %v2502, %v4605
      %v4734 = vsel %vm4478, %v3125, %v4606
      %v4735 = vsel %vm4479, %v3748, %v4607
      %v4736 = vsel %vm4480, %v4371, %v4608
      %v4737 = vsel %vm4481, %v2504, %v4609
      %v4738 = vsel %vm4482, %v3127, %v4610
      %v4739 = vsel %vm4483, %v3750, %v4611
      %v4740 = vsel %vm4484, %v4373, %v4612
      %v4741 = vsel %vm4485, %v2507, %v4613
      %v4742 = vsel %vm4486, %v3130, %v4614
      %v4743 = vsel %vm4487, %v3753, %v4615
      %v4744 = vsel %vm4488, %v4376, %v4616
      %v4745 = vsel %vm4489, %v2509, %v4617
      %v4746 = vsel %vm4490, %v3132, %v4618
      %v4747 = vsel %vm4491, %v3755, %v4619
      %v4748 = vsel %vm4492, %v4378, %v4620
      %v4749 = vsel %vm4493, %v2512, %v4621
      %v4750 = vsel %vm4494, %v3135, %v4622
      %v4751 = vsel %vm4495, %v3758, %v4623
      %v4752 = vsel %vm4496, %v4381, %v4624
      %v4753 = vsel %vm4497, %v2514, %v4625
      %v4754 = vsel %vm4498, %v3137, %v4626
      %v4755 = vsel %vm4499, %v3760, %v4627
      %v4756 = vsel %vm4500, %v4383, %v4628
      %v4757 = vsel %vm4501, %v2517, %v4629
      %v4758 = vsel %vm4502, %v3140, %v4630
      %v4759 = vsel %vm4503, %v3763, %v4631
      %v4760 = vsel %vm4504, %v4386, %v4632
      %v4761 = vsel %vm4505, %v2519, %v4633
      %v4762 = vsel %vm4506, %v3142, %v4634
      %v4763 = vsel %vm4507, %v3765, %v4635
      %v4764 = vsel %vm4508, %v4388, %v4636
      %v4765 = vsel %vm4509, %v2522, %v4637
      %v4766 = vsel %vm4510, %v3145, %v4638
      %v4767 = vsel %vm4511, %v3768, %v4639
      %v4768 = vsel %vm4512, %v4391, %v4640
      %v4769 = vsel %vm4513, %v2524, %v4641
      %v4770 = vsel %vm4514, %v3147, %v4642
      %v4771 = vsel %vm4515, %v3770, %v4643
      %v4772 = vsel %vm4516, %v4393, %v4644
      %v4773 = vsel %vm4517, %v2527, %v4645
      %v4774 = vsel %vm4518, %v3150, %v4646
      %v4775 = vsel %vm4519, %v3773, %v4647
      %v4776 = vsel %vm4520, %v4396, %v4648
      %v4777 = vsel %vm4521, %v2529, %v4649
      %v4778 = vsel %vm4522, %v3152, %v4650
      %v4779 = vsel %vm4523, %v3775, %v4651
      %v4780 = vsel %vm4524, %v4398, %v4652
      %v4781 = vsel %vm4525, %v2532, %v4653
      %v4782 = vsel %vm4526, %v3155, %v4654
      %v4783 = vsel %vm4527, %v3778, %v4655
      %v4784 = vsel %vm4528, %v4401, %v4656
      %v4785 = vsel %vm4529, %v2534, %v4657
      %v4786 = vsel %vm4530, %v3157, %v4658
      %v4787 = vsel %vm4531, %v3780, %v4659
      %v4788 = vsel %vm4532, %v4403, %v4660
      %v4789 = vpack.c.bf16 %v4665, %v4661
      %v4790 = vpack.c.bf16 %v4666, %v4662
      %v4791 = vpack.c.bf16 %v4667, %v4663
      %v4792 = vpack.c.bf16 %v4668, %v4664
      %v4793 = vpack.c.bf16 %v4673, %v4669
      %v4794 = vpack.c.bf16 %v4674, %v4670
      %v4795 = vpack.c.bf16 %v4675, %v4671
      %v4796 = vpack.c.bf16 %v4676, %v4672
      %v4797 = vpack.c.bf16 %v4681, %v4677
      %v4798 = vpack.c.bf16 %v4682, %v4678
      %v4799 = vpack.c.bf16 %v4683, %v4679
      %v4800 = vpack.c.bf16 %v4684, %v4680
      %v4801 = vpack.c.bf16 %v4689, %v4685
      %v4802 = vpack.c.bf16 %v4690, %v4686
      %v4803 = vpack.c.bf16 %v4691, %v4687
      %v4804 = vpack.c.bf16 %v4692, %v4688
      %v4805 = vpack.c.bf16 %v4697, %v4693
      %v4806 = vpack.c.bf16 %v4698, %v4694
      %v4807 = vpack.c.bf16 %v4699, %v4695
      %v4808 = vpack.c.bf16 %v4700, %v4696
      %v4809 = vpack.c.bf16 %v4705, %v4701
      %v4810 = vpack.c.bf16 %v4706, %v4702
      %v4811 = vpack.c.bf16 %v4707, %v4703
      %v4812 = vpack.c.bf16 %v4708, %v4704
      %v4813 = vpack.c.bf16 %v4713, %v4709
      %v4814 = vpack.c.bf16 %v4714, %v4710
      %v4815 = vpack.c.bf16 %v4715, %v4711
      %v4816 = vpack.c.bf16 %v4716, %v4712
      %v4817 = vpack.c.bf16 %v4721, %v4717
      %v4818 = vpack.c.bf16 %v4722, %v4718
      %v4819 = vpack.c.bf16 %v4723, %v4719
      %v4820 = vpack.c.bf16 %v4724, %v4720
      %v4821 = vpack.c.bf16 %v4729, %v4725
      %v4822 = vpack.c.bf16 %v4730, %v4726
      %v4823 = vpack.c.bf16 %v4731, %v4727
      %v4824 = vpack.c.bf16 %v4732, %v4728
      %v4825 = vpack.c.bf16 %v4737, %v4733
      %v4826 = vpack.c.bf16 %v4738, %v4734
      %v4827 = vpack.c.bf16 %v4739, %v4735
      %v4828 = vpack.c.bf16 %v4740, %v4736
      %v4829 = vpack.c.bf16 %v4745, %v4741
      %v4830 = vpack.c.bf16 %v4746, %v4742
      %v4831 = vpack.c.bf16 %v4747, %v4743
      %v4832 = vpack.c.bf16 %v4748, %v4744
      %v4833 = vpack.c.bf16 %v4753, %v4749
      %v4834 = vpack.c.bf16 %v4754, %v4750
      %v4835 = vpack.c.bf16 %v4755, %v4751
      %v4836 = vpack.c.bf16 %v4756, %v4752
      %v4837 = vpack.c.bf16 %v4761, %v4757
      %v4838 = vpack.c.bf16 %v4762, %v4758
      %v4839 = vpack.c.bf16 %v4763, %v4759
      %v4840 = vpack.c.bf16 %v4764, %v4760
      %v4841 = vpack.c.bf16 %v4769, %v4765
      %v4842 = vpack.c.bf16 %v4770, %v4766
      %v4843 = vpack.c.bf16 %v4771, %v4767
      %v4844 = vpack.c.bf16 %v4772, %v4768
      %v4845 = vpack.c.bf16 %v4777, %v4773
      %v4846 = vpack.c.bf16 %v4778, %v4774
      %v4847 = vpack.c.bf16 %v4779, %v4775
      %v4848 = vpack.c.bf16 %v4780, %v4776
      %v4849 = vpack.c.bf16 %v4785, %v4781
      %v4850 = vpack.c.bf16 %v4786, %v4782
      %v4851 = vpack.c.bf16 %v4787, %v4783
      %v4852 = vpack.c.bf16 %v4788, %v4784
      %v4853 = vld [vmem:[%s3] sm:$0xff]
      %v4854 = vld [vmem:[%s3 + $0x8] sm:$0xff]
      %v4855 = vld [vmem:[%s3 + $0x10] sm:$0xff]
      %v4856 = vld [vmem:[%s3 + $0x18] sm:$0xff]
      %v4857 = vld [vmem:[%s3 + $0x20] sm:$0xff]
      %v4858 = vld [vmem:[%s3 + $0x28] sm:$0xff]
      %v4859 = vld [vmem:[%s3 + $0x30] sm:$0xff]
      %v4860 = vld [vmem:[%s3 + $0x38] sm:$0xff]
      %v4861 = vld [vmem:[%s3 + $0x40] sm:$0xff]
      %v4862 = vld [vmem:[%s3 + $0x48] sm:$0xff]
      %v4863 = vld [vmem:[%s3 + $0x50] sm:$0xff]
      %v4864 = vld [vmem:[%s3 + $0x58] sm:$0xff]
      %v4865 = vld [vmem:[%s3 + $0x60] sm:$0xff]
      %v4866 = vld [vmem:[%s3 + $0x68] sm:$0xff]
      %v4867 = vld [vmem:[%s3 + $0x70] sm:$0xff]
      %v4868 = vld [vmem:[%s3 + $0x78] sm:$0xff]
      %v4869 = vld [vmem:[%s3 + $0x80] sm:$0xff]
      %v4870 = vld [vmem:[%s3 + $0x88] sm:$0xff]
      %v4871 = vld [vmem:[%s3 + $0x90] sm:$0xff]
      %v4872 = vld [vmem:[%s3 + $0x98] sm:$0xff]
      %v4873 = vld [vmem:[%s3 + $0xa0] sm:$0xff]
      %v4874 = vld [vmem:[%s3 + $0xa8] sm:$0xff]
      %v4875 = vld [vmem:[%s3 + $0xb0] sm:$0xff]
      %v4876 = vld [vmem:[%s3 + $0xb8] sm:$0xff]
      %v4877 = vld [vmem:[%s3 + $0xc0] sm:$0xff]
      %v4878 = vld [vmem:[%s3 + $0xc8] sm:$0xff]
      %v4879 = vld [vmem:[%s3 + $0xd0] sm:$0xff]
      %v4880 = vld [vmem:[%s3 + $0xd8] sm:$0xff]
      %v4881 = vld [vmem:[%s3 + $0xe0] sm:$0xff]
      %v4882 = vld [vmem:[%s3 + $0xe8] sm:$0xff]
      %v4883 = vld [vmem:[%s3 + $0xf0] sm:$0xff]
      %v4884 = vld [vmem:[%s3 + $0xf8] sm:$0xff]
      %v4885 = vld [vmem:[%s3 + $0x100] sm:$0xff]
      %v4886 = vld [vmem:[%s3 + $0x108] sm:$0xff]
      %v4887 = vld [vmem:[%s3 + $0x110] sm:$0xff]
      %v4888 = vld [vmem:[%s3 + $0x118] sm:$0xff]
      %v4889 = vld [vmem:[%s3 + $0x120] sm:$0xff]
      %v4890 = vld [vmem:[%s3 + $0x128] sm:$0xff]
      %v4891 = vld [vmem:[%s3 + $0x130] sm:$0xff]
      %v4892 = vld [vmem:[%s3 + $0x138] sm:$0xff]
      %v4893 = vld [vmem:[%s3 + $0x140] sm:$0xff]
      %v4894 = vld [vmem:[%s3 + $0x148] sm:$0xff]
      %v4895 = vld [vmem:[%s3 + $0x150] sm:$0xff]
      %v4896 = vld [vmem:[%s3 + $0x158] sm:$0xff]
      %v4897 = vld [vmem:[%s3 + $0x160] sm:$0xff]
      %v4898 = vld [vmem:[%s3 + $0x168] sm:$0xff]
      %v4899 = vld [vmem:[%s3 + $0x170] sm:$0xff]
      %v4900 = vld [vmem:[%s3 + $0x178] sm:$0xff]
      %v4901 = vld [vmem:[%s3 + $0x180] sm:$0xff]
      %v4902 = vld [vmem:[%s3 + $0x188] sm:$0xff]
      %v4903 = vld [vmem:[%s3 + $0x190] sm:$0xff]
      %v4904 = vld [vmem:[%s3 + $0x198] sm:$0xff]
      %v4905 = vld [vmem:[%s3 + $0x1a0] sm:$0xff]
      %v4906 = vld [vmem:[%s3 + $0x1a8] sm:$0xff]
      %v4907 = vld [vmem:[%s3 + $0x1b0] sm:$0xff]
      %v4908 = vld [vmem:[%s3 + $0x1b8] sm:$0xff]
      %v4909 = vld [vmem:[%s3 + $0x1c0] sm:$0xff]
      %v4910 = vld [vmem:[%s3 + $0x1c8] sm:$0xff]
      %v4911 = vld [vmem:[%s3 + $0x1d0] sm:$0xff]
      %v4912 = vld [vmem:[%s3 + $0x1d8] sm:$0xff]
      %v4913 = vld [vmem:[%s3 + $0x1e0] sm:$0xff]
      %v4914 = vld [vmem:[%s3 + $0x1e8] sm:$0xff]
      %v4915 = vld [vmem:[%s3 + $0x1f0] sm:$0xff]
      %v4916 = vld [vmem:[%s3 + $0x1f8] sm:$0xff]
      %v4917 = vld [vmem:[%s4] sm:$0x3]
      %v4919 = vperm.slane %v4917, 0
      %v4920 = vperm.slane %v4917, 1
      %v4987 = vunpack.c.l.b16 %v4853
      %v4988 = vunpack.c.h.b16 %v4853
      %v4989 = vunpack.c.l.b16 %v4854
      %v4990 = vunpack.c.h.b16 %v4854
      %v4991 = vunpack.c.l.b16 %v4855
      %v4992 = vunpack.c.h.b16 %v4855
      %v4993 = vunpack.c.l.b16 %v4856
      %v4994 = vunpack.c.h.b16 %v4856
      %v4995 = vunpack.c.l.b16 %v4857
      %v4996 = vunpack.c.h.b16 %v4857
      %v4997 = vunpack.c.l.b16 %v4858
      %v4998 = vunpack.c.h.b16 %v4858
      %v4999 = vunpack.c.l.b16 %v4859
      %v5000 = vunpack.c.h.b16 %v4859
      %v5001 = vunpack.c.l.b16 %v4860
      %v5002 = vunpack.c.h.b16 %v4860
      %v5003 = vunpack.c.l.b16 %v4861
      %v5004 = vunpack.c.h.b16 %v4861
      %v5005 = vunpack.c.l.b16 %v4862
      %v5006 = vunpack.c.h.b16 %v4862
      %v5007 = vunpack.c.l.b16 %v4863
      %v5008 = vunpack.c.h.b16 %v4863
      %v5009 = vunpack.c.l.b16 %v4864
      %v5010 = vunpack.c.h.b16 %v4864
      %v5011 = vunpack.c.l.b16 %v4865
      %v5012 = vunpack.c.h.b16 %v4865
      %v5013 = vunpack.c.l.b16 %v4866
      %v5014 = vunpack.c.h.b16 %v4866
      %v5015 = vunpack.c.l.b16 %v4867
      %v5016 = vunpack.c.h.b16 %v4867
      %v5017 = vunpack.c.l.b16 %v4868
      %v5018 = vunpack.c.h.b16 %v4868
      %v5019 = vunpack.c.l.b16 %v4869
      %v5020 = vunpack.c.h.b16 %v4869
      %v5021 = vunpack.c.l.b16 %v4870
      %v5022 = vunpack.c.h.b16 %v4870
      %v5023 = vunpack.c.l.b16 %v4871
      %v5024 = vunpack.c.h.b16 %v4871
      %v5025 = vunpack.c.l.b16 %v4872
      %v5026 = vunpack.c.h.b16 %v4872
      %v5027 = vunpack.c.l.b16 %v4873
      %v5028 = vunpack.c.h.b16 %v4873
      %v5029 = vunpack.c.l.b16 %v4874
      %v5030 = vunpack.c.h.b16 %v4874
      %v5031 = vunpack.c.l.b16 %v4875
      %v5032 = vunpack.c.h.b16 %v4875
      %v5033 = vunpack.c.l.b16 %v4876
      %v5034 = vunpack.c.h.b16 %v4876
      %v5035 = vunpack.c.l.b16 %v4877
      %v5036 = vunpack.c.h.b16 %v4877
      %v5037 = vunpack.c.l.b16 %v4878
      %v5038 = vunpack.c.h.b16 %v4878
      %v5039 = vunpack.c.l.b16 %v4879
      %v5040 = vunpack.c.h.b16 %v4879
      %v5041 = vunpack.c.l.b16 %v4880
      %v5042 = vunpack.c.h.b16 %v4880
      %v5043 = vunpack.c.l.b16 %v4881
      %v5044 = vunpack.c.h.b16 %v4881
      %v5045 = vunpack.c.l.b16 %v4882
      %v5046 = vunpack.c.h.b16 %v4882
      %v5047 = vunpack.c.l.b16 %v4883
      %v5048 = vunpack.c.h.b16 %v4883
      %v5049 = vunpack.c.l.b16 %v4884
      %v5050 = vunpack.c.h.b16 %v4884
      %v5051 = vunpack.c.l.b16 %v4885
      %v5052 = vunpack.c.h.b16 %v4885
      %v5053 = vunpack.c.l.b16 %v4886
      %v5054 = vunpack.c.h.b16 %v4886
      %v5055 = vunpack.c.l.b16 %v4887
      %v5056 = vunpack.c.h.b16 %v4887
      %v5057 = vunpack.c.l.b16 %v4888
      %v5058 = vunpack.c.h.b16 %v4888
      %v5059 = vunpack.c.l.b16 %v4889
      %v5060 = vunpack.c.h.b16 %v4889
      %v5061 = vunpack.c.l.b16 %v4890
      %v5062 = vunpack.c.h.b16 %v4890
      %v5063 = vunpack.c.l.b16 %v4891
      %v5064 = vunpack.c.h.b16 %v4891
      %v5065 = vunpack.c.l.b16 %v4892
      %v5066 = vunpack.c.h.b16 %v4892
      %v5067 = vunpack.c.l.b16 %v4893
      %v5068 = vunpack.c.h.b16 %v4893
      %v5069 = vunpack.c.l.b16 %v4894
      %v5070 = vunpack.c.h.b16 %v4894
      %v5071 = vunpack.c.l.b16 %v4895
      %v5072 = vunpack.c.h.b16 %v4895
      %v5073 = vunpack.c.l.b16 %v4896
      %v5074 = vunpack.c.h.b16 %v4896
      %v5075 = vunpack.c.l.b16 %v4897
      %v5076 = vunpack.c.h.b16 %v4897
      %v5077 = vunpack.c.l.b16 %v4898
      %v5078 = vunpack.c.h.b16 %v4898
      %v5079 = vunpack.c.l.b16 %v4899
      %v5080 = vunpack.c.h.b16 %v4899
      %v5081 = vunpack.c.l.b16 %v4900
      %v5082 = vunpack.c.h.b16 %v4900
      %v5083 = vunpack.c.l.b16 %v4901
      %v5084 = vunpack.c.h.b16 %v4901
      %v5085 = vunpack.c.l.b16 %v4902
      %v5086 = vunpack.c.h.b16 %v4902
      %v5087 = vunpack.c.l.b16 %v4903
      %v5088 = vunpack.c.h.b16 %v4903
      %v5089 = vunpack.c.l.b16 %v4904
      %v5090 = vunpack.c.h.b16 %v4904
      %v5091 = vunpack.c.l.b16 %v4905
      %v5092 = vunpack.c.h.b16 %v4905
      %v5093 = vunpack.c.l.b16 %v4906
      %v5094 = vunpack.c.h.b16 %v4906
      %v5095 = vunpack.c.l.b16 %v4907
      %v5096 = vunpack.c.h.b16 %v4907
      %v5097 = vunpack.c.l.b16 %v4908
      %v5098 = vunpack.c.h.b16 %v4908
      %v5099 = vunpack.c.l.b16 %v4909
      %v5100 = vunpack.c.h.b16 %v4909
      %v5101 = vunpack.c.l.b16 %v4910
      %v5102 = vunpack.c.h.b16 %v4910
      %v5103 = vunpack.c.l.b16 %v4911
      %v5104 = vunpack.c.h.b16 %v4911
      %v5105 = vunpack.c.l.b16 %v4912
      %v5106 = vunpack.c.h.b16 %v4912
      %v5107 = vunpack.c.l.b16 %v4913
      %v5108 = vunpack.c.h.b16 %v4913
      %v5109 = vunpack.c.l.b16 %v4914
      %v5110 = vunpack.c.h.b16 %v4914
      %v5111 = vunpack.c.l.b16 %v4915
      %v5112 = vunpack.c.h.b16 %v4915
      %v5113 = vunpack.c.l.b16 %v4916
      %v5114 = vunpack.c.h.b16 %v4916
      %v5115 = vpack.c.b16 %v4989, %v4987
      %v5116 = vpack.c.b16 %v4990, %v4988
      %v5117 = vpack.c.b16 %v4993, %v4991
      %v5118 = vpack.c.b16 %v4994, %v4992
      %v5119 = vpack.c.b16 %v4997, %v4995
      %v5120 = vpack.c.b16 %v4998, %v4996
      %v5121 = vpack.c.b16 %v5001, %v4999
      %v5122 = vpack.c.b16 %v5002, %v5000
      %v5123 = vpack.c.b16 %v5005, %v5003
      %v5124 = vpack.c.b16 %v5006, %v5004
      %v5125 = vpack.c.b16 %v5009, %v5007
      %v5126 = vpack.c.b16 %v5010, %v5008
      %v5127 = vpack.c.b16 %v5013, %v5011
      %v5128 = vpack.c.b16 %v5014, %v5012
      %v5129 = vpack.c.b16 %v5017, %v5015
      %v5130 = vpack.c.b16 %v5018, %v5016
      %v5131 = vpack.c.b16 %v5021, %v5019
      %v5132 = vpack.c.b16 %v5022, %v5020
      %v5133 = vpack.c.b16 %v5025, %v5023
      %v5134 = vpack.c.b16 %v5026, %v5024
      %v5135 = vpack.c.b16 %v5029, %v5027
      %v5136 = vpack.c.b16 %v5030, %v5028
      %v5137 = vpack.c.b16 %v5033, %v5031
      %v5138 = vpack.c.b16 %v5034, %v5032
      %v5139 = vpack.c.b16 %v5037, %v5035
      %v5140 = vpack.c.b16 %v5038, %v5036
      %v5141 = vpack.c.b16 %v5041, %v5039
      %v5142 = vpack.c.b16 %v5042, %v5040
      %v5143 = vpack.c.b16 %v5045, %v5043
      %v5144 = vpack.c.b16 %v5046, %v5044
      %v5145 = vpack.c.b16 %v5049, %v5047
      %v5146 = vpack.c.b16 %v5050, %v5048
      %v5147 = vpack.c.b16 %v5053, %v5051
      %v5148 = vpack.c.b16 %v5054, %v5052
      %v5149 = vpack.c.b16 %v5057, %v5055
      %v5150 = vpack.c.b16 %v5058, %v5056
      %v5151 = vpack.c.b16 %v5061, %v5059
      %v5152 = vpack.c.b16 %v5062, %v5060
      %v5153 = vpack.c.b16 %v5065, %v5063
      %v5154 = vpack.c.b16 %v5066, %v5064
      %v5155 = vpack.c.b16 %v5069, %v5067
      %v5156 = vpack.c.b16 %v5070, %v5068
      %v5157 = vpack.c.b16 %v5073, %v5071
      %v5158 = vpack.c.b16 %v5074, %v5072
      %v5159 = vpack.c.b16 %v5077, %v5075
      %v5160 = vpack.c.b16 %v5078, %v5076
      %v5161 = vpack.c.b16 %v5081, %v5079
      %v5162 = vpack.c.b16 %v5082, %v5080
      %v5163 = vpack.c.b16 %v5085, %v5083
      %v5164 = vpack.c.b16 %v5086, %v5084
      %v5165 = vpack.c.b16 %v5089, %v5087
      %v5166 = vpack.c.b16 %v5090, %v5088
      %v5167 = vpack.c.b16 %v5093, %v5091
      %v5168 = vpack.c.b16 %v5094, %v5092
      %v5169 = vpack.c.b16 %v5097, %v5095
      %v5170 = vpack.c.b16 %v5098, %v5096
      %v5171 = vpack.c.b16 %v5101, %v5099
      %v5172 = vpack.c.b16 %v5102, %v5100
      %v5173 = vpack.c.b16 %v5105, %v5103
      %v5174 = vpack.c.b16 %v5106, %v5104
      %v5175 = vpack.c.b16 %v5109, %v5107
      %v5176 = vpack.c.b16 %v5110, %v5108
      %v5177 = vpack.c.b16 %v5113, %v5111
      %v5178 = vpack.c.b16 %v5114, %v5112
      %5243 = vmatpush.bf16.msra.mxu0 %v5129
      %5244 = vmatpush.bf16.msra.mxu0 %v5127
      %5245 = vmatpush.bf16.msra.mxu0 %v5125
      %5246 = vmatpush.bf16.msra.mxu0 %v5123
      %5247 = vmatpush.bf16.msra.mxu0 %v5121
      %5248 = vmatpush.bf16.msra.mxu0 %v5119
      %5249 = vmatpush.bf16.msra.mxu0 %v5117
      %5250 = vmatpush.bf16.msra.mxu0 %v5115
      %5251 = vmatmul.bf16.gmra.mxu0 %v4789
      %v5252 = vpop.f32.mrf.mxu0
      %v5253 = vadd.f32 %v4919, %v5252
      %v5254 = vpop.f32.mrf.mxu0
      %v5255 = vadd.f32 %v4919, %v5254
      %5256 = vmatmul.bf16.gmra.mxu0 %v4793
      %v5257 = vpop.f32.mrf.mxu0
      %v5258 = vadd.f32 %v4919, %v5257
      %v5259 = vpop.f32.mrf.mxu0
      %v5260 = vadd.f32 %v4919, %v5259
      %5261 = vmatmul.bf16.gmra.mxu0 %v4797
      %v5262 = vpop.f32.mrf.mxu0
      %v5263 = vadd.f32 %v4919, %v5262
      %v5264 = vpop.f32.mrf.mxu0
      %v5265 = vadd.f32 %v4919, %v5264
      %5266 = vmatmul.bf16.gmra.mxu0 %v4801
      %v5267 = vpop.f32.mrf.mxu0
      %v5268 = vadd.f32 %v4919, %v5267
      %v5269 = vpop.f32.mrf.mxu0
      %v5270 = vadd.f32 %v4919, %v5269
      %5271 = vmatmul.bf16.gmra.mxu0 %v4805
      %v5272 = vpop.f32.mrf.mxu0
      %v5273 = vadd.f32 %v4919, %v5272
      %v5274 = vpop.f32.mrf.mxu0
      %v5275 = vadd.f32 %v4919, %v5274
      %5276 = vmatmul.bf16.gmra.mxu0 %v4809
      %v5277 = vpop.f32.mrf.mxu0
      %v5278 = vadd.f32 %v4919, %v5277
      %v5279 = vpop.f32.mrf.mxu0
      %v5280 = vadd.f32 %v4919, %v5279
      %5281 = vmatmul.bf16.gmra.mxu0 %v4813
      %v5282 = vpop.f32.mrf.mxu0
      %v5283 = vadd.f32 %v4919, %v5282
      %v5284 = vpop.f32.mrf.mxu0
      %v5285 = vadd.f32 %v4919, %v5284
      %5286 = vmatmul.bf16.gmra.mxu0 %v4817
      %v5287 = vpop.f32.mrf.mxu0
      %v5288 = vadd.f32 %v4919, %v5287
      %v5289 = vpop.f32.mrf.mxu0
      %v5290 = vadd.f32 %v4919, %v5289
      %5291 = vmatmul.bf16.gmra.mxu0 %v4821
      %v5292 = vpop.f32.mrf.mxu0
      %v5293 = vadd.f32 %v4919, %v5292
      %v5294 = vpop.f32.mrf.mxu0
      %v5295 = vadd.f32 %v4919, %v5294
      %5296 = vmatmul.bf16.gmra.mxu0 %v4825
      %v5297 = vpop.f32.mrf.mxu0
      %v5298 = vadd.f32 %v4919, %v5297
      %v5299 = vpop.f32.mrf.mxu0
      %v5300 = vadd.f32 %v4919, %v5299
      %5301 = vmatmul.bf16.gmra.mxu0 %v4829
      %v5302 = vpop.f32.mrf.mxu0
      %v5303 = vadd.f32 %v4919, %v5302
      %v5304 = vpop.f32.mrf.mxu0
      %v5305 = vadd.f32 %v4919, %v5304
      %5306 = vmatmul.bf16.gmra.mxu0 %v4833
      %v5307 = vpop.f32.mrf.mxu0
      %v5308 = vadd.f32 %v4919, %v5307
      %v5309 = vpop.f32.mrf.mxu0
      %v5310 = vadd.f32 %v4919, %v5309
      %5311 = vmatmul.bf16.gmra.mxu0 %v4837
      %v5312 = vpop.f32.mrf.mxu0
      %v5313 = vadd.f32 %v4919, %v5312
      %v5314 = vpop.f32.mrf.mxu0
      %v5315 = vadd.f32 %v4919, %v5314
      %5316 = vmatmul.bf16.gmra.mxu0 %v4841
      %v5317 = vpop.f32.mrf.mxu0
      %v5318 = vadd.f32 %v4919, %v5317
      %v5319 = vpop.f32.mrf.mxu0
      %v5320 = vadd.f32 %v4919, %v5319
      %5321 = vmatmul.bf16.gmra.mxu0 %v4845
      %v5322 = vpop.f32.mrf.mxu0
      %v5323 = vadd.f32 %v4919, %v5322
      %v5324 = vpop.f32.mrf.mxu0
      %v5325 = vadd.f32 %v4919, %v5324
      %5326 = vmatmul.bf16.gmra.mxu0 %v4849
      %v5327 = vpop.f32.mrf.mxu0
      %v5328 = vadd.f32 %v4919, %v5327
      %v5329 = vpop.f32.mrf.mxu0
      %v5330 = vadd.f32 %v4919, %v5329
      %5331 = vdwg.mxu0
      %5332 = vmatpush.bf16.msra.mxu0 %v5145
      %5333 = vmatpush.bf16.msra.mxu0 %v5143
      %5334 = vmatpush.bf16.msra.mxu0 %v5141
      %5335 = vmatpush.bf16.msra.mxu0 %v5139
      %5336 = vmatpush.bf16.msra.mxu0 %v5137
      %5337 = vmatpush.bf16.msra.mxu0 %v5135
      %5338 = vmatpush.bf16.msra.mxu0 %v5133
      %5339 = vmatpush.bf16.msra.mxu0 %v5131
      %5340 = vmatmul.bf16.gmra.mxu0 %v4790
      %v5341 = vpop.f32.mrf.mxu0
      %v5342 = vadd.f32 %v5253, %v5341
      %v5343 = vpop.f32.mrf.mxu0
      %v5344 = vadd.f32 %v5255, %v5343
      %5345 = vmatmul.bf16.gmra.mxu0 %v4794
      %v5346 = vpop.f32.mrf.mxu0
      %v5347 = vadd.f32 %v5258, %v5346
      %v5348 = vpop.f32.mrf.mxu0
      %v5349 = vadd.f32 %v5260, %v5348
      %5350 = vmatmul.bf16.gmra.mxu0 %v4798
      %v5351 = vpop.f32.mrf.mxu0
      %v5352 = vadd.f32 %v5263, %v5351
      %v5353 = vpop.f32.mrf.mxu0
      %v5354 = vadd.f32 %v5265, %v5353
      %5355 = vmatmul.bf16.gmra.mxu0 %v4802
      %v5356 = vpop.f32.mrf.mxu0
      %v5357 = vadd.f32 %v5268, %v5356
      %v5358 = vpop.f32.mrf.mxu0
      %v5359 = vadd.f32 %v5270, %v5358
      %5360 = vmatmul.bf16.gmra.mxu0 %v4806
      %v5361 = vpop.f32.mrf.mxu0
      %v5362 = vadd.f32 %v5273, %v5361
      %v5363 = vpop.f32.mrf.mxu0
      %v5364 = vadd.f32 %v5275, %v5363
      %5365 = vmatmul.bf16.gmra.mxu0 %v4810
      %v5366 = vpop.f32.mrf.mxu0
      %v5367 = vadd.f32 %v5278, %v5366
      %v5368 = vpop.f32.mrf.mxu0
      %v5369 = vadd.f32 %v5280, %v5368
      %5370 = vmatmul.bf16.gmra.mxu0 %v4814
      %v5371 = vpop.f32.mrf.mxu0
      %v5372 = vadd.f32 %v5283, %v5371
      %v5373 = vpop.f32.mrf.mxu0
      %v5374 = vadd.f32 %v5285, %v5373
      %5375 = vmatmul.bf16.gmra.mxu0 %v4818
      %v5376 = vpop.f32.mrf.mxu0
      %v5377 = vadd.f32 %v5288, %v5376
      %v5378 = vpop.f32.mrf.mxu0
      %v5379 = vadd.f32 %v5290, %v5378
      %5380 = vmatmul.bf16.gmra.mxu0 %v4822
      %v5381 = vpop.f32.mrf.mxu0
      %v5382 = vadd.f32 %v5293, %v5381
      %v5383 = vpop.f32.mrf.mxu0
      %v5384 = vadd.f32 %v5295, %v5383
      %5385 = vmatmul.bf16.gmra.mxu0 %v4826
      %v5386 = vpop.f32.mrf.mxu0
      %v5387 = vadd.f32 %v5298, %v5386
      %v5388 = vpop.f32.mrf.mxu0
      %v5389 = vadd.f32 %v5300, %v5388
      %5390 = vmatmul.bf16.gmra.mxu0 %v4830
      %v5391 = vpop.f32.mrf.mxu0
      %v5392 = vadd.f32 %v5303, %v5391
      %v5393 = vpop.f32.mrf.mxu0
      %v5394 = vadd.f32 %v5305, %v5393
      %5395 = vmatmul.bf16.gmra.mxu0 %v4834
      %v5396 = vpop.f32.mrf.mxu0
      %v5397 = vadd.f32 %v5308, %v5396
      %v5398 = vpop.f32.mrf.mxu0
      %v5399 = vadd.f32 %v5310, %v5398
      %5400 = vmatmul.bf16.gmra.mxu0 %v4838
      %v5401 = vpop.f32.mrf.mxu0
      %v5402 = vadd.f32 %v5313, %v5401
      %v5403 = vpop.f32.mrf.mxu0
      %v5404 = vadd.f32 %v5315, %v5403
      %5405 = vmatmul.bf16.gmra.mxu0 %v4842
      %v5406 = vpop.f32.mrf.mxu0
      %v5407 = vadd.f32 %v5318, %v5406
      %v5408 = vpop.f32.mrf.mxu0
      %v5409 = vadd.f32 %v5320, %v5408
      %5410 = vmatmul.bf16.gmra.mxu0 %v4846
      %v5411 = vpop.f32.mrf.mxu0
      %v5412 = vadd.f32 %v5323, %v5411
      %v5413 = vpop.f32.mrf.mxu0
      %v5414 = vadd.f32 %v5325, %v5413
      %5415 = vmatmul.bf16.gmra.mxu0 %v4850
      %v5416 = vpop.f32.mrf.mxu0
      %v5417 = vadd.f32 %v5328, %v5416
      %v5418 = vpop.f32.mrf.mxu0
      %v5419 = vadd.f32 %v5330, %v5418
      %5420 = vdwg.mxu0
      %5421 = vmatpush.bf16.msra.mxu0 %v5161
      %5422 = vmatpush.bf16.msra.mxu0 %v5159
      %5423 = vmatpush.bf16.msra.mxu0 %v5157
      %5424 = vmatpush.bf16.msra.mxu0 %v5155
      %5425 = vmatpush.bf16.msra.mxu0 %v5153
      %5426 = vmatpush.bf16.msra.mxu0 %v5151
      %5427 = vmatpush.bf16.msra.mxu0 %v5149
      %5428 = vmatpush.bf16.msra.mxu0 %v5147
      %5429 = vmatmul.bf16.gmra.mxu0 %v4791
      %v5430 = vpop.f32.mrf.mxu0
      %v5431 = vadd.f32 %v5342, %v5430
      %v5432 = vpop.f32.mrf.mxu0
      %v5433 = vadd.f32 %v5344, %v5432
      %5434 = vmatmul.bf16.gmra.mxu0 %v4795
      %v5435 = vpop.f32.mrf.mxu0
      %v5436 = vadd.f32 %v5347, %v5435
      %v5437 = vpop.f32.mrf.mxu0
      %v5438 = vadd.f32 %v5349, %v5437
      %5439 = vmatmul.bf16.gmra.mxu0 %v4799
      %v5440 = vpop.f32.mrf.mxu0
      %v5441 = vadd.f32 %v5352, %v5440
      %v5442 = vpop.f32.mrf.mxu0
      %v5443 = vadd.f32 %v5354, %v5442
      %5444 = vmatmul.bf16.gmra.mxu0 %v4803
      %v5445 = vpop.f32.mrf.mxu0
      %v5446 = vadd.f32 %v5357, %v5445
      %v5447 = vpop.f32.mrf.mxu0
      %v5448 = vadd.f32 %v5359, %v5447
      %5449 = vmatmul.bf16.gmra.mxu0 %v4807
      %v5450 = vpop.f32.mrf.mxu0
      %v5451 = vadd.f32 %v5362, %v5450
      %v5452 = vpop.f32.mrf.mxu0
      %v5453 = vadd.f32 %v5364, %v5452
      %5454 = vmatmul.bf16.gmra.mxu0 %v4811
      %v5455 = vpop.f32.mrf.mxu0
      %v5456 = vadd.f32 %v5367, %v5455
      %v5457 = vpop.f32.mrf.mxu0
      %v5458 = vadd.f32 %v5369, %v5457
      %5459 = vmatmul.bf16.gmra.mxu0 %v4815
      %v5460 = vpop.f32.mrf.mxu0
      %v5461 = vadd.f32 %v5372, %v5460
      %v5462 = vpop.f32.mrf.mxu0
      %v5463 = vadd.f32 %v5374, %v5462
      %5464 = vmatmul.bf16.gmra.mxu0 %v4819
      %v5465 = vpop.f32.mrf.mxu0
      %v5466 = vadd.f32 %v5377, %v5465
      %v5467 = vpop.f32.mrf.mxu0
      %v5468 = vadd.f32 %v5379, %v5467
      %5469 = vmatmul.bf16.gmra.mxu0 %v4823
      %v5470 = vpop.f32.mrf.mxu0
      %v5471 = vadd.f32 %v5382, %v5470
      %v5472 = vpop.f32.mrf.mxu0
      %v5473 = vadd.f32 %v5384, %v5472
      %5474 = vmatmul.bf16.gmra.mxu0 %v4827
      %v5475 = vpop.f32.mrf.mxu0
      %v5476 = vadd.f32 %v5387, %v5475
      %v5477 = vpop.f32.mrf.mxu0
      %v5478 = vadd.f32 %v5389, %v5477
      %5479 = vmatmul.bf16.gmra.mxu0 %v4831
      %v5480 = vpop.f32.mrf.mxu0
      %v5481 = vadd.f32 %v5392, %v5480
      %v5482 = vpop.f32.mrf.mxu0
      %v5483 = vadd.f32 %v5394, %v5482
      %5484 = vmatmul.bf16.gmra.mxu0 %v4835
      %v5485 = vpop.f32.mrf.mxu0
      %v5486 = vadd.f32 %v5397, %v5485
      %v5487 = vpop.f32.mrf.mxu0
      %v5488 = vadd.f32 %v5399, %v5487
      %5489 = vmatmul.bf16.gmra.mxu0 %v4839
      %v5490 = vpop.f32.mrf.mxu0
      %v5491 = vadd.f32 %v5402, %v5490
      %v5492 = vpop.f32.mrf.mxu0
      %v5493 = vadd.f32 %v5404, %v5492
      %5494 = vmatmul.bf16.gmra.mxu0 %v4843
      %v5495 = vpop.f32.mrf.mxu0
      %v5496 = vadd.f32 %v5407, %v5495
      %v5497 = vpop.f32.mrf.mxu0
      %v5498 = vadd.f32 %v5409, %v5497
      %5499 = vmatmul.bf16.gmra.mxu0 %v4847
      %v5500 = vpop.f32.mrf.mxu0
      %v5501 = vadd.f32 %v5412, %v5500
      %v5502 = vpop.f32.mrf.mxu0
      %v5503 = vadd.f32 %v5414, %v5502
      %5504 = vmatmul.bf16.gmra.mxu0 %v4851
      %v5505 = vpop.f32.mrf.mxu0
      %v5506 = vadd.f32 %v5417, %v5505
      %v5507 = vpop.f32.mrf.mxu0
      %v5508 = vadd.f32 %v5419, %v5507
      %5509 = vdwg.mxu0
      %5510 = vmatpush.bf16.msra.mxu0 %v5177
      %5511 = vmatpush.bf16.msra.mxu0 %v5175
      %5512 = vmatpush.bf16.msra.mxu0 %v5173
      %5513 = vmatpush.bf16.msra.mxu0 %v5171
      %5514 = vmatpush.bf16.msra.mxu0 %v5169
      %5515 = vmatpush.bf16.msra.mxu0 %v5167
      %5516 = vmatpush.bf16.msra.mxu0 %v5165
      %5517 = vmatpush.bf16.msra.mxu0 %v5163
      %5518 = vmatmul.bf16.gmra.mxu0 %v4792
      %v5519 = vpop.f32.mrf.mxu0
      %v5520 = vadd.f32 %v5431, %v5519
      %v5521 = vpop.f32.mrf.mxu0
      %v5522 = vadd.f32 %v5433, %v5521
      %5523 = vmatmul.bf16.gmra.mxu0 %v4796
      %v5524 = vpop.f32.mrf.mxu0
      %v5525 = vadd.f32 %v5436, %v5524
      %v5526 = vpop.f32.mrf.mxu0
      %v5527 = vadd.f32 %v5438, %v5526
      %5528 = vmatmul.bf16.gmra.mxu0 %v4800
      %v5529 = vpop.f32.mrf.mxu0
      %v5530 = vadd.f32 %v5441, %v5529
      %v5531 = vpop.f32.mrf.mxu0
      %v5532 = vadd.f32 %v5443, %v5531
      %5533 = vmatmul.bf16.gmra.mxu0 %v4804
      %v5534 = vpop.f32.mrf.mxu0
      %v5535 = vadd.f32 %v5446, %v5534
      %v5536 = vpop.f32.mrf.mxu0
      %v5537 = vadd.f32 %v5448, %v5536
      %5538 = vmatmul.bf16.gmra.mxu0 %v4808
      %v5539 = vpop.f32.mrf.mxu0
      %v5540 = vadd.f32 %v5451, %v5539
      %v5541 = vpop.f32.mrf.mxu0
      %v5542 = vadd.f32 %v5453, %v5541
      %5543 = vmatmul.bf16.gmra.mxu0 %v4812
      %v5544 = vpop.f32.mrf.mxu0
      %v5545 = vadd.f32 %v5456, %v5544
      %v5546 = vpop.f32.mrf.mxu0
      %v5547 = vadd.f32 %v5458, %v5546
      %5548 = vmatmul.bf16.gmra.mxu0 %v4816
      %v5549 = vpop.f32.mrf.mxu0
      %v5550 = vadd.f32 %v5461, %v5549
      %v5551 = vpop.f32.mrf.mxu0
      %v5552 = vadd.f32 %v5463, %v5551
      %5553 = vmatmul.bf16.gmra.mxu0 %v4820
      %v5554 = vpop.f32.mrf.mxu0
      %v5555 = vadd.f32 %v5466, %v5554
      %v5556 = vpop.f32.mrf.mxu0
      %v5557 = vadd.f32 %v5468, %v5556
      %5558 = vmatmul.bf16.gmra.mxu0 %v4824
      %v5559 = vpop.f32.mrf.mxu0
      %v5560 = vadd.f32 %v5471, %v5559
      %v5561 = vpop.f32.mrf.mxu0
      %v5562 = vadd.f32 %v5473, %v5561
      %5563 = vmatmul.bf16.gmra.mxu0 %v4828
      %v5564 = vpop.f32.mrf.mxu0
      %v5565 = vadd.f32 %v5476, %v5564
      %v5566 = vpop.f32.mrf.mxu0
      %v5567 = vadd.f32 %v5478, %v5566
      %5568 = vmatmul.bf16.gmra.mxu0 %v4832
      %v5569 = vpop.f32.mrf.mxu0
      %v5570 = vadd.f32 %v5481, %v5569
      %v5571 = vpop.f32.mrf.mxu0
      %v5572 = vadd.f32 %v5483, %v5571
      %5573 = vmatmul.bf16.gmra.mxu0 %v4836
      %v5574 = vpop.f32.mrf.mxu0
      %v5575 = vadd.f32 %v5486, %v5574
      %v5576 = vpop.f32.mrf.mxu0
      %v5577 = vadd.f32 %v5488, %v5576
      %5578 = vmatmul.bf16.gmra.mxu0 %v4840
      %v5579 = vpop.f32.mrf.mxu0
      %v5580 = vadd.f32 %v5491, %v5579
      %v5581 = vpop.f32.mrf.mxu0
      %v5582 = vadd.f32 %v5493, %v5581
      %5583 = vmatmul.bf16.gmra.mxu0 %v4844
      %v5584 = vpop.f32.mrf.mxu0
      %v5585 = vadd.f32 %v5496, %v5584
      %v5586 = vpop.f32.mrf.mxu0
      %v5587 = vadd.f32 %v5498, %v5586
      %5588 = vmatmul.bf16.gmra.mxu0 %v4848
      %v5589 = vpop.f32.mrf.mxu0
      %v5590 = vadd.f32 %v5501, %v5589
      %v5591 = vpop.f32.mrf.mxu0
      %v5592 = vadd.f32 %v5503, %v5591
      %5593 = vmatmul.bf16.gmra.mxu0 %v4852
      %v5594 = vpop.f32.mrf.mxu0
      %v5595 = vadd.f32 %v5506, %v5594
      %v5596 = vpop.f32.mrf.mxu0
      %v5597 = vadd.f32 %v5508, %v5596
      %5598 = vdwg.mxu0
      %5599 = vmatpush.bf16.msra.mxu0 %v5130
      %5600 = vmatpush.bf16.msra.mxu0 %v5128
      %5601 = vmatpush.bf16.msra.mxu0 %v5126
      %5602 = vmatpush.bf16.msra.mxu0 %v5124
      %5603 = vmatpush.bf16.msra.mxu0 %v5122
      %5604 = vmatpush.bf16.msra.mxu0 %v5120
      %5605 = vmatpush.bf16.msra.mxu0 %v5118
      %5606 = vmatpush.bf16.msra.mxu0 %v5116
      %5607 = vmatmul.bf16.gmra.mxu0 %v4789
      %v5608 = vpop.f32.mrf.mxu0
      %v5609 = vadd.f32 %v4920, %v5608
      %v5610 = vpop.f32.mrf.mxu0
      %v5611 = vadd.f32 %v4920, %v5610
      %5612 = vmatmul.bf16.gmra.mxu0 %v4793
      %v5613 = vpop.f32.mrf.mxu0
      %v5614 = vadd.f32 %v4920, %v5613
      %v5615 = vpop.f32.mrf.mxu0
      %v5616 = vadd.f32 %v4920, %v5615
      %5617 = vmatmul.bf16.gmra.mxu0 %v4797
      %v5618 = vpop.f32.mrf.mxu0
      %v5619 = vadd.f32 %v4920, %v5618
      %v5620 = vpop.f32.mrf.mxu0
      %v5621 = vadd.f32 %v4920, %v5620
      %5622 = vmatmul.bf16.gmra.mxu0 %v4801
      %v5623 = vpop.f32.mrf.mxu0
      %v5624 = vadd.f32 %v4920, %v5623
      %v5625 = vpop.f32.mrf.mxu0
      %v5626 = vadd.f32 %v4920, %v5625
      %5627 = vmatmul.bf16.gmra.mxu0 %v4805
      %v5628 = vpop.f32.mrf.mxu0
      %v5629 = vadd.f32 %v4920, %v5628
      %v5630 = vpop.f32.mrf.mxu0
      %v5631 = vadd.f32 %v4920, %v5630
      %5632 = vmatmul.bf16.gmra.mxu0 %v4809
      %v5633 = vpop.f32.mrf.mxu0
      %v5634 = vadd.f32 %v4920, %v5633
      %v5635 = vpop.f32.mrf.mxu0
      %v5636 = vadd.f32 %v4920, %v5635
      %5637 = vmatmul.bf16.gmra.mxu0 %v4813
      %v5638 = vpop.f32.mrf.mxu0
      %v5639 = vadd.f32 %v4920, %v5638
      %v5640 = vpop.f32.mrf.mxu0
      %v5641 = vadd.f32 %v4920, %v5640
      %5642 = vmatmul.bf16.gmra.mxu0 %v4817
      %v5643 = vpop.f32.mrf.mxu0
      %v5644 = vadd.f32 %v4920, %v5643
      %v5645 = vpop.f32.mrf.mxu0
      %v5646 = vadd.f32 %v4920, %v5645
      %5647 = vmatmul.bf16.gmra.mxu0 %v4821
      %v5648 = vpop.f32.mrf.mxu0
      %v5649 = vadd.f32 %v4920, %v5648
      %v5650 = vpop.f32.mrf.mxu0
      %v5651 = vadd.f32 %v4920, %v5650
      %5652 = vmatmul.bf16.gmra.mxu0 %v4825
      %v5653 = vpop.f32.mrf.mxu0
      %v5654 = vadd.f32 %v4920, %v5653
      %v5655 = vpop.f32.mrf.mxu0
      %v5656 = vadd.f32 %v4920, %v5655
      %5657 = vmatmul.bf16.gmra.mxu0 %v4829
      %v5658 = vpop.f32.mrf.mxu0
      %v5659 = vadd.f32 %v4920, %v5658
      %v5660 = vpop.f32.mrf.mxu0
      %v5661 = vadd.f32 %v4920, %v5660
      %5662 = vmatmul.bf16.gmra.mxu0 %v4833
      %v5663 = vpop.f32.mrf.mxu0
      %v5664 = vadd.f32 %v4920, %v5663
      %v5665 = vpop.f32.mrf.mxu0
      %v5666 = vadd.f32 %v4920, %v5665
      %5667 = vmatmul.bf16.gmra.mxu0 %v4837
      %v5668 = vpop.f32.mrf.mxu0
      %v5669 = vadd.f32 %v4920, %v5668
      %v5670 = vpop.f32.mrf.mxu0
      %v5671 = vadd.f32 %v4920, %v5670
      %5672 = vmatmul.bf16.gmra.mxu0 %v4841
      %v5673 = vpop.f32.mrf.mxu0
      %v5674 = vadd.f32 %v4920, %v5673
      %v5675 = vpop.f32.mrf.mxu0
      %v5676 = vadd.f32 %v4920, %v5675
      %5677 = vmatmul.bf16.gmra.mxu0 %v4845
      %v5678 = vpop.f32.mrf.mxu0
      %v5679 = vadd.f32 %v4920, %v5678
      %v5680 = vpop.f32.mrf.mxu0
      %v5681 = vadd.f32 %v4920, %v5680
      %5682 = vmatmul.bf16.gmra.mxu0 %v4849
      %v5683 = vpop.f32.mrf.mxu0
      %v5684 = vadd.f32 %v4920, %v5683
      %v5685 = vpop.f32.mrf.mxu0
      %v5686 = vadd.f32 %v4920, %v5685
      %5687 = vdwg.mxu0
      %5688 = vmatpush.bf16.msra.mxu0 %v5146
      %5689 = vmatpush.bf16.msra.mxu0 %v5144
      %5690 = vmatpush.bf16.msra.mxu0 %v5142
      %5691 = vmatpush.bf16.msra.mxu0 %v5140
      %5692 = vmatpush.bf16.msra.mxu0 %v5138
      %5693 = vmatpush.bf16.msra.mxu0 %v5136
      %5694 = vmatpush.bf16.msra.mxu0 %v5134
      %5695 = vmatpush.bf16.msra.mxu0 %v5132
      %5696 = vmatmul.bf16.gmra.mxu0 %v4790
      %v5697 = vpop.f32.mrf.mxu0
      %v5698 = vadd.f32 %v5609, %v5697
      %v5699 = vpop.f32.mrf.mxu0
      %v5700 = vadd.f32 %v5611, %v5699
      %5701 = vmatmul.bf16.gmra.mxu0 %v4794
      %v5702 = vpop.f32.mrf.mxu0
      %v5703 = vadd.f32 %v5614, %v5702
      %v5704 = vpop.f32.mrf.mxu0
      %v5705 = vadd.f32 %v5616, %v5704
      %5706 = vmatmul.bf16.gmra.mxu0 %v4798
      %v5707 = vpop.f32.mrf.mxu0
      %v5708 = vadd.f32 %v5619, %v5707
      %v5709 = vpop.f32.mrf.mxu0
      %v5710 = vadd.f32 %v5621, %v5709
      %5711 = vmatmul.bf16.gmra.mxu0 %v4802
      %v5712 = vpop.f32.mrf.mxu0
      %v5713 = vadd.f32 %v5624, %v5712
      %v5714 = vpop.f32.mrf.mxu0
      %v5715 = vadd.f32 %v5626, %v5714
      %5716 = vmatmul.bf16.gmra.mxu0 %v4806
      %v5717 = vpop.f32.mrf.mxu0
      %v5718 = vadd.f32 %v5629, %v5717
      %v5719 = vpop.f32.mrf.mxu0
      %v5720 = vadd.f32 %v5631, %v5719
      %5721 = vmatmul.bf16.gmra.mxu0 %v4810
      %v5722 = vpop.f32.mrf.mxu0
      %v5723 = vadd.f32 %v5634, %v5722
      %v5724 = vpop.f32.mrf.mxu0
      %v5725 = vadd.f32 %v5636, %v5724
      %5726 = vmatmul.bf16.gmra.mxu0 %v4814
      %v5727 = vpop.f32.mrf.mxu0
      %v5728 = vadd.f32 %v5639, %v5727
      %v5729 = vpop.f32.mrf.mxu0
      %v5730 = vadd.f32 %v5641, %v5729
      %5731 = vmatmul.bf16.gmra.mxu0 %v4818
      %v5732 = vpop.f32.mrf.mxu0
      %v5733 = vadd.f32 %v5644, %v5732
      %v5734 = vpop.f32.mrf.mxu0
      %v5735 = vadd.f32 %v5646, %v5734
      %5736 = vmatmul.bf16.gmra.mxu0 %v4822
      %v5737 = vpop.f32.mrf.mxu0
      %v5738 = vadd.f32 %v5649, %v5737
      %v5739 = vpop.f32.mrf.mxu0
      %v5740 = vadd.f32 %v5651, %v5739
      %5741 = vmatmul.bf16.gmra.mxu0 %v4826
      %v5742 = vpop.f32.mrf.mxu0
      %v5743 = vadd.f32 %v5654, %v5742
      %v5744 = vpop.f32.mrf.mxu0
      %v5745 = vadd.f32 %v5656, %v5744
      %5746 = vmatmul.bf16.gmra.mxu0 %v4830
      %v5747 = vpop.f32.mrf.mxu0
      %v5748 = vadd.f32 %v5659, %v5747
      %v5749 = vpop.f32.mrf.mxu0
      %v5750 = vadd.f32 %v5661, %v5749
      %5751 = vmatmul.bf16.gmra.mxu0 %v4834
      %v5752 = vpop.f32.mrf.mxu0
      %v5753 = vadd.f32 %v5664, %v5752
      %v5754 = vpop.f32.mrf.mxu0
      %v5755 = vadd.f32 %v5666, %v5754
      %5756 = vmatmul.bf16.gmra.mxu0 %v4838
      %v5757 = vpop.f32.mrf.mxu0
      %v5758 = vadd.f32 %v5669, %v5757
      %v5759 = vpop.f32.mrf.mxu0
      %v5760 = vadd.f32 %v5671, %v5759
      %5761 = vmatmul.bf16.gmra.mxu0 %v4842
      %v5762 = vpop.f32.mrf.mxu0
      %v5763 = vadd.f32 %v5674, %v5762
      %v5764 = vpop.f32.mrf.mxu0
      %v5765 = vadd.f32 %v5676, %v5764
      %5766 = vmatmul.bf16.gmra.mxu0 %v4846
      %v5767 = vpop.f32.mrf.mxu0
      %v5768 = vadd.f32 %v5679, %v5767
      %v5769 = vpop.f32.mrf.mxu0
      %v5770 = vadd.f32 %v5681, %v5769
      %5771 = vmatmul.bf16.gmra.mxu0 %v4850
      %v5772 = vpop.f32.mrf.mxu0
      %v5773 = vadd.f32 %v5684, %v5772
      %v5774 = vpop.f32.mrf.mxu0
      %v5775 = vadd.f32 %v5686, %v5774
      %5776 = vdwg.mxu0
      %5777 = vmatpush.bf16.msra.mxu0 %v5162
      %5778 = vmatpush.bf16.msra.mxu0 %v5160
      %5779 = vmatpush.bf16.msra.mxu0 %v5158
      %5780 = vmatpush.bf16.msra.mxu0 %v5156
      %5781 = vmatpush.bf16.msra.mxu0 %v5154
      %5782 = vmatpush.bf16.msra.mxu0 %v5152
      %5783 = vmatpush.bf16.msra.mxu0 %v5150
      %5784 = vmatpush.bf16.msra.mxu0 %v5148
      %5785 = vmatmul.bf16.gmra.mxu0 %v4791
      %v5786 = vpop.f32.mrf.mxu0
      %v5787 = vadd.f32 %v5698, %v5786
      %v5788 = vpop.f32.mrf.mxu0
      %v5789 = vadd.f32 %v5700, %v5788
      %5790 = vmatmul.bf16.gmra.mxu0 %v4795
      %v5791 = vpop.f32.mrf.mxu0
      %v5792 = vadd.f32 %v5703, %v5791
      %v5793 = vpop.f32.mrf.mxu0
      %v5794 = vadd.f32 %v5705, %v5793
      %5795 = vmatmul.bf16.gmra.mxu0 %v4799
      %v5796 = vpop.f32.mrf.mxu0
      %v5797 = vadd.f32 %v5708, %v5796
      %v5798 = vpop.f32.mrf.mxu0
      %v5799 = vadd.f32 %v5710, %v5798
      %5800 = vmatmul.bf16.gmra.mxu0 %v4803
      %v5801 = vpop.f32.mrf.mxu0
      %v5802 = vadd.f32 %v5713, %v5801
      %v5803 = vpop.f32.mrf.mxu0
      %v5804 = vadd.f32 %v5715, %v5803
      %5805 = vmatmul.bf16.gmra.mxu0 %v4807
      %v5806 = vpop.f32.mrf.mxu0
      %v5807 = vadd.f32 %v5718, %v5806
      %v5808 = vpop.f32.mrf.mxu0
      %v5809 = vadd.f32 %v5720, %v5808
      %5810 = vmatmul.bf16.gmra.mxu0 %v4811
      %v5811 = vpop.f32.mrf.mxu0
      %v5812 = vadd.f32 %v5723, %v5811
      %v5813 = vpop.f32.mrf.mxu0
      %v5814 = vadd.f32 %v5725, %v5813
      %5815 = vmatmul.bf16.gmra.mxu0 %v4815
      %v5816 = vpop.f32.mrf.mxu0
      %v5817 = vadd.f32 %v5728, %v5816
      %v5818 = vpop.f32.mrf.mxu0
      %v5819 = vadd.f32 %v5730, %v5818
      %5820 = vmatmul.bf16.gmra.mxu0 %v4819
      %v5821 = vpop.f32.mrf.mxu0
      %v5822 = vadd.f32 %v5733, %v5821
      %v5823 = vpop.f32.mrf.mxu0
      %v5824 = vadd.f32 %v5735, %v5823
      %5825 = vmatmul.bf16.gmra.mxu0 %v4823
      %v5826 = vpop.f32.mrf.mxu0
      %v5827 = vadd.f32 %v5738, %v5826
      %v5828 = vpop.f32.mrf.mxu0
      %v5829 = vadd.f32 %v5740, %v5828
      %5830 = vmatmul.bf16.gmra.mxu0 %v4827
      %v5831 = vpop.f32.mrf.mxu0
      %v5832 = vadd.f32 %v5743, %v5831
      %v5833 = vpop.f32.mrf.mxu0
      %v5834 = vadd.f32 %v5745, %v5833
      %5835 = vmatmul.bf16.gmra.mxu0 %v4831
      %v5836 = vpop.f32.mrf.mxu0
      %v5837 = vadd.f32 %v5748, %v5836
      %v5838 = vpop.f32.mrf.mxu0
      %v5839 = vadd.f32 %v5750, %v5838
      %5840 = vmatmul.bf16.gmra.mxu0 %v4835
      %v5841 = vpop.f32.mrf.mxu0
      %v5842 = vadd.f32 %v5753, %v5841
      %v5843 = vpop.f32.mrf.mxu0
      %v5844 = vadd.f32 %v5755, %v5843
      %5845 = vmatmul.bf16.gmra.mxu0 %v4839
      %v5846 = vpop.f32.mrf.mxu0
      %v5847 = vadd.f32 %v5758, %v5846
      %v5848 = vpop.f32.mrf.mxu0
      %v5849 = vadd.f32 %v5760, %v5848
      %5850 = vmatmul.bf16.gmra.mxu0 %v4843
      %v5851 = vpop.f32.mrf.mxu0
      %v5852 = vadd.f32 %v5763, %v5851
      %v5853 = vpop.f32.mrf.mxu0
      %v5854 = vadd.f32 %v5765, %v5853
      %5855 = vmatmul.bf16.gmra.mxu0 %v4847
      %v5856 = vpop.f32.mrf.mxu0
      %v5857 = vadd.f32 %v5768, %v5856
      %v5858 = vpop.f32.mrf.mxu0
      %v5859 = vadd.f32 %v5770, %v5858
      %5860 = vmatmul.bf16.gmra.mxu0 %v4851
      %v5861 = vpop.f32.mrf.mxu0
      %v5862 = vadd.f32 %v5773, %v5861
      %v5863 = vpop.f32.mrf.mxu0
      %v5864 = vadd.f32 %v5775, %v5863
      %5865 = vdwg.mxu0
      %5866 = vmatpush.bf16.msra.mxu0 %v5178
      %5867 = vmatpush.bf16.msra.mxu0 %v5176
      %5868 = vmatpush.bf16.msra.mxu0 %v5174
      %5869 = vmatpush.bf16.msra.mxu0 %v5172
      %5870 = vmatpush.bf16.msra.mxu0 %v5170
      %5871 = vmatpush.bf16.msra.mxu0 %v5168
      %5872 = vmatpush.bf16.msra.mxu0 %v5166
      %5873 = vmatpush.bf16.msra.mxu0 %v5164
      %5874 = vmatmul.bf16.gmra.mxu0 %v4792
      %v5875 = vpop.f32.mrf.mxu0
      %v5876 = vadd.f32 %v5787, %v5875
      %v5877 = vpop.f32.mrf.mxu0
      %v5878 = vadd.f32 %v5789, %v5877
      %5879 = vmatmul.bf16.gmra.mxu0 %v4796
      %v5880 = vpop.f32.mrf.mxu0
      %v5881 = vadd.f32 %v5792, %v5880
      %v5882 = vpop.f32.mrf.mxu0
      %v5883 = vadd.f32 %v5794, %v5882
      %5884 = vmatmul.bf16.gmra.mxu0 %v4800
      %v5885 = vpop.f32.mrf.mxu0
      %v5886 = vadd.f32 %v5797, %v5885
      %v5887 = vpop.f32.mrf.mxu0
      %v5888 = vadd.f32 %v5799, %v5887
      %5889 = vmatmul.bf16.gmra.mxu0 %v4804
      %v5890 = vpop.f32.mrf.mxu0
      %v5891 = vadd.f32 %v5802, %v5890
      %v5892 = vpop.f32.mrf.mxu0
      %v5893 = vadd.f32 %v5804, %v5892
      %5894 = vmatmul.bf16.gmra.mxu0 %v4808
      %v5895 = vpop.f32.mrf.mxu0
      %v5896 = vadd.f32 %v5807, %v5895
      %v5897 = vpop.f32.mrf.mxu0
      %v5898 = vadd.f32 %v5809, %v5897
      %5899 = vmatmul.bf16.gmra.mxu0 %v4812
      %v5900 = vpop.f32.mrf.mxu0
      %v5901 = vadd.f32 %v5812, %v5900
      %v5902 = vpop.f32.mrf.mxu0
      %v5903 = vadd.f32 %v5814, %v5902
      %5904 = vmatmul.bf16.gmra.mxu0 %v4816
      %v5905 = vpop.f32.mrf.mxu0
      %v5906 = vadd.f32 %v5817, %v5905
      %v5907 = vpop.f32.mrf.mxu0
      %v5908 = vadd.f32 %v5819, %v5907
      %5909 = vmatmul.bf16.gmra.mxu0 %v4820
      %v5910 = vpop.f32.mrf.mxu0
      %v5911 = vadd.f32 %v5822, %v5910
      %v5912 = vpop.f32.mrf.mxu0
      %v5913 = vadd.f32 %v5824, %v5912
      %5914 = vmatmul.bf16.gmra.mxu0 %v4824
      %v5915 = vpop.f32.mrf.mxu0
      %v5916 = vadd.f32 %v5827, %v5915
      %v5917 = vpop.f32.mrf.mxu0
      %v5918 = vadd.f32 %v5829, %v5917
      %5919 = vmatmul.bf16.gmra.mxu0 %v4828
      %v5920 = vpop.f32.mrf.mxu0
      %v5921 = vadd.f32 %v5832, %v5920
      %v5922 = vpop.f32.mrf.mxu0
      %v5923 = vadd.f32 %v5834, %v5922
      %5924 = vmatmul.bf16.gmra.mxu0 %v4832
      %v5925 = vpop.f32.mrf.mxu0
      %v5926 = vadd.f32 %v5837, %v5925
      %v5927 = vpop.f32.mrf.mxu0
      %v5928 = vadd.f32 %v5839, %v5927
      %5929 = vmatmul.bf16.gmra.mxu0 %v4836
      %v5930 = vpop.f32.mrf.mxu0
      %v5931 = vadd.f32 %v5842, %v5930
      %v5932 = vpop.f32.mrf.mxu0
      %v5933 = vadd.f32 %v5844, %v5932
      %5934 = vmatmul.bf16.gmra.mxu0 %v4840
      %v5935 = vpop.f32.mrf.mxu0
      %v5936 = vadd.f32 %v5847, %v5935
      %v5937 = vpop.f32.mrf.mxu0
      %v5938 = vadd.f32 %v5849, %v5937
      %5939 = vmatmul.bf16.gmra.mxu0 %v4844
      %v5940 = vpop.f32.mrf.mxu0
      %v5941 = vadd.f32 %v5852, %v5940
      %v5942 = vpop.f32.mrf.mxu0
      %v5943 = vadd.f32 %v5854, %v5942
      %5944 = vmatmul.bf16.gmra.mxu0 %v4848
      %v5945 = vpop.f32.mrf.mxu0
      %v5946 = vadd.f32 %v5857, %v5945
      %v5947 = vpop.f32.mrf.mxu0
      %v5948 = vadd.f32 %v5859, %v5947
      %5949 = vmatmul.bf16.gmra.mxu0 %v4852
      %v5950 = vpop.f32.mrf.mxu0
      %v5951 = vadd.f32 %v5862, %v5950
      %v5952 = vpop.f32.mrf.mxu0
      %v5953 = vadd.f32 %v5864, %v5952
      %5954 = vdwg.mxu0
      %vm5955 = vcmp.gt.f32.partialorder %v5520, 0.0
      %vm5956 = vcmp.gt.f32.partialorder %v5876, 0.0
      %vm5957 = vcmp.gt.f32.partialorder %v5522, 0.0
      %vm5958 = vcmp.gt.f32.partialorder %v5878, 0.0
      %vm5959 = vcmp.gt.f32.partialorder %v5525, 0.0
      %vm5960 = vcmp.gt.f32.partialorder %v5881, 0.0
      %vm5961 = vcmp.gt.f32.partialorder %v5527, 0.0
      %vm5962 = vcmp.gt.f32.partialorder %v5883, 0.0
      %vm5963 = vcmp.gt.f32.partialorder %v5530, 0.0
      %vm5964 = vcmp.gt.f32.partialorder %v5886, 0.0
      %vm5965 = vcmp.gt.f32.partialorder %v5532, 0.0
      %vm5966 = vcmp.gt.f32.partialorder %v5888, 0.0
      %vm5967 = vcmp.gt.f32.partialorder %v5535, 0.0
      %vm5968 = vcmp.gt.f32.partialorder %v5891, 0.0
      %vm5969 = vcmp.gt.f32.partialorder %v5537, 0.0
      %vm5970 = vcmp.gt.f32.partialorder %v5893, 0.0
      %vm5971 = vcmp.gt.f32.partialorder %v5540, 0.0
      %vm5972 = vcmp.gt.f32.partialorder %v5896, 0.0
      %vm5973 = vcmp.gt.f32.partialorder %v5542, 0.0
      %vm5974 = vcmp.gt.f32.partialorder %v5898, 0.0
      %vm5975 = vcmp.gt.f32.partialorder %v5545, 0.0
      %vm5976 = vcmp.gt.f32.partialorder %v5901, 0.0
      %vm5977 = vcmp.gt.f32.partialorder %v5547, 0.0
      %vm5978 = vcmp.gt.f32.partialorder %v5903, 0.0
      %vm5979 = vcmp.gt.f32.partialorder %v5550, 0.0
      %vm5980 = vcmp.gt.f32.partialorder %v5906, 0.0
      %vm5981 = vcmp.gt.f32.partialorder %v5552, 0.0
      %vm5982 = vcmp.gt.f32.partialorder %v5908, 0.0
      %vm5983 = vcmp.gt.f32.partialorder %v5555, 0.0
      %vm5984 = vcmp.gt.f32.partialorder %v5911, 0.0
      %vm5985 = vcmp.gt.f32.partialorder %v5557, 0.0
      %vm5986 = vcmp.gt.f32.partialorder %v5913, 0.0
      %vm5987 = vcmp.gt.f32.partialorder %v5560, 0.0
      %vm5988 = vcmp.gt.f32.partialorder %v5916, 0.0
      %vm5989 = vcmp.gt.f32.partialorder %v5562, 0.0
      %vm5990 = vcmp.gt.f32.partialorder %v5918, 0.0
      %vm5991 = vcmp.gt.f32.partialorder %v5565, 0.0
      %vm5992 = vcmp.gt.f32.partialorder %v5921, 0.0
      %vm5993 = vcmp.gt.f32.partialorder %v5567, 0.0
      %vm5994 = vcmp.gt.f32.partialorder %v5923, 0.0
      %vm5995 = vcmp.gt.f32.partialorder %v5570, 0.0
      %vm5996 = vcmp.gt.f32.partialorder %v5926, 0.0
      %vm5997 = vcmp.gt.f32.partialorder %v5572, 0.0
      %vm5998 = vcmp.gt.f32.partialorder %v5928, 0.0
      %vm5999 = vcmp.gt.f32.partialorder %v5575, 0.0
      %vm6000 = vcmp.gt.f32.partialorder %v5931, 0.0
      %vm6001 = vcmp.gt.f32.partialorder %v5577, 0.0
      %vm6002 = vcmp.gt.f32.partialorder %v5933, 0.0
      %vm6003 = vcmp.gt.f32.partialorder %v5580, 0.0
      %vm6004 = vcmp.gt.f32.partialorder %v5936, 0.0
      %vm6005 = vcmp.gt.f32.partialorder %v5582, 0.0
      %vm6006 = vcmp.gt.f32.partialorder %v5938, 0.0
      %vm6007 = vcmp.gt.f32.partialorder %v5585, 0.0
      %vm6008 = vcmp.gt.f32.partialorder %v5941, 0.0
      %vm6009 = vcmp.gt.f32.partialorder %v5587, 0.0
      %vm6010 = vcmp.gt.f32.partialorder %v5943, 0.0
      %vm6011 = vcmp.gt.f32.partialorder %v5590, 0.0
      %vm6012 = vcmp.gt.f32.partialorder %v5946, 0.0
      %vm6013 = vcmp.gt.f32.partialorder %v5592, 0.0
      %vm6014 = vcmp.gt.f32.partialorder %v5948, 0.0
      %vm6015 = vcmp.gt.f32.partialorder %v5595, 0.0
      %vm6016 = vcmp.gt.f32.partialorder %v5951, 0.0
      %vm6017 = vcmp.gt.f32.partialorder %v5597, 0.0
      %vm6018 = vcmp.gt.f32.partialorder %v5953, 0.0
      %v6019 = vmul.f32 %v5520, 0.2
      %v6020 = vmul.f32 %v5876, 0.2
      %v6021 = vmul.f32 %v5522, 0.2
      %v6022 = vmul.f32 %v5878, 0.2
      %v6023 = vmul.f32 %v5525, 0.2
      %v6024 = vmul.f32 %v5881, 0.2
      %v6025 = vmul.f32 %v5527, 0.2
      %v6026 = vmul.f32 %v5883, 0.2
      %v6027 = vmul.f32 %v5530, 0.2
      %v6028 = vmul.f32 %v5886, 0.2
      %v6029 = vmul.f32 %v5532, 0.2
      %v6030 = vmul.f32 %v5888, 0.2
      %v6031 = vmul.f32 %v5535, 0.2
      %v6032 = vmul.f32 %v5891, 0.2
      %v6033 = vmul.f32 %v5537, 0.2
      %v6034 = vmul.f32 %v5893, 0.2
      %v6035 = vmul.f32 %v5540, 0.2
      %v6036 = vmul.f32 %v5896, 0.2
      %v6037 = vmul.f32 %v5542, 0.2
      %v6038 = vmul.f32 %v5898, 0.2
      %v6039 = vmul.f32 %v5545, 0.2
      %v6040 = vmul.f32 %v5901, 0.2
      %v6041 = vmul.f32 %v5547, 0.2
      %v6042 = vmul.f32 %v5903, 0.2
      %v6043 = vmul.f32 %v5550, 0.2
      %v6044 = vmul.f32 %v5906, 0.2
      %v6045 = vmul.f32 %v5552, 0.2
      %v6046 = vmul.f32 %v5908, 0.2
      %v6047 = vmul.f32 %v5555, 0.2
      %v6048 = vmul.f32 %v5911, 0.2
      %v6049 = vmul.f32 %v5557, 0.2
      %v6050 = vmul.f32 %v5913, 0.2
      %v6051 = vmul.f32 %v5560, 0.2
      %v6052 = vmul.f32 %v5916, 0.2
      %v6053 = vmul.f32 %v5562, 0.2
      %v6054 = vmul.f32 %v5918, 0.2
      %v6055 = vmul.f32 %v5565, 0.2
      %v6056 = vmul.f32 %v5921, 0.2
      %v6057 = vmul.f32 %v5567, 0.2
      %v6058 = vmul.f32 %v5923, 0.2
      %v6059 = vmul.f32 %v5570, 0.2
      %v6060 = vmul.f32 %v5926, 0.2
      %v6061 = vmul.f32 %v5572, 0.2
      %v6062 = vmul.f32 %v5928, 0.2
      %v6063 = vmul.f32 %v5575, 0.2
      %v6064 = vmul.f32 %v5931, 0.2
      %v6065 = vmul.f32 %v5577, 0.2
      %v6066 = vmul.f32 %v5933, 0.2
      %v6067 = vmul.f32 %v5580, 0.2
      %v6068 = vmul.f32 %v5936, 0.2
      %v6069 = vmul.f32 %v5582, 0.2
      %v6070 = vmul.f32 %v5938, 0.2
      %v6071 = vmul.f32 %v5585, 0.2
      %v6072 = vmul.f32 %v5941, 0.2
      %v6073 = vmul.f32 %v5587, 0.2
      %v6074 = vmul.f32 %v5943, 0.2
      %v6075 = vmul.f32 %v5590, 0.2
      %v6076 = vmul.f32 %v5946, 0.2
      %v6077 = vmul.f32 %v5592, 0.2
      %v6078 = vmul.f32 %v5948, 0.2
      %v6079 = vmul.f32 %v5595, 0.2
      %v6080 = vmul.f32 %v5951, 0.2
      %v6081 = vmul.f32 %v5597, 0.2
      %v6082 = vmul.f32 %v5953, 0.2
      %v6083 = vsel %vm5955, %v5520, %v6019
      %v6084 = vsel %vm5956, %v5876, %v6020
      %v6085 = vsel %vm5957, %v5522, %v6021
      %v6086 = vsel %vm5958, %v5878, %v6022
      %v6087 = vsel %vm5959, %v5525, %v6023
      %v6088 = vsel %vm5960, %v5881, %v6024
      %v6089 = vsel %vm5961, %v5527, %v6025
      %v6090 = vsel %vm5962, %v5883, %v6026
      %v6091 = vsel %vm5963, %v5530, %v6027
      %v6092 = vsel %vm5964, %v5886, %v6028
      %v6093 = vsel %vm5965, %v5532, %v6029
      %v6094 = vsel %vm5966, %v5888, %v6030
      %v6095 = vsel %vm5967, %v5535, %v6031
      %v6096 = vsel %vm5968, %v5891, %v6032
      %v6097 = vsel %vm5969, %v5537, %v6033
      %v6098 = vsel %vm5970, %v5893, %v6034
      %v6099 = vsel %vm5971, %v5540, %v6035
      %v6100 = vsel %vm5972, %v5896, %v6036
      %v6101 = vsel %vm5973, %v5542, %v6037
      %v6102 = vsel %vm5974, %v5898, %v6038
      %v6103 = vsel %vm5975, %v5545, %v6039
      %v6104 = vsel %vm5976, %v5901, %v6040
      %v6105 = vsel %vm5977, %v5547, %v6041
      %v6106 = vsel %vm5978, %v5903, %v6042
      %v6107 = vsel %vm5979, %v5550, %v6043
      %v6108 = vsel %vm5980, %v5906, %v6044
      %v6109 = vsel %vm5981, %v5552, %v6045
      %v6110 = vsel %vm5982, %v5908, %v6046
      %v6111 = vsel %vm5983, %v5555, %v6047
      %v6112 = vsel %vm5984, %v5911, %v6048
      %v6113 = vsel %vm5985, %v5557, %v6049
      %v6114 = vsel %vm5986, %v5913, %v6050
      %v6115 = vsel %vm5987, %v5560, %v6051
      %v6116 = vsel %vm5988, %v5916, %v6052
      %v6117 = vsel %vm5989, %v5562, %v6053
      %v6118 = vsel %vm5990, %v5918, %v6054
      %v6119 = vsel %vm5991, %v5565, %v6055
      %v6120 = vsel %vm5992, %v5921, %v6056
      %v6121 = vsel %vm5993, %v5567, %v6057
      %v6122 = vsel %vm5994, %v5923, %v6058
      %v6123 = vsel %vm5995, %v5570, %v6059
      %v6124 = vsel %vm5996, %v5926, %v6060
      %v6125 = vsel %vm5997, %v5572, %v6061
      %v6126 = vsel %vm5998, %v5928, %v6062
      %v6127 = vsel %vm5999, %v5575, %v6063
      %v6128 = vsel %vm6000, %v5931, %v6064
      %v6129 = vsel %vm6001, %v5577, %v6065
      %v6130 = vsel %vm6002, %v5933, %v6066
      %v6131 = vsel %vm6003, %v5580, %v6067
      %v6132 = vsel %vm6004, %v5936, %v6068
      %v6133 = vsel %vm6005, %v5582, %v6069
      %v6134 = vsel %vm6006, %v5938, %v6070
      %v6135 = vsel %vm6007, %v5585, %v6071
      %v6136 = vsel %vm6008, %v5941, %v6072
      %v6137 = vsel %vm6009, %v5587, %v6073
      %v6138 = vsel %vm6010, %v5943, %v6074
      %v6139 = vsel %vm6011, %v5590, %v6075
      %v6140 = vsel %vm6012, %v5946, %v6076
      %v6141 = vsel %vm6013, %v5592, %v6077
      %v6142 = vsel %vm6014, %v5948, %v6078
      %v6143 = vsel %vm6015, %v5595, %v6079
      %v6144 = vsel %vm6016, %v5951, %v6080
      %v6145 = vsel %vm6017, %v5597, %v6081
      %v6146 = vsel %vm6018, %v5953, %v6082
      %v6147 = vpack.c.bf16 %v6085, %v6083
      %v6148 = vpack.c.bf16 %v6086, %v6084
      %v6149 = vpack.c.bf16 %v6089, %v6087
      %v6150 = vpack.c.bf16 %v6090, %v6088
      %v6151 = vpack.c.bf16 %v6093, %v6091
      %v6152 = vpack.c.bf16 %v6094, %v6092
      %v6153 = vpack.c.bf16 %v6097, %v6095
      %v6154 = vpack.c.bf16 %v6098, %v6096
      %v6155 = vpack.c.bf16 %v6101, %v6099
      %v6156 = vpack.c.bf16 %v6102, %v6100
      %v6157 = vpack.c.bf16 %v6105, %v6103
      %v6158 = vpack.c.bf16 %v6106, %v6104
      %v6159 = vpack.c.bf16 %v6109, %v6107
      %v6160 = vpack.c.bf16 %v6110, %v6108
      %v6161 = vpack.c.bf16 %v6113, %v6111
      %v6162 = vpack.c.bf16 %v6114, %v6112
      %v6163 = vpack.c.bf16 %v6117, %v6115
      %v6164 = vpack.c.bf16 %v6118, %v6116
      %v6165 = vpack.c.bf16 %v6121, %v6119
      %v6166 = vpack.c.bf16 %v6122, %v6120
      %v6167 = vpack.c.bf16 %v6125, %v6123
      %v6168 = vpack.c.bf16 %v6126, %v6124
      %v6169 = vpack.c.bf16 %v6129, %v6127
      %v6170 = vpack.c.bf16 %v6130, %v6128
      %v6171 = vpack.c.bf16 %v6133, %v6131
      %v6172 = vpack.c.bf16 %v6134, %v6132
      %v6173 = vpack.c.bf16 %v6137, %v6135
      %v6174 = vpack.c.bf16 %v6138, %v6136
      %v6175 = vpack.c.bf16 %v6141, %v6139
      %v6176 = vpack.c.bf16 %v6142, %v6140
      %v6177 = vpack.c.bf16 %v6145, %v6143
      %v6178 = vpack.c.bf16 %v6146, %v6144
      %v6179 = vld [vmem:[%s5] sm:$0xf]
      %v6180 = vld [vmem:[%s5 + $0x4] sm:$0xf]
      %v6181 = vld [vmem:[%s5 + $0x8] sm:$0xf]
      %v6182 = vld [vmem:[%s5 + $0xc] sm:$0xf]
      %v6183 = vld [vmem:[%s5 + $0x10] sm:$0xf]
      %v6184 = vld [vmem:[%s5 + $0x14] sm:$0xf]
      %v6185 = vld [vmem:[%s5 + $0x18] sm:$0xf]
      %v6186 = vld [vmem:[%s5 + $0x1c] sm:$0xf]
      %v6187 = vld [vmem:[%s5 + $0x20] sm:$0xf]
      %v6188 = vld [vmem:[%s5 + $0x24] sm:$0xf]
      %v6189 = vld [vmem:[%s5 + $0x28] sm:$0xf]
      %v6190 = vld [vmem:[%s5 + $0x2c] sm:$0xf]
      %v6191 = vld [vmem:[%s5 + $0x30] sm:$0xf]
      %v6192 = vld [vmem:[%s5 + $0x34] sm:$0xf]
      %v6193 = vld [vmem:[%s5 + $0x38] sm:$0xf]
      %v6194 = vld [vmem:[%s5 + $0x3c] sm:$0xf]
      %v6195 = vld [vmem:[%s5 + $0x40] sm:$0xf]
      %v6196 = vld [vmem:[%s5 + $0x44] sm:$0xf]
      %v6197 = vld [vmem:[%s5 + $0x48] sm:$0xf]
      %v6198 = vld [vmem:[%s5 + $0x4c] sm:$0xf]
      %v6199 = vld [vmem:[%s5 + $0x50] sm:$0xf]
      %v6200 = vld [vmem:[%s5 + $0x54] sm:$0xf]
      %v6201 = vld [vmem:[%s5 + $0x58] sm:$0xf]
      %v6202 = vld [vmem:[%s5 + $0x5c] sm:$0xf]
      %v6203 = vld [vmem:[%s5 + $0x60] sm:$0xf]
      %v6204 = vld [vmem:[%s5 + $0x64] sm:$0xf]
      %v6205 = vld [vmem:[%s5 + $0x68] sm:$0xf]
      %v6206 = vld [vmem:[%s5 + $0x6c] sm:$0xf]
      %v6207 = vld [vmem:[%s5 + $0x70] sm:$0xf]
      %v6208 = vld [vmem:[%s5 + $0x74] sm:$0xf]
      %v6209 = vld [vmem:[%s5 + $0x78] sm:$0xf]
      %v6210 = vld [vmem:[%s5 + $0x7c] sm:$0xf]
      %v6211 = vld [vmem:[%s6] sm:$0x1]
      %v6213 = vperm.slane %v6211, 0
      %v6247 = vunpack.c.l.b16 %v6179
      %v6248 = vunpack.c.l.b16 %v6180
      %v6249 = vunpack.c.l.b16 %v6181
      %v6250 = vunpack.c.l.b16 %v6182
      %v6251 = vunpack.c.l.b16 %v6183
      %v6252 = vunpack.c.l.b16 %v6184
      %v6253 = vunpack.c.l.b16 %v6185
      %v6254 = vunpack.c.l.b16 %v6186
      %v6255 = vunpack.c.l.b16 %v6187
      %v6256 = vunpack.c.l.b16 %v6188
      %v6257 = vunpack.c.l.b16 %v6189
      %v6258 = vunpack.c.l.b16 %v6190
      %v6259 = vunpack.c.l.b16 %v6191
      %v6260 = vunpack.c.l.b16 %v6192
      %v6261 = vunpack.c.l.b16 %v6193
      %v6262 = vunpack.c.l.b16 %v6194
      %v6263 = vunpack.c.l.b16 %v6195
      %v6264 = vunpack.c.l.b16 %v6196
      %v6265 = vunpack.c.l.b16 %v6197
      %v6266 = vunpack.c.l.b16 %v6198
      %v6267 = vunpack.c.l.b16 %v6199
      %v6268 = vunpack.c.l.b16 %v6200
      %v6269 = vunpack.c.l.b16 %v6201
      %v6270 = vunpack.c.l.b16 %v6202
      %v6271 = vunpack.c.l.b16 %v6203
      %v6272 = vunpack.c.l.b16 %v6204
      %v6273 = vunpack.c.l.b16 %v6205
      %v6274 = vunpack.c.l.b16 %v6206
      %v6275 = vunpack.c.l.b16 %v6207
      %v6276 = vunpack.c.l.b16 %v6208
      %v6277 = vunpack.c.l.b16 %v6209
      %v6278 = vunpack.c.l.b16 %v6210
      %v6279 = vpack.c.b16 %v6248, %v6247
      %v6280 = vpack.c.b16 %v6250, %v6249
      %v6281 = vpack.c.b16 %v6252, %v6251
      %v6282 = vpack.c.b16 %v6254, %v6253
      %v6283 = vpack.c.b16 %v6256, %v6255
      %v6284 = vpack.c.b16 %v6258, %v6257
      %v6285 = vpack.c.b16 %v6260, %v6259
      %v6286 = vpack.c.b16 %v6262, %v6261
      %v6287 = vpack.c.b16 %v6264, %v6263
      %v6288 = vpack.c.b16 %v6266, %v6265
      %v6289 = vpack.c.b16 %v6268, %v6267
      %v6290 = vpack.c.b16 %v6270, %v6269
      %v6291 = vpack.c.b16 %v6272, %v6271
      %v6292 = vpack.c.b16 %v6274, %v6273
      %v6293 = vpack.c.b16 %v6276, %v6275
      %v6294 = vpack.c.b16 %v6278, %v6277
      %6311 = vmatpush.bf16.msra.mxu0 %v6286
      %6312 = vmatpush.bf16.msra.mxu0 %v6285
      %6313 = vmatpush.bf16.msra.mxu0 %v6284
      %6314 = vmatpush.bf16.msra.mxu0 %v6283
      %6315 = vmatpush.bf16.msra.mxu0 %v6282
      %6316 = vmatpush.bf16.msra.mxu0 %v6281
      %6317 = vmatpush.bf16.msra.mxu0 %v6280
      %6318 = vmatpush.bf16.msra.mxu0 %v6279
      %6319 = vmatmul.bf16.gmra.mxu0 %v6147
      %v6320 = vpop.f32.mrf.mxu0
      %v6321 = vadd.f32 %v6213, %v6320
      %v6322 = vpop.f32.mrf.mxu0
      %v6323 = vadd.f32 %v6213, %v6322
      %6324 = vmatmul.bf16.gmra.mxu0 %v6149
      %v6325 = vpop.f32.mrf.mxu0
      %v6326 = vadd.f32 %v6213, %v6325
      %v6327 = vpop.f32.mrf.mxu0
      %v6328 = vadd.f32 %v6213, %v6327
      %6329 = vmatmul.bf16.gmra.mxu0 %v6151
      %v6330 = vpop.f32.mrf.mxu0
      %v6331 = vadd.f32 %v6213, %v6330
      %v6332 = vpop.f32.mrf.mxu0
      %v6333 = vadd.f32 %v6213, %v6332
      %6334 = vmatmul.bf16.gmra.mxu0 %v6153
      %v6335 = vpop.f32.mrf.mxu0
      %v6336 = vadd.f32 %v6213, %v6335
      %v6337 = vpop.f32.mrf.mxu0
      %v6338 = vadd.f32 %v6213, %v6337
      %6339 = vmatmul.bf16.gmra.mxu0 %v6155
      %v6340 = vpop.f32.mrf.mxu0
      %v6341 = vadd.f32 %v6213, %v6340
      %v6342 = vpop.f32.mrf.mxu0
      %v6343 = vadd.f32 %v6213, %v6342
      %6344 = vmatmul.bf16.gmra.mxu0 %v6157
      %v6345 = vpop.f32.mrf.mxu0
      %v6346 = vadd.f32 %v6213, %v6345
      %v6347 = vpop.f32.mrf.mxu0
      %v6348 = vadd.f32 %v6213, %v6347
      %6349 = vmatmul.bf16.gmra.mxu0 %v6159
      %v6350 = vpop.f32.mrf.mxu0
      %v6351 = vadd.f32 %v6213, %v6350
      %v6352 = vpop.f32.mrf.mxu0
      %v6353 = vadd.f32 %v6213, %v6352
      %6354 = vmatmul.bf16.gmra.mxu0 %v6161
      %v6355 = vpop.f32.mrf.mxu0
      %v6356 = vadd.f32 %v6213, %v6355
      %v6357 = vpop.f32.mrf.mxu0
      %v6358 = vadd.f32 %v6213, %v6357
      %6359 = vmatmul.bf16.gmra.mxu0 %v6163
      %v6360 = vpop.f32.mrf.mxu0
      %v6361 = vadd.f32 %v6213, %v6360
      %v6362 = vpop.f32.mrf.mxu0
      %v6363 = vadd.f32 %v6213, %v6362
      %6364 = vmatmul.bf16.gmra.mxu0 %v6165
      %v6365 = vpop.f32.mrf.mxu0
      %v6366 = vadd.f32 %v6213, %v6365
      %v6367 = vpop.f32.mrf.mxu0
      %v6368 = vadd.f32 %v6213, %v6367
      %6369 = vmatmul.bf16.gmra.mxu0 %v6167
      %v6370 = vpop.f32.mrf.mxu0
      %v6371 = vadd.f32 %v6213, %v6370
      %v6372 = vpop.f32.mrf.mxu0
      %v6373 = vadd.f32 %v6213, %v6372
      %6374 = vmatmul.bf16.gmra.mxu0 %v6169
      %v6375 = vpop.f32.mrf.mxu0
      %v6376 = vadd.f32 %v6213, %v6375
      %v6377 = vpop.f32.mrf.mxu0
      %v6378 = vadd.f32 %v6213, %v6377
      %6379 = vmatmul.bf16.gmra.mxu0 %v6171
      %v6380 = vpop.f32.mrf.mxu0
      %v6381 = vadd.f32 %v6213, %v6380
      %v6382 = vpop.f32.mrf.mxu0
      %v6383 = vadd.f32 %v6213, %v6382
      %6384 = vmatmul.bf16.gmra.mxu0 %v6173
      %v6385 = vpop.f32.mrf.mxu0
      %v6386 = vadd.f32 %v6213, %v6385
      %v6387 = vpop.f32.mrf.mxu0
      %v6388 = vadd.f32 %v6213, %v6387
      %6389 = vmatmul.bf16.gmra.mxu0 %v6175
      %v6390 = vpop.f32.mrf.mxu0
      %v6391 = vadd.f32 %v6213, %v6390
      %v6392 = vpop.f32.mrf.mxu0
      %v6393 = vadd.f32 %v6213, %v6392
      %6394 = vmatmul.bf16.gmra.mxu0 %v6177
      %v6395 = vpop.f32.mrf.mxu0
      %v6396 = vadd.f32 %v6213, %v6395
      %v6397 = vpop.f32.mrf.mxu0
      %v6398 = vadd.f32 %v6213, %v6397
      %6399 = vdwg.mxu0
      %6400 = vmatpush.bf16.msra.mxu0 %v6294
      %6401 = vmatpush.bf16.msra.mxu0 %v6293
      %6402 = vmatpush.bf16.msra.mxu0 %v6292
      %6403 = vmatpush.bf16.msra.mxu0 %v6291
      %6404 = vmatpush.bf16.msra.mxu0 %v6290
      %6405 = vmatpush.bf16.msra.mxu0 %v6289
      %6406 = vmatpush.bf16.msra.mxu0 %v6288
      %6407 = vmatpush.bf16.msra.mxu0 %v6287
      %6408 = vmatmul.bf16.gmra.mxu0 %v6148
      %v6409 = vpop.f32.mrf.mxu0
      %v6410 = vadd.f32 %v6321, %v6409
      %v6411 = vpop.f32.mrf.mxu0
      %v6412 = vadd.f32 %v6323, %v6411
      %6413 = vmatmul.bf16.gmra.mxu0 %v6150
      %v6414 = vpop.f32.mrf.mxu0
      %v6415 = vadd.f32 %v6326, %v6414
      %v6416 = vpop.f32.mrf.mxu0
      %v6417 = vadd.f32 %v6328, %v6416
      %6418 = vmatmul.bf16.gmra.mxu0 %v6152
      %v6419 = vpop.f32.mrf.mxu0
      %v6420 = vadd.f32 %v6331, %v6419
      %v6421 = vpop.f32.mrf.mxu0
      %v6422 = vadd.f32 %v6333, %v6421
      %6423 = vmatmul.bf16.gmra.mxu0 %v6154
      %v6424 = vpop.f32.mrf.mxu0
      %v6425 = vadd.f32 %v6336, %v6424
      %v6426 = vpop.f32.mrf.mxu0
      %v6427 = vadd.f32 %v6338, %v6426
      %6428 = vmatmul.bf16.gmra.mxu0 %v6156
      %v6429 = vpop.f32.mrf.mxu0
      %v6430 = vadd.f32 %v6341, %v6429
      %v6431 = vpop.f32.mrf.mxu0
      %v6432 = vadd.f32 %v6343, %v6431
      %6433 = vmatmul.bf16.gmra.mxu0 %v6158
      %v6434 = vpop.f32.mrf.mxu0
      %v6435 = vadd.f32 %v6346, %v6434
      %v6436 = vpop.f32.mrf.mxu0
      %v6437 = vadd.f32 %v6348, %v6436
      %6438 = vmatmul.bf16.gmra.mxu0 %v6160
      %v6439 = vpop.f32.mrf.mxu0
      %v6440 = vadd.f32 %v6351, %v6439
      %v6441 = vpop.f32.mrf.mxu0
      %v6442 = vadd.f32 %v6353, %v6441
      %6443 = vmatmul.bf16.gmra.mxu0 %v6162
      %v6444 = vpop.f32.mrf.mxu0
      %v6445 = vadd.f32 %v6356, %v6444
      %v6446 = vpop.f32.mrf.mxu0
      %v6447 = vadd.f32 %v6358, %v6446
      %6448 = vmatmul.bf16.gmra.mxu0 %v6164
      %v6449 = vpop.f32.mrf.mxu0
      %v6450 = vadd.f32 %v6361, %v6449
      %v6451 = vpop.f32.mrf.mxu0
      %v6452 = vadd.f32 %v6363, %v6451
      %6453 = vmatmul.bf16.gmra.mxu0 %v6166
      %v6454 = vpop.f32.mrf.mxu0
      %v6455 = vadd.f32 %v6366, %v6454
      %v6456 = vpop.f32.mrf.mxu0
      %v6457 = vadd.f32 %v6368, %v6456
      %6458 = vmatmul.bf16.gmra.mxu0 %v6168
      %v6459 = vpop.f32.mrf.mxu0
      %v6460 = vadd.f32 %v6371, %v6459
      %v6461 = vpop.f32.mrf.mxu0
      %v6462 = vadd.f32 %v6373, %v6461
      %6463 = vmatmul.bf16.gmra.mxu0 %v6170
      %v6464 = vpop.f32.mrf.mxu0
      %v6465 = vadd.f32 %v6376, %v6464
      %v6466 = vpop.f32.mrf.mxu0
      %v6467 = vadd.f32 %v6378, %v6466
      %6468 = vmatmul.bf16.gmra.mxu0 %v6172
      %v6469 = vpop.f32.mrf.mxu0
      %v6470 = vadd.f32 %v6381, %v6469
      %v6471 = vpop.f32.mrf.mxu0
      %v6472 = vadd.f32 %v6383, %v6471
      %6473 = vmatmul.bf16.gmra.mxu0 %v6174
      %v6474 = vpop.f32.mrf.mxu0
      %v6475 = vadd.f32 %v6386, %v6474
      %v6476 = vpop.f32.mrf.mxu0
      %v6477 = vadd.f32 %v6388, %v6476
      %6478 = vmatmul.bf16.gmra.mxu0 %v6176
      %v6479 = vpop.f32.mrf.mxu0
      %v6480 = vadd.f32 %v6391, %v6479
      %v6481 = vpop.f32.mrf.mxu0
      %v6482 = vadd.f32 %v6393, %v6481
      %6483 = vmatmul.bf16.gmra.mxu0 %v6178
      %v6484 = vpop.f32.mrf.mxu0
      %v6485 = vadd.f32 %v6396, %v6484
      %v6486 = vpop.f32.mrf.mxu0
      %v6487 = vadd.f32 %v6398, %v6486
      %6488 = vdwg.mxu0
      %vm6489 = vcmp.gt.f32.partialorder %v6410, 0.0
      %vm6490 = vcmp.gt.f32.partialorder %v6412, 0.0
      %vm6491 = vcmp.gt.f32.partialorder %v6415, 0.0
      %vm6492 = vcmp.gt.f32.partialorder %v6417, 0.0
      %vm6493 = vcmp.gt.f32.partialorder %v6420, 0.0
      %vm6494 = vcmp.gt.f32.partialorder %v6422, 0.0
      %vm6495 = vcmp.gt.f32.partialorder %v6425, 0.0
      %vm6496 = vcmp.gt.f32.partialorder %v6427, 0.0
      %vm6497 = vcmp.gt.f32.partialorder %v6430, 0.0
      %vm6498 = vcmp.gt.f32.partialorder %v6432, 0.0
      %vm6499 = vcmp.gt.f32.partialorder %v6435, 0.0
      %vm6500 = vcmp.gt.f32.partialorder %v6437, 0.0
      %vm6501 = vcmp.gt.f32.partialorder %v6440, 0.0
      %vm6502 = vcmp.gt.f32.partialorder %v6442, 0.0
      %vm6503 = vcmp.gt.f32.partialorder %v6445, 0.0
      %vm6504 = vcmp.gt.f32.partialorder %v6447, 0.0
      %vm6505 = vcmp.gt.f32.partialorder %v6450, 0.0
      %vm6506 = vcmp.gt.f32.partialorder %v6452, 0.0
      %vm6507 = vcmp.gt.f32.partialorder %v6455, 0.0
      %vm6508 = vcmp.gt.f32.partialorder %v6457, 0.0
      %vm6509 = vcmp.gt.f32.partialorder %v6460, 0.0
      %vm6510 = vcmp.gt.f32.partialorder %v6462, 0.0
      %vm6511 = vcmp.gt.f32.partialorder %v6465, 0.0
      %vm6512 = vcmp.gt.f32.partialorder %v6467, 0.0
      %vm6513 = vcmp.gt.f32.partialorder %v6470, 0.0
      %vm6514 = vcmp.gt.f32.partialorder %v6472, 0.0
      %vm6515 = vcmp.gt.f32.partialorder %v6475, 0.0
      %vm6516 = vcmp.gt.f32.partialorder %v6477, 0.0
      %vm6517 = vcmp.gt.f32.partialorder %v6480, 0.0
      %vm6518 = vcmp.gt.f32.partialorder %v6482, 0.0
      %vm6519 = vcmp.gt.f32.partialorder %v6485, 0.0
      %vm6520 = vcmp.gt.f32.partialorder %v6487, 0.0
      %v6521 = vmul.f32 %v6410, 0.2
      %v6522 = vmul.f32 %v6412, 0.2
      %v6523 = vmul.f32 %v6415, 0.2
      %v6524 = vmul.f32 %v6417, 0.2
      %v6525 = vmul.f32 %v6420, 0.2
      %v6526 = vmul.f32 %v6422, 0.2
      %v6527 = vmul.f32 %v6425, 0.2
      %v6528 = vmul.f32 %v6427, 0.2
      %v6529 = vmul.f32 %v6430, 0.2
      %v6530 = vmul.f32 %v6432, 0.2
      %v6531 = vmul.f32 %v6435, 0.2
      %v6532 = vmul.f32 %v6437, 0.2
      %v6533 = vmul.f32 %v6440, 0.2
      %v6534 = vmul.f32 %v6442, 0.2
      %v6535 = vmul.f32 %v6445, 0.2
      %v6536 = vmul.f32 %v6447, 0.2
      %v6537 = vmul.f32 %v6450, 0.2
      %v6538 = vmul.f32 %v6452, 0.2
      %v6539 = vmul.f32 %v6455, 0.2
      %v6540 = vmul.f32 %v6457, 0.2
      %v6541 = vmul.f32 %v6460, 0.2
      %v6542 = vmul.f32 %v6462, 0.2
      %v6543 = vmul.f32 %v6465, 0.2
      %v6544 = vmul.f32 %v6467, 0.2
      %v6545 = vmul.f32 %v6470, 0.2
      %v6546 = vmul.f32 %v6472, 0.2
      %v6547 = vmul.f32 %v6475, 0.2
      %v6548 = vmul.f32 %v6477, 0.2
      %v6549 = vmul.f32 %v6480, 0.2
      %v6550 = vmul.f32 %v6482, 0.2
      %v6551 = vmul.f32 %v6485, 0.2
      %v6552 = vmul.f32 %v6487, 0.2
      %v6553 = vsel %vm6489, %v6410, %v6521
      %v6554 = vsel %vm6490, %v6412, %v6522
      %v6555 = vsel %vm6491, %v6415, %v6523
      %v6556 = vsel %vm6492, %v6417, %v6524
      %v6557 = vsel %vm6493, %v6420, %v6525
      %v6558 = vsel %vm6494, %v6422, %v6526
      %v6559 = vsel %vm6495, %v6425, %v6527
      %v6560 = vsel %vm6496, %v6427, %v6528
      %v6561 = vsel %vm6497, %v6430, %v6529
      %v6562 = vsel %vm6498, %v6432, %v6530
      %v6563 = vsel %vm6499, %v6435, %v6531
      %v6564 = vsel %vm6500, %v6437, %v6532
      %v6565 = vsel %vm6501, %v6440, %v6533
      %v6566 = vsel %vm6502, %v6442, %v6534
      %v6567 = vsel %vm6503, %v6445, %v6535
      %v6568 = vsel %vm6504, %v6447, %v6536
      %v6569 = vsel %vm6505, %v6450, %v6537
      %v6570 = vsel %vm6506, %v6452, %v6538
      %v6571 = vsel %vm6507, %v6455, %v6539
      %v6572 = vsel %vm6508, %v6457, %v6540
      %v6573 = vsel %vm6509, %v6460, %v6541
      %v6574 = vsel %vm6510, %v6462, %v6542
      %v6575 = vsel %vm6511, %v6465, %v6543
      %v6576 = vsel %vm6512, %v6467, %v6544
      %v6577 = vsel %vm6513, %v6470, %v6545
      %v6578 = vsel %vm6514, %v6472, %v6546
      %v6579 = vsel %vm6515, %v6475, %v6547
      %v6580 = vsel %vm6516, %v6477, %v6548
      %v6581 = vsel %vm6517, %v6480, %v6549
      %v6582 = vsel %vm6518, %v6482, %v6550
      %v6583 = vsel %vm6519, %v6485, %v6551
      %v6584 = vsel %vm6520, %v6487, %v6552
      %v6585 = vld [vmem:[%s7] sm:$0x1]
      %v6586 = vunpack.c.l.bf16 %v6585
      %v6587 = vperm.slane %v6586, 0
      %v6588 = vmul.f32 %v6553, %v6587
      %v6589 = vmul.f32 %v6554, %v6587
      %v6590 = vmul.f32 %v6555, %v6587
      %v6591 = vmul.f32 %v6556, %v6587
      %v6592 = vmul.f32 %v6557, %v6587
      %v6593 = vmul.f32 %v6558, %v6587
      %v6594 = vmul.f32 %v6559, %v6587
      %v6595 = vmul.f32 %v6560, %v6587
      %v6596 = vmul.f32 %v6561, %v6587
      %v6597 = vmul.f32 %v6562, %v6587
      %v6598 = vmul.f32 %v6563, %v6587
      %v6599 = vmul.f32 %v6564, %v6587
      %v6600 = vmul.f32 %v6565, %v6587
      %v6601 = vmul.f32 %v6566, %v6587
      %v6602 = vmul.f32 %v6567, %v6587
      %v6603 = vmul.f32 %v6568, %v6587
      %v6604 = vmul.f32 %v6569, %v6587
      %v6605 = vmul.f32 %v6570, %v6587
      %v6606 = vmul.f32 %v6571, %v6587
      %v6607 = vmul.f32 %v6572, %v6587
      %v6608 = vmul.f32 %v6573, %v6587
      %v6609 = vmul.f32 %v6574, %v6587
      %v6610 = vmul.f32 %v6575, %v6587
      %v6611 = vmul.f32 %v6576, %v6587
      %v6612 = vmul.f32 %v6577, %v6587
      %v6613 = vmul.f32 %v6578, %v6587
      %v6614 = vmul.f32 %v6579, %v6587
      %v6615 = vmul.f32 %v6580, %v6587
      %v6616 = vmul.f32 %v6581, %v6587
      %v6617 = vmul.f32 %v6582, %v6587
      %v6618 = vmul.f32 %v6583, %v6587
      %v6619 = vmul.f32 %v6584, %v6587
      %6620 = vadd.xlane.f32.xlu0 %v6588
      %v6621 = vpop.xlane.xlu0 %6620
      %6622 = vadd.xlane.f32.xlu0 %v6589
      %v6623 = vpop.xlane.xlu0 %6622
      %6624 = vadd.xlane.f32.xlu0 %v6590
      %v6625 = vpop.xlane.xlu0 %6624
      %6626 = vadd.xlane.f32.xlu0 %v6591
      %v6627 = vpop.xlane.xlu0 %6626
      %6628 = vadd.xlane.f32.xlu0 %v6592
      %v6629 = vpop.xlane.xlu0 %6628
      %6630 = vadd.xlane.f32.xlu0 %v6593
      %v6631 = vpop.xlane.xlu0 %6630
      %6632 = vadd.xlane.f32.xlu0 %v6594
      %v6633 = vpop.xlane.xlu0 %6632
      %6634 = vadd.xlane.f32.xlu0 %v6595
      %v6635 = vpop.xlane.xlu0 %6634
      %6636 = vadd.xlane.f32.xlu0 %v6596
      %v6637 = vpop.xlane.xlu0 %6636
      %6638 = vadd.xlane.f32.xlu0 %v6597
      %v6639 = vpop.xlane.xlu0 %6638
      %6640 = vadd.xlane.f32.xlu0 %v6598
      %v6641 = vpop.xlane.xlu0 %6640
      %6642 = vadd.xlane.f32.xlu0 %v6599
      %v6643 = vpop.xlane.xlu0 %6642
      %6644 = vadd.xlane.f32.xlu0 %v6600
      %v6645 = vpop.xlane.xlu0 %6644
      %6646 = vadd.xlane.f32.xlu0 %v6601
      %v6647 = vpop.xlane.xlu0 %6646
      %6648 = vadd.xlane.f32.xlu0 %v6602
      %v6649 = vpop.xlane.xlu0 %6648
      %6650 = vadd.xlane.f32.xlu0 %v6603
      %v6651 = vpop.xlane.xlu0 %6650
      %6652 = vadd.xlane.f32.xlu0 %v6604
      %v6653 = vpop.xlane.xlu0 %6652
      %6654 = vadd.xlane.f32.xlu0 %v6605
      %v6655 = vpop.xlane.xlu0 %6654
      %6656 = vadd.xlane.f32.xlu0 %v6606
      %v6657 = vpop.xlane.xlu0 %6656
      %6658 = vadd.xlane.f32.xlu0 %v6607
      %v6659 = vpop.xlane.xlu0 %6658
      %6660 = vadd.xlane.f32.xlu0 %v6608
      %v6661 = vpop.xlane.xlu0 %6660
      %6662 = vadd.xlane.f32.xlu0 %v6609
      %v6663 = vpop.xlane.xlu0 %6662
      %6664 = vadd.xlane.f32.xlu0 %v6610
      %v6665 = vpop.xlane.xlu0 %6664
      %6666 = vadd.xlane.f32.xlu0 %v6611
      %v6667 = vpop.xlane.xlu0 %6666
      %6668 = vadd.xlane.f32.xlu0 %v6612
      %v6669 = vpop.xlane.xlu0 %6668
      %6670 = vadd.xlane.f32.xlu0 %v6613
      %v6671 = vpop.xlane.xlu0 %6670
      %6672 = vadd.xlane.f32.xlu0 %v6614
      %v6673 = vpop.xlane.xlu0 %6672
      %6674 = vadd.xlane.f32.xlu0 %v6615
      %v6675 = vpop.xlane.xlu0 %6674
      %6676 = vadd.xlane.f32.xlu0 %v6616
      %v6677 = vpop.xlane.xlu0 %6676
      %6678 = vadd.xlane.f32.xlu0 %v6617
      %v6679 = vpop.xlane.xlu0 %6678
      %6680 = vadd.xlane.f32.xlu0 %v6618
      %v6681 = vpop.xlane.xlu0 %6680
      %6682 = vadd.xlane.f32.xlu0 %v6619
      %v6683 = vpop.xlane.xlu0 %6682
      %v6684 = vld [vmem:[#allocation2] sm:$0x1]
      %v6686 = vperm.slane %v6684, 0
      %v6688 = vadd.f32 %v6621, %v6686
      %v6689 = vadd.f32 %v6623, %v6686
      %v6690 = vadd.f32 %v6625, %v6686
      %v6691 = vadd.f32 %v6627, %v6686
      %v6692 = vadd.f32 %v6629, %v6686
      %v6693 = vadd.f32 %v6631, %v6686
      %v6694 = vadd.f32 %v6633, %v6686
      %v6695 = vadd.f32 %v6635, %v6686
      %v6696 = vadd.f32 %v6637, %v6686
      %v6697 = vadd.f32 %v6639, %v6686
      %v6698 = vadd.f32 %v6641, %v6686
      %v6699 = vadd.f32 %v6643, %v6686
      %v6700 = vadd.f32 %v6645, %v6686
      %v6701 = vadd.f32 %v6647, %v6686
      %v6702 = vadd.f32 %v6649, %v6686
      %v6703 = vadd.f32 %v6651, %v6686
      %v6704 = vadd.f32 %v6653, %v6686
      %v6705 = vadd.f32 %v6655, %v6686
      %v6706 = vadd.f32 %v6657, %v6686
      %v6707 = vadd.f32 %v6659, %v6686
      %v6708 = vadd.f32 %v6661, %v6686
      %v6709 = vadd.f32 %v6663, %v6686
      %v6710 = vadd.f32 %v6665, %v6686
      %v6711 = vadd.f32 %v6667, %v6686
      %v6712 = vadd.f32 %v6669, %v6686
      %v6713 = vadd.f32 %v6671, %v6686
      %v6714 = vadd.f32 %v6673, %v6686
      %v6715 = vadd.f32 %v6675, %v6686
      %v6716 = vadd.f32 %v6677, %v6686
      %v6717 = vadd.f32 %v6679, %v6686
      %v6718 = vadd.f32 %v6681, %v6686
      %v6719 = vadd.f32 %v6683, %v6686
      %vm6720 = vcmask 7168
      %6721 = vst.msk [vmem:[%s339] sm:$0xff] %vm6720, %v6688
      %6722 = vst.msk [vmem:[%s339 + $0x8] sm:$0xff] %vm6720, %v6689
      %6723 = vst.msk [vmem:[%s339 + $0x10] sm:$0xff] %vm6720, %v6690
      %6724 = vst.msk [vmem:[%s339 + $0x18] sm:$0xff] %vm6720, %v6691
      %6725 = vst.msk [vmem:[%s339 + $0x20] sm:$0xff] %vm6720, %v6692
      %6726 = vst.msk [vmem:[%s339 + $0x28] sm:$0xff] %vm6720, %v6693
      %6727 = vst.msk [vmem:[%s339 + $0x30] sm:$0xff] %vm6720, %v6694
      %6728 = vst.msk [vmem:[%s339 + $0x38] sm:$0xff] %vm6720, %v6695
      %6729 = vst.msk [vmem:[%s339 + $0x40] sm:$0xff] %vm6720, %v6696
      %6730 = vst.msk [vmem:[%s339 + $0x48] sm:$0xff] %vm6720, %v6697
      %6731 = vst.msk [vmem:[%s339 + $0x50] sm:$0xff] %vm6720, %v6698
      %6732 = vst.msk [vmem:[%s339 + $0x58] sm:$0xff] %vm6720, %v6699
      %6733 = vst.msk [vmem:[%s339 + $0x60] sm:$0xff] %vm6720, %v6700
      %6734 = vst.msk [vmem:[%s339 + $0x68] sm:$0xff] %vm6720, %v6701
      %6735 = vst.msk [vmem:[%s339 + $0x70] sm:$0xff] %vm6720, %v6702
      %6736 = vst.msk [vmem:[%s339 + $0x78] sm:$0xff] %vm6720, %v6703
      %6737 = vst.msk [vmem:[%s339 + $0x80] sm:$0xff] %vm6720, %v6704
      %6738 = vst.msk [vmem:[%s339 + $0x88] sm:$0xff] %vm6720, %v6705
      %6739 = vst.msk [vmem:[%s339 + $0x90] sm:$0xff] %vm6720, %v6706
      %6740 = vst.msk [vmem:[%s339 + $0x98] sm:$0xff] %vm6720, %v6707
      %6741 = vst.msk [vmem:[%s339 + $0xa0] sm:$0xff] %vm6720, %v6708
      %6742 = vst.msk [vmem:[%s339 + $0xa8] sm:$0xff] %vm6720, %v6709
      %6743 = vst.msk [vmem:[%s339 + $0xb0] sm:$0xff] %vm6720, %v6710
      %6744 = vst.msk [vmem:[%s339 + $0xb8] sm:$0xff] %vm6720, %v6711
      %6745 = vst.msk [vmem:[%s339 + $0xc0] sm:$0xff] %vm6720, %v6712
      %6746 = vst.msk [vmem:[%s339 + $0xc8] sm:$0xff] %vm6720, %v6713
      %6747 = vst.msk [vmem:[%s339 + $0xd0] sm:$0xff] %vm6720, %v6714
      %6748 = vst.msk [vmem:[%s339 + $0xd8] sm:$0xff] %vm6720, %v6715
      %6749 = vst.msk [vmem:[%s339 + $0xe0] sm:$0xff] %vm6720, %v6716
      %6750 = vst.msk [vmem:[%s339 + $0xe8] sm:$0xff] %vm6720, %v6717
      %6751 = vst.msk [vmem:[%s339 + $0xf0] sm:$0xff] %vm6720, %v6718
      %6752 = vst.msk [vmem:[%s339 + $0xf8] sm:$0xff] %vm6720, %v6719
      %s6753 = smul.u32 32, %s22
      %p6754 = scmp.lt.s32.totalorder %s6753, 63
      %s6755 = scalar_select %p6754, %s6753, 63
      %s6756 = smul.addr %s6755, 8
      %s6757 = scalar_lea.vmem %s9, %s6756
      // Predicated region
      $region57: #{_forward.1} parent=55 // pred_check
        %p6758 = pneg %p234
      $region58: #{_forward.1} parent=55 // pred_check_branch
        %6760 = sbr.rel (%p6758) target = $region60
      $region59: #{_forward.1} parent=55 // pred_region
        %s6761 = smul.u32 32, %s22
      $region60: #{_forward.1} parent=55 // pred_fallthru
        _
    $region56: #{_forward.1} parent=5 // pred_fallthru
      _
    %p6762 = scmp.le.s32.totalorder 2, %s17
    // Predicated region
    $region61: #{_forward.1} parent=5 // pred_check
      %p6763 = pneg %p6762
    $region62: #{_forward.1} parent=5 // pred_check_branch
      %6765 = sbr.rel (%p6763) target = $region64
    $region63: #{_forward.1} parent=5 // pred_region
      %s6766 = ssub.s32 %s17, 2
      // Predicated region
      $region65: #{_forward.1} parent=63 // pred_check
        %p6767 = pneg %p240
      $region66: #{_forward.1} parent=63 // pred_check_branch
        %6769 = sbr.rel (%p6767) target = $region68
      $region67: #{_forward.1} parent=63 // pred_region
        %s6770 = smul.u32 32, %s23
        %p6771 = scmp.lt.s32.totalorder %s6770, 63
        %s6772 = scalar_select %p6771, %s6770, 63
        %s6773 = smul.addr %s6772, 8
        %s6774 = scalar_lea.vmem %s9, %s6773
      $region68: #{_forward.1} parent=63 // pred_fallthru
        _
    $region64: #{_forward.1} parent=5 // pred_fallthru
      _
  $region6: #{_forward.1} parent=0 // loop_footer
    %s21 = sadd.s32 1, %s17
  $region7: #{_forward.1} parent=0 // loop_footer_branch
    %16 = sbr.rel target = $region3
  $region8: #{_forward.1} parent=0 // loop_exit
    _

</llo_original>
